<compile_context>
chip_gen: v6e
topology: v6e:2x2x1
jax: 0.10.0
libtpu: 0.0.40
codegen_flags: <defaults>
</compile_context>

<pallas_src>
import numpy as np
import jax
import jax.numpy as jnp
from jax.experimental import pallas as pl
from jax.experimental.pallas import tpu as pltpu

COMPUTE_DTYPE = jnp.bfloat16  # MXU-native operand dtype (f32 accumulation).


# ----------------------------------------------------------------------------
# Fused forward kernel (one image per grid step; everything stays in vregs)
# ----------------------------------------------------------------------------
def _fused_forward_kernel(x_ref, wk1_ref, b1_ref, wk2_ref, b2_ref,
                          pe1_ref, po1_ref, se1_ref, so1_ref,
                          pe2_ref, po2_ref, se2_ref, so2_ref,
                          wf1_ref, bf1_ref, wf2_ref, bf2_ref, wf3_ref, bf3_ref,
                          o_ref):
    f32 = jnp.float32

    def banded_conv(src_rows, wk_ref, b_ref, n_rows_out, kh=5):
        # src_rows(ki) -> (rows, W_in*C) bf16 slab; wk_ref[ki] is the banded
        # (W_in*C, W_out*Cout) weight.  5 accumulating GEMMs, then bias+ReLU.
        acc = jnp.dot(src_rows(0), wk_ref[0], preferred_element_type=f32)
        for ki in range(1, kh):
            acc = acc + jnp.dot(src_rows(ki), wk_ref[ki],
                                preferred_element_type=f32)
        del n_rows_out
        return jnp.maximum(acc + b_ref[...], 0.0)

    def pool2x2(a, pe_ref, po_ref, se_ref, so_ref):
        # Row pool (left 0/1 selection matmuls) then lane pool (right 0/1
        # selection matmuls).  Exact in f32.
        hp = jnp.maximum(jnp.dot(pe_ref[...], a, preferred_element_type=f32),
                         jnp.dot(po_ref[...], a, preferred_element_type=f32))
        return jnp.maximum(jnp.dot(hp, se_ref[...], preferred_element_type=f32),
                           jnp.dot(hp, so_ref[...], preferred_element_type=f32))

    cd = wk1_ref.dtype

    # ---- stage 1: conv1 (5x5, 3->6) + ReLU + 2x2 max pool -------------------
    # Input layout: (32, 96) = (H, W*3).  Output a1: (28, 168) = (H, W*6).
    a1 = banded_conv(lambda ki: x_ref[0, ki:ki + 28, :].astype(cd),
                     wk1_ref, b1_ref, 28)
    p1 = pool2x2(a1, pe1_ref, po1_ref, se1_ref, so1_ref)      # (14, 84)=(H,W*6)

    # ---- stage 2: conv2 (5x5, 6->16) + ReLU + 2x2 max pool ------------------
    p1c = p1.astype(cd)
    a2 = banded_conv(lambda ki: p1c[ki:ki + 10, :],
                     wk2_ref, b2_ref, 10)                      # (10,160)=(H,W*16)
    p2 = pool2x2(a2, pe2_ref, po2_ref, se2_ref, so2_ref)       # (5, 80)=(H,W*16)

    # ---- FC head (flatten order (h, w, c) folded into fc1's rows) -----------
    fc_in = jnp.concatenate([p2[h:h + 1, :] for h in range(5)], axis=-1)  # (1,400)

    def dense(v, w_ref, b_ref, relu):
        y = jnp.dot(v.astype(w_ref.dtype), w_ref[...],
                    preferred_element_type=f32) + b_ref[...]
        return jnp.maximum(y, 0.0) if relu else y

    h1 = dense(fc_in, wf1_ref, bf1_ref, True)                  # (1, 128)
    h2 = dense(h1, wf2_ref, bf2_ref, True)                     # (1, 128)
    o_ref[0] = dense(h2, wf3_ref, bf3_ref, False)              # (1, 128)


# ----------------------------------------------------------------------------
# Parameter prep (one-time, numpy): banded conv weights, selection matrices,
# transposed / permuted / lane-padded FC weights, tiled biases.
# ----------------------------------------------------------------------------
def prepare_params(params, compute_dtype=COMPUTE_DTYPE):
    def banded_conv_w(w_oihw, w_in):
        # (O, C, KH, KW) -> (KH, w_in*C, w_out*O) with
        #   out[ki, (w+kj)*C + c, w*O + o] = W[o, c, ki, kj]   (valid conv).
        w = np.asarray(w_oihw, np.float32)
        O, C, KH, KW = w.shape
        w = np.transpose(w, (2, 3, 1, 0))                      # (KH, KW, C, O)
        w_out = w_in - KW + 1
        out = np.zeros((KH, w_in * C, w_out * O), np.float32)
        for ki in range(KH):
            for kj in range(KW):
                for wo in range(w_out):
                    out[ki, (wo + kj) * C:(wo + kj + 1) * C,
                        wo * O:(wo + 1) * O] = w[ki, kj]
        return jnp.asarray(out, compute_dtype)

    def row_sel(n_out, n_in):
        r = np.arange(n_out)[:, None]
        c = np.arange(n_in)[None, :]
        return (jnp.asarray(c == 2 * r, jnp.float32),
                jnp.asarray(c == 2 * r + 1, jnp.float32))

    def lane_sel(n_pairs_out, C):
        # Lane layout is n = w*C + c.  Output lane n pulls from input lanes
        # (2w)*C + c (even) and (2w+1)*C + c (odd).
        n_out = n_pairs_out * C
        m = np.arange(2 * n_out)[:, None]
        n = np.arange(n_out)[None, :]
        src = n + C * (n // C)
        return (jnp.asarray(m == src, jnp.float32),
                jnp.asarray(m == src + C, jnp.float32))

    # Conv stages (banded weights + lane-tiled biases).
    wk1 = banded_conv_w(params["conv1_w"], 32)                 # (5,  96, 168)
    wk2 = banded_conv_w(params["conv2_w"], 14)                 # (5,  84, 160)
    b1t = jnp.asarray(np.tile(np.asarray(params["conv1_b"], np.float32), 28)
                      ).reshape(1, 168)
    b2t = jnp.asarray(np.tile(np.asarray(params["conv2_b"], np.float32), 10)
                      ).reshape(1, 160)

    # Pooling selection matrices (exact 0/1 in f32).
    pe1, po1 = row_sel(14, 28)
    se1, so1 = lane_sel(14, 6)                                 # (168, 84)
    pe2, po2 = row_sel(5, 10)
    se2, so2 = lane_sel(5, 16)                                 # (160, 80)

    # fc1: fold PyTorch's (C=16, H=5, W=5) flatten order into a row permutation
    # so the kernel can flatten in (h, w, c) order without a transpose.
    h = np.arange(5).reshape(5, 1, 1)
    w = np.arange(5).reshape(1, 5, 1)
    c = np.arange(16).reshape(1, 1, 16)
    perm = (c * 25 + h * 5 + w).reshape(-1)                    # (h,w,c) -> torch col
    wf1 = np.asarray(params["fc1_w"], np.float32).T[perm]      # (400, 120)
    wf1 = jnp.asarray(np.pad(wf1, ((0, 0), (0, 8))), compute_dtype)          # (400,128)
    wf2 = jnp.asarray(np.pad(np.asarray(params["fc2_w"], np.float32).T,
                             ((0, 8), (0, 44))), compute_dtype)              # (128,128)
    wf3 = jnp.asarray(np.pad(np.asarray(params["fc3_w"], np.float32).T,
                             ((0, 44), (0, 118))), compute_dtype)            # (128,128)

    def fc_bias(b):
        b = np.asarray(b, np.float32)
        return jnp.asarray(np.pad(b, (0, 128 - b.shape[0])).reshape(1, 128))

    return (wk1, b1t, wk2, b2t,
            pe1, po1, se1, so1, pe2, po2, se2, so2,
            wf1, fc_bias(params["fc1_b"]),
            wf2, fc_bias(params["fc2_b"]),
            wf3, fc_bias(params["fc3_b"]))


# ----------------------------------------------------------------------------
# Forward wrapper
# ----------------------------------------------------------------------------
def cifar10_forward(x_nchw, prepped):
    """x_nchw: (B, 3, 32, 32) float32 -> logits (B, 10)."""
    B = x_nchw.shape[0]
    # NCHW -> (B, H, W*C) lane layout expected by the banded conv weights.
    x_hwc = jnp.transpose(x_nchw, (0, 2, 3, 1)).reshape(B, 32, 96)
    weight_args = list(prepped)

    def const_spec(a):
        nd = a.ndim
        return pl.BlockSpec(a.shape, lambda b, _nd=nd: (0,) * _nd)

    out = pl.pallas_call(
        _fused_forward_kernel,
        out_shape=jax.ShapeDtypeStruct((B, 1, 128), jnp.float32),
        grid=(B,),
        in_specs=[pl.BlockSpec((1, 32, 96), lambda b: (b, 0, 0))]
                 + [const_spec(a) for a in weight_args],
        out_specs=pl.BlockSpec((1, 1, 128), lambda b: (b, 0, 0)),
        compiler_params=pltpu.CompilerParams(
            dimension_semantics=("parallel",),
            vmem_limit_bytes=32 * 1024 * 1024),
    )(x_hwc, *weight_args)
    return out[:, 0, :10]                                      # drop lane padding


# ----------------------------------------------------------------------------
# Synthetic params (PyTorch-convention shapes) + pure-JAX reference
# ----------------------------------------------------------------------------
def init_params(key):
    ks = jax.random.split(key, 10)
    s = 0.05
    return {
        "conv1_w": s * jax.random.normal(ks[0], (6, 3, 5, 5), jnp.float32),
        "conv1_b": s * jax.random.normal(ks[1], (6,), jnp.float32),
        "conv2_w": s * jax.random.normal(ks[2], (16, 6, 5, 5), jnp.float32),
        "conv2_b": s * jax.random.normal(ks[3], (16,), jnp.float32),
        "fc1_w": s * jax.random.normal(ks[4], (120, 400), jnp.float32),
        "fc1_b": s * jax.random.normal(ks[5], (120,), jnp.float32),
        "fc2_w": s * jax.random.normal(ks[6], (84, 120), jnp.float32),
        "fc2_b": s * jax.random.normal(ks[7], (84,), jnp.float32),
        "fc3_w": s * jax.random.normal(ks[8], (10, 84), jnp.float32),
        "fc3_b": s * jax.random.normal(ks[9], (10,), jnp.float32),
    }


def _reference_forward(x_nchw, params):
    def conv(x, w, b):
        y = jax.lax.conv_general_dilated(
            x, w, window_strides=(1, 1), padding="VALID",
            dimension_numbers=("NCHW", "OIHW", "NCHW"))
        return jax.nn.relu(y + b[None, :, None, None])

    def pool(x):
        return jax.lax.reduce_window(
            x, -jnp.inf, jax.lax.max, (1, 1, 2, 2), (1, 1, 2, 2), "VALID")

    x = pool(conv(x_nchw, params["conv1_w"], params["conv1_b"]))
    x = pool(conv(x, params["conv2_w"], params["conv2_b"]))
    x = x.reshape(x.shape[0], -1)
    x = jax.nn.relu(x @ params["fc1_w"].T + params["fc1_b"])
    x = jax.nn.relu(x @ params["fc2_w"].T + params["fc2_b"])
    return x @ params["fc3_w"].T + params["fc3_b"]


if __name__ == "__main__":
    # CIFAR-10 geometry is pinned by fc1 (16*5*5) -> 3x32x32 inputs.
    B = 8
    x = jax.random.normal(jax.random.PRNGKey(0), (B, 3, 32, 32), dtype=jnp.float32)
    params = init_params(jax.random.PRNGKey(1))
    prepped = prepare_params(params)        # one-time weight prep (numpy, no jit)

    out = jax.jit(cifar10_forward)(x, prepped)
    out = jax.block_until_ready(out)
    assert out.shape == (B, 10), out.shape

    ref = _reference_forward(x, params)
    err = float(jnp.max(jnp.abs(out - ref)))
    # bf16 MXU operands (f32 accumulation) -> looser tolerance than pure f32.
    assert err < 2e-2, err

    print("KERNEL_OK")
</pallas_src>

<mosaic_0001>
module attributes {stable_mosaic.version = 11 : i64} {
  func.func @_fused_forward_kernel(%arg0: i32, %arg1: memref<1x32x96xf32, #tpu.memory_space<vmem>>, %arg2: memref<5x96x168xbf16, #tpu.memory_space<vmem>>, %arg3: memref<1x168xf32, #tpu.memory_space<vmem>>, %arg4: memref<5x84x160xbf16, #tpu.memory_space<vmem>>, %arg5: memref<1x160xf32, #tpu.memory_space<vmem>>, %arg6: memref<14x28xf32, #tpu.memory_space<vmem>>, %arg7: memref<14x28xf32, #tpu.memory_space<vmem>>, %arg8: memref<168x84xf32, #tpu.memory_space<vmem>>, %arg9: memref<168x84xf32, #tpu.memory_space<vmem>>, %arg10: memref<5x10xf32, #tpu.memory_space<vmem>>, %arg11: memref<5x10xf32, #tpu.memory_space<vmem>>, %arg12: memref<160x80xf32, #tpu.memory_space<vmem>>, %arg13: memref<160x80xf32, #tpu.memory_space<vmem>>, %arg14: memref<400x128xbf16, #tpu.memory_space<vmem>>, %arg15: memref<1x128xf32, #tpu.memory_space<vmem>>, %arg16: memref<128x128xbf16, #tpu.memory_space<vmem>>, %arg17: memref<1x128xf32, #tpu.memory_space<vmem>>, %arg18: memref<128x128xbf16, #tpu.memory_space<vmem>>, %arg19: memref<1x128xf32, #tpu.memory_space<vmem>>, %arg20: memref<1x1x128xf32, #tpu.memory_space<vmem>>) attributes {dimension_semantics = [#tpu.dimension_semantics<parallel>], iteration_bounds = array<i64: 8>, scalar_prefetch = 0 : i64, scratch_operands = 0 : i64, tpu.core_type = #tpu.core_type<tc>, window_params = [{transform_indices = @transform_0, window_bounds = array<i64: 1, 32, 96>}, {pipeline_mode = #tpu.pipeline_mode<synchronous>, transform_indices = @transform_1, window_bounds = array<i64: 5, 96, 168>}, {pipeline_mode = #tpu.pipeline_mode<synchronous>, transform_indices = @transform_2, window_bounds = array<i64: 1, 168>}, {pipeline_mode = #tpu.pipeline_mode<synchronous>, transform_indices = @transform_3, window_bounds = array<i64: 5, 84, 160>}, {pipeline_mode = #tpu.pipeline_mode<synchronous>, transform_indices = @transform_4, window_bounds = array<i64: 1, 160>}, {pipeline_mode = #tpu.pipeline_mode<synchronous>, transform_indices = @transform_5, window_bounds = array<i64: 14, 28>}, {pipeline_mode = #tpu.pipeline_mode<synchronous>, transform_indices = @transform_6, window_bounds = array<i64: 14, 28>}, {pipeline_mode = #tpu.pipeline_mode<synchronous>, transform_indices = @transform_7, window_bounds = array<i64: 168, 84>}, {pipeline_mode = #tpu.pipeline_mode<synchronous>, transform_indices = @transform_8, window_bounds = array<i64: 168, 84>}, {pipeline_mode = #tpu.pipeline_mode<synchronous>, transform_indices = @transform_9, window_bounds = array<i64: 5, 10>}, {pipeline_mode = #tpu.pipeline_mode<synchronous>, transform_indices = @transform_10, window_bounds = array<i64: 5, 10>}, {pipeline_mode = #tpu.pipeline_mode<synchronous>, transform_indices = @transform_11, window_bounds = array<i64: 160, 80>}, {pipeline_mode = #tpu.pipeline_mode<synchronous>, transform_indices = @transform_12, window_bounds = array<i64: 160, 80>}, {pipeline_mode = #tpu.pipeline_mode<synchronous>, transform_indices = @transform_13, window_bounds = array<i64: 400, 128>}, {pipeline_mode = #tpu.pipeline_mode<synchronous>, transform_indices = @transform_14, window_bounds = array<i64: 1, 128>}, {pipeline_mode = #tpu.pipeline_mode<synchronous>, transform_indices = @transform_15, window_bounds = array<i64: 128, 128>}, {pipeline_mode = #tpu.pipeline_mode<synchronous>, transform_indices = @transform_16, window_bounds = array<i64: 1, 128>}, {pipeline_mode = #tpu.pipeline_mode<synchronous>, transform_indices = @transform_17, window_bounds = array<i64: 128, 128>}, {pipeline_mode = #tpu.pipeline_mode<synchronous>, transform_indices = @transform_18, window_bounds = array<i64: 1, 128>}, {transform_indices = @transform_19, window_bounds = array<i64: 1, 1, 128>}]} {
    %c0 = arith.constant 0 : index
    %c0_0 = arith.constant 0 : index
    %c0_1 = arith.constant 0 : index
    %0 = vector.load %arg1[%c0, %c0_0, %c0_1] : memref<1x32x96xf32, #tpu.memory_space<vmem>>, vector<1x28x96xf32>
    %1 = vector.shape_cast %0 : vector<1x28x96xf32> to vector<28x96xf32>
    %2 = arith.truncf %1 : vector<28x96xf32> to vector<28x96xbf16>
    %c0_2 = arith.constant 0 : index
    %c0_3 = arith.constant 0 : index
    %c0_4 = arith.constant 0 : index
    %3 = vector.load %arg2[%c0_2, %c0_3, %c0_4] : memref<5x96x168xbf16, #tpu.memory_space<vmem>>, vector<1x96x168xbf16>
    %4 = vector.shape_cast %3 : vector<1x96x168xbf16> to vector<96x168xbf16>
    %cst = arith.constant dense<0.000000e+00> : vector<28x168xf32>
    %5 = tpu.matmul %2, %4, %cst {dimension_numbers = #tpu.dot_dimension_numbers<[1], [0], [0], [1], [0, 0, 1, 1], [], []>} : vector<28x96xbf16>, vector<96x168xbf16>, vector<28x168xf32> -> vector<28x168xf32>
    %c0_5 = arith.constant 0 : index
    %c1 = arith.constant 1 : index
    %c0_6 = arith.constant 0 : index
    %6 = vector.load %arg1[%c0_5, %c1, %c0_6] : memref<1x32x96xf32, #tpu.memory_space<vmem>>, vector<1x28x96xf32>
    %7 = vector.shape_cast %6 : vector<1x28x96xf32> to vector<28x96xf32>
    %8 = arith.truncf %7 : vector<28x96xf32> to vector<28x96xbf16>
    %c1_7 = arith.constant 1 : index
    %c0_8 = arith.constant 0 : index
    %c0_9 = arith.constant 0 : index
    %9 = vector.load %arg2[%c1_7, %c0_8, %c0_9] : memref<5x96x168xbf16, #tpu.memory_space<vmem>>, vector<1x96x168xbf16>
    %10 = vector.shape_cast %9 : vector<1x96x168xbf16> to vector<96x168xbf16>
    %cst_10 = arith.constant dense<0.000000e+00> : vector<28x168xf32>
    %11 = tpu.matmul %8, %10, %cst_10 {dimension_numbers = #tpu.dot_dimension_numbers<[1], [0], [0], [1], [0, 0, 1, 1], [], []>} : vector<28x96xbf16>, vector<96x168xbf16>, vector<28x168xf32> -> vector<28x168xf32>
    %12 = arith.addf %5, %11 : vector<28x168xf32>
    %c0_11 = arith.constant 0 : index
    %c2 = arith.constant 2 : index
    %c0_12 = arith.constant 0 : index
    %13 = vector.load %arg1[%c0_11, %c2, %c0_12] : memref<1x32x96xf32, #tpu.memory_space<vmem>>, vector<1x28x96xf32>
    %14 = vector.shape_cast %13 : vector<1x28x96xf32> to vector<28x96xf32>
    %15 = arith.truncf %14 : vector<28x96xf32> to vector<28x96xbf16>
    %c2_13 = arith.constant 2 : index
    %c0_14 = arith.constant 0 : index
    %c0_15 = arith.constant 0 : index
    %16 = vector.load %arg2[%c2_13, %c0_14, %c0_15] : memref<5x96x168xbf16, #tpu.memory_space<vmem>>, vector<1x96x168xbf16>
    %17 = vector.shape_cast %16 : vector<1x96x168xbf16> to vector<96x168xbf16>
    %cst_16 = arith.constant dense<0.000000e+00> : vector<28x168xf32>
    %18 = tpu.matmul %15, %17, %cst_16 {dimension_numbers = #tpu.dot_dimension_numbers<[1], [0], [0], [1], [0, 0, 1, 1], [], []>} : vector<28x96xbf16>, vector<96x168xbf16>, vector<28x168xf32> -> vector<28x168xf32>
    %19 = arith.addf %12, %18 : vector<28x168xf32>
    %c0_17 = arith.constant 0 : index
    %c3 = arith.constant 3 : index
    %c0_18 = arith.constant 0 : index
    %20 = vector.load %arg1[%c0_17, %c3, %c0_18] : memref<1x32x96xf32, #tpu.memory_space<vmem>>, vector<1x28x96xf32>
    %21 = vector.shape_cast %20 : vector<1x28x96xf32> to vector<28x96xf32>
    %22 = arith.truncf %21 : vector<28x96xf32> to vector<28x96xbf16>
    %c3_19 = arith.constant 3 : index
    %c0_20 = arith.constant 0 : index
    %c0_21 = arith.constant 0 : index
    %23 = vector.load %arg2[%c3_19, %c0_20, %c0_21] : memref<5x96x168xbf16, #tpu.memory_space<vmem>>, vector<1x96x168xbf16>
    %24 = vector.shape_cast %23 : vector<1x96x168xbf16> to vector<96x168xbf16>
    %cst_22 = arith.constant dense<0.000000e+00> : vector<28x168xf32>
    %25 = tpu.matmul %22, %24, %cst_22 {dimension_numbers = #tpu.dot_dimension_numbers<[1], [0], [0], [1], [0, 0, 1, 1], [], []>} : vector<28x96xbf16>, vector<96x168xbf16>, vector<28x168xf32> -> vector<28x168xf32>
    %26 = arith.addf %19, %25 : vector<28x168xf32>
    %c0_23 = arith.constant 0 : index
    %c4 = arith.constant 4 : index
    %c0_24 = arith.constant 0 : index
    %27 = vector.load %arg1[%c0_23, %c4, %c0_24] : memref<1x32x96xf32, #tpu.memory_space<vmem>>, vector<1x28x96xf32>
    %28 = vector.shape_cast %27 : vector<1x28x96xf32> to vector<28x96xf32>
    %29 = arith.truncf %28 : vector<28x96xf32> to vector<28x96xbf16>
    %c4_25 = arith.constant 4 : index
    %c0_26 = arith.constant 0 : index
    %c0_27 = arith.constant 0 : index
    %30 = vector.load %arg2[%c4_25, %c0_26, %c0_27] : memref<5x96x168xbf16, #tpu.memory_space<vmem>>, vector<1x96x168xbf16>
    %31 = vector.shape_cast %30 : vector<1x96x168xbf16> to vector<96x168xbf16>
    %cst_28 = arith.constant dense<0.000000e+00> : vector<28x168xf32>
    %32 = tpu.matmul %29, %31, %cst_28 {dimension_numbers = #tpu.dot_dimension_numbers<[1], [0], [0], [1], [0, 0, 1, 1], [], []>} : vector<28x96xbf16>, vector<96x168xbf16>, vector<28x168xf32> -> vector<28x168xf32>
    %33 = arith.addf %26, %32 : vector<28x168xf32>
    %c0_29 = arith.constant 0 : index
    %c0_30 = arith.constant 0 : index
    %34 = vector.load %arg3[%c0_29, %c0_30] : memref<1x168xf32, #tpu.memory_space<vmem>>, vector<1x168xf32>
    %35 = vector.broadcast %34 : vector<1x168xf32> to vector<28x168xf32>
    %36 = arith.addf %33, %35 : vector<28x168xf32>
    %cst_31 = arith.constant 0.000000e+00 : f32
    %37 = vector.broadcast %cst_31 : f32 to vector<28x168xf32>
    %38 = arith.maximumf %36, %37 : vector<28x168xf32>
    %c0_32 = arith.constant 0 : index
    %c0_33 = arith.constant 0 : index
    %39 = vector.load %arg6[%c0_32, %c0_33] : memref<14x28xf32, #tpu.memory_space<vmem>>, vector<14x28xf32>
    %cst_34 = arith.constant dense<0.000000e+00> : vector<14x168xf32>
    %40 = tpu.matmul %39, %38, %cst_34 {dimension_numbers = #tpu.dot_dimension_numbers<[1], [0], [0], [1], [0, 0, 1, 1], [], []>} : vector<14x28xf32>, vector<28x168xf32>, vector<14x168xf32> -> vector<14x168xf32>
    %c0_35 = arith.constant 0 : index
    %c0_36 = arith.constant 0 : index
    %41 = vector.load %arg7[%c0_35, %c0_36] : memref<14x28xf32, #tpu.memory_space<vmem>>, vector<14x28xf32>
    %cst_37 = arith.constant dense<0.000000e+00> : vector<14x168xf32>
    %42 = tpu.matmul %41, %38, %cst_37 {dimension_numbers = #tpu.dot_dimension_numbers<[1], [0], [0], [1], [0, 0, 1, 1], [], []>} : vector<14x28xf32>, vector<28x168xf32>, vector<14x168xf32> -> vector<14x168xf32>
    %43 = arith.maximumf %40, %42 : vector<14x168xf32>
    %c0_38 = arith.constant 0 : index
    %c0_39 = arith.constant 0 : index
    %44 = vector.load %arg8[%c0_38, %c0_39] : memref<168x84xf32, #tpu.memory_space<vmem>>, vector<168x84xf32>
    %cst_40 = arith.constant dense<0.000000e+00> : vector<14x84xf32>
    %45 = tpu.matmul %43, %44, %cst_40 {dimension_numbers = #tpu.dot_dimension_numbers<[1], [0], [0], [1], [0, 0, 1, 1], [], []>} : vector<14x168xf32>, vector<168x84xf32>, vector<14x84xf32> -> vector<14x84xf32>
    %c0_41 = arith.constant 0 : index
    %c0_42 = arith.constant 0 : index
    %46 = vector.load %arg9[%c0_41, %c0_42] : memref<168x84xf32, #tpu.memory_space<vmem>>, vector<168x84xf32>
    %cst_43 = arith.constant dense<0.000000e+00> : vector<14x84xf32>
    %47 = tpu.matmul %43, %46, %cst_43 {dimension_numbers = #tpu.dot_dimension_numbers<[1], [0], [0], [1], [0, 0, 1, 1], [], []>} : vector<14x168xf32>, vector<168x84xf32>, vector<14x84xf32> -> vector<14x84xf32>
    %48 = arith.maximumf %45, %47 : vector<14x84xf32>
    %49 = arith.truncf %48 : vector<14x84xf32> to vector<14x84xbf16>
    %50 = vector.extract_strided_slice %49 {offsets = [0, 0], sizes = [10, 84], strides = [1, 1]} : vector<14x84xbf16> to vector<10x84xbf16>
    %c0_44 = arith.constant 0 : index
    %c0_45 = arith.constant 0 : index
    %c0_46 = arith.constant 0 : index
    %51 = vector.load %arg4[%c0_44, %c0_45, %c0_46] : memref<5x84x160xbf16, #tpu.memory_space<vmem>>, vector<1x84x160xbf16>
    %52 = vector.shape_cast %51 : vector<1x84x160xbf16> to vector<84x160xbf16>
    %cst_47 = arith.constant dense<0.000000e+00> : vector<10x160xf32>
    %53 = tpu.matmul %50, %52, %cst_47 {dimension_numbers = #tpu.dot_dimension_numbers<[1], [0], [0], [1], [0, 0, 1, 1], [], []>} : vector<10x84xbf16>, vector<84x160xbf16>, vector<10x160xf32> -> vector<10x160xf32>
    %54 = vector.extract_strided_slice %49 {offsets = [1, 0], sizes = [10, 84], strides = [1, 1]} : vector<14x84xbf16> to vector<10x84xbf16>
    %c1_48 = arith.constant 1 : index
    %c0_49 = arith.constant 0 : index
    %c0_50 = arith.constant 0 : index
    %55 = vector.load %arg4[%c1_48, %c0_49, %c0_50] : memref<5x84x160xbf16, #tpu.memory_space<vmem>>, vector<1x84x160xbf16>
    %56 = vector.shape_cast %55 : vector<1x84x160xbf16> to vector<84x160xbf16>
    %cst_51 = arith.constant dense<0.000000e+00> : vector<10x160xf32>
    %57 = tpu.matmul %54, %56, %cst_51 {dimension_numbers = #tpu.dot_dimension_numbers<[1], [0], [0], [1], [0, 0, 1, 1], [], []>} : vector<10x84xbf16>, vector<84x160xbf16>, vector<10x160xf32> -> vector<10x160xf32>
    %58 = arith.addf %53, %57 : vector<10x160xf32>
    %59 = vector.extract_strided_slice %49 {offsets = [2, 0], sizes = [10, 84], strides = [1, 1]} : vector<14x84xbf16> to vector<10x84xbf16>
    %c2_52 = arith.constant 2 : index
    %c0_53 = arith.constant 0 : index
    %c0_54 = arith.constant 0 : index
    %60 = vector.load %arg4[%c2_52, %c0_53, %c0_54] : memref<5x84x160xbf16, #tpu.memory_space<vmem>>, vector<1x84x160xbf16>
    %61 = vector.shape_cast %60 : vector<1x84x160xbf16> to vector<84x160xbf16>
    %cst_55 = arith.constant dense<0.000000e+00> : vector<10x160xf32>
    %62 = tpu.matmul %59, %61, %cst_55 {dimension_numbers = #tpu.dot_dimension_numbers<[1], [0], [0], [1], [0, 0, 1, 1], [], []>} : vector<10x84xbf16>, vector<84x160xbf16>, vector<10x160xf32> -> vector<10x160xf32>
    %63 = arith.addf %58, %62 : vector<10x160xf32>
    %64 = vector.extract_strided_slice %49 {offsets = [3, 0], sizes = [10, 84], strides = [1, 1]} : vector<14x84xbf16> to vector<10x84xbf16>
    %c3_56 = arith.constant 3 : index
    %c0_57 = arith.constant 0 : index
    %c0_58 = arith.constant 0 : index
    %65 = vector.load %arg4[%c3_56, %c0_57, %c0_58] : memref<5x84x160xbf16, #tpu.memory_space<vmem>>, vector<1x84x160xbf16>
    %66 = vector.shape_cast %65 : vector<1x84x160xbf16> to vector<84x160xbf16>
    %cst_59 = arith.constant dense<0.000000e+00> : vector<10x160xf32>
    %67 = tpu.matmul %64, %66, %cst_59 {dimension_numbers = #tpu.dot_dimension_numbers<[1], [0], [0], [1], [0, 0, 1, 1], [], []>} : vector<10x84xbf16>, vector<84x160xbf16>, vector<10x160xf32> -> vector<10x160xf32>
    %68 = arith.addf %63, %67 : vector<10x160xf32>
    %69 = vector.extract_strided_slice %49 {offsets = [4, 0], sizes = [10, 84], strides = [1, 1]} : vector<14x84xbf16> to vector<10x84xbf16>
    %c4_60 = arith.constant 4 : index
    %c0_61 = arith.constant 0 : index
    %c0_62 = arith.constant 0 : index
    %70 = vector.load %arg4[%c4_60, %c0_61, %c0_62] : memref<5x84x160xbf16, #tpu.memory_space<vmem>>, vector<1x84x160xbf16>
    %71 = vector.shape_cast %70 : vector<1x84x160xbf16> to vector<84x160xbf16>
    %cst_63 = arith.constant dense<0.000000e+00> : vector<10x160xf32>
    %72 = tpu.matmul %69, %71, %cst_63 {dimension_numbers = #tpu.dot_dimension_numbers<[1], [0], [0], [1], [0, 0, 1, 1], [], []>} : vector<10x84xbf16>, vector<84x160xbf16>, vector<10x160xf32> -> vector<10x160xf32>
    %73 = arith.addf %68, %72 : vector<10x160xf32>
    %c0_64 = arith.constant 0 : index
    %c0_65 = arith.constant 0 : index
    %74 = vector.load %arg5[%c0_64, %c0_65] : memref<1x160xf32, #tpu.memory_space<vmem>>, vector<1x160xf32>
    %75 = vector.broadcast %74 : vector<1x160xf32> to vector<10x160xf32>
    %76 = arith.addf %73, %75 : vector<10x160xf32>
    %cst_66 = arith.constant 0.000000e+00 : f32
    %77 = vector.broadcast %cst_66 : f32 to vector<10x160xf32>
    %78 = arith.maximumf %76, %77 : vector<10x160xf32>
    %c0_67 = arith.constant 0 : index
    %c0_68 = arith.constant 0 : index
    %79 = vector.load %arg10[%c0_67, %c0_68] : memref<5x10xf32, #tpu.memory_space<vmem>>, vector<5x10xf32>
    %cst_69 = arith.constant dense<0.000000e+00> : vector<5x160xf32>
    %80 = tpu.matmul %79, %78, %cst_69 {dimension_numbers = #tpu.dot_dimension_numbers<[1], [0], [0], [1], [0, 0, 1, 1], [], []>} : vector<5x10xf32>, vector<10x160xf32>, vector<5x160xf32> -> vector<5x160xf32>
    %c0_70 = arith.constant 0 : index
    %c0_71 = arith.constant 0 : index
    %81 = vector.load %arg11[%c0_70, %c0_71] : memref<5x10xf32, #tpu.memory_space<vmem>>, vector<5x10xf32>
    %cst_72 = arith.constant dense<0.000000e+00> : vector<5x160xf32>
    %82 = tpu.matmul %81, %78, %cst_72 {dimension_numbers = #tpu.dot_dimension_numbers<[1], [0], [0], [1], [0, 0, 1, 1], [], []>} : vector<5x10xf32>, vector<10x160xf32>, vector<5x160xf32> -> vector<5x160xf32>
    %83 = arith.maximumf %80, %82 : vector<5x160xf32>
    %c0_73 = arith.constant 0 : index
    %c0_74 = arith.constant 0 : index
    %84 = vector.load %arg12[%c0_73, %c0_74] : memref<160x80xf32, #tpu.memory_space<vmem>>, vector<160x80xf32>
    %cst_75 = arith.constant dense<0.000000e+00> : vector<5x80xf32>
    %85 = tpu.matmul %83, %84, %cst_75 {dimension_numbers = #tpu.dot_dimension_numbers<[1], [0], [0], [1], [0, 0, 1, 1], [], []>} : vector<5x160xf32>, vector<160x80xf32>, vector<5x80xf32> -> vector<5x80xf32>
    %c0_76 = arith.constant 0 : index
    %c0_77 = arith.constant 0 : index
    %86 = vector.load %arg13[%c0_76, %c0_77] : memref<160x80xf32, #tpu.memory_space<vmem>>, vector<160x80xf32>
    %cst_78 = arith.constant dense<0.000000e+00> : vector<5x80xf32>
    %87 = tpu.matmul %83, %86, %cst_78 {dimension_numbers = #tpu.dot_dimension_numbers<[1], [0], [0], [1], [0, 0, 1, 1], [], []>} : vector<5x160xf32>, vector<160x80xf32>, vector<5x80xf32> -> vector<5x80xf32>
    %88 = arith.maximumf %85, %87 : vector<5x80xf32>
    %89 = vector.extract_strided_slice %88 {offsets = [0, 0], sizes = [1, 80], strides = [1, 1]} : vector<5x80xf32> to vector<1x80xf32>
    %90 = vector.extract_strided_slice %88 {offsets = [1, 0], sizes = [1, 80], strides = [1, 1]} : vector<5x80xf32> to vector<1x80xf32>
    %91 = vector.extract_strided_slice %88 {offsets = [2, 0], sizes = [1, 80], strides = [1, 1]} : vector<5x80xf32> to vector<1x80xf32>
    %92 = vector.extract_strided_slice %88 {offsets = [3, 0], sizes = [1, 80], strides = [1, 1]} : vector<5x80xf32> to vector<1x80xf32>
    %93 = vector.extract_strided_slice %88 {offsets = [4, 0], sizes = [1, 80], strides = [1, 1]} : vector<5x80xf32> to vector<1x80xf32>
    %94 = tpu.concatenate %89, %90, %91, %92, %93 in 1 : vector<1x80xf32>, vector<1x80xf32>, vector<1x80xf32>, vector<1x80xf32>, vector<1x80xf32> -> vector<1x400xf32>
    %95 = arith.truncf %94 : vector<1x400xf32> to vector<1x400xbf16>
    %c0_79 = arith.constant 0 : index
    %c0_80 = arith.constant 0 : index
    %96 = vector.load %arg14[%c0_79, %c0_80] : memref<400x128xbf16, #tpu.memory_space<vmem>>, vector<400x128xbf16>
    %cst_81 = arith.constant dense<0.000000e+00> : vector<1x128xf32>
    %97 = tpu.matmul %95, %96, %cst_81 {dimension_numbers = #tpu.dot_dimension_numbers<[1], [0], [0], [1], [0, 0, 1, 1], [], []>} : vector<1x400xbf16>, vector<400x128xbf16>, vector<1x128xf32> -> vector<1x128xf32>
    %c0_82 = arith.constant 0 : index
    %c0_83 = arith.constant 0 : index
    %98 = vector.load %arg15[%c0_82, %c0_83] : memref<1x128xf32, #tpu.memory_space<vmem>>, vector<1x128xf32>
    %99 = arith.addf %97, %98 : vector<1x128xf32>
    %cst_84 = arith.constant 0.000000e+00 : f32
    %100 = vector.broadcast %cst_84 : f32 to vector<1x128xf32>
    %101 = arith.maximumf %99, %100 : vector<1x128xf32>
    %102 = arith.truncf %101 : vector<1x128xf32> to vector<1x128xbf16>
    %c0_85 = arith.constant 0 : index
    %c0_86 = arith.constant 0 : index
    %103 = vector.load %arg16[%c0_85, %c0_86] : memref<128x128xbf16, #tpu.memory_space<vmem>>, vector<128x128xbf16>
    %cst_87 = arith.constant dense<0.000000e+00> : vector<1x128xf32>
    %104 = tpu.matmul %102, %103, %cst_87 {dimension_numbers = #tpu.dot_dimension_numbers<[1], [0], [0], [1], [0, 0, 1, 1], [], []>} : vector<1x128xbf16>, vector<128x128xbf16>, vector<1x128xf32> -> vector<1x128xf32>
    %c0_88 = arith.constant 0 : index
    %c0_89 = arith.constant 0 : index
    %105 = vector.load %arg17[%c0_88, %c0_89] : memref<1x128xf32, #tpu.memory_space<vmem>>, vector<1x128xf32>
    %106 = arith.addf %104, %105 : vector<1x128xf32>
    %cst_90 = arith.constant 0.000000e+00 : f32
    %107 = vector.broadcast %cst_90 : f32 to vector<1x128xf32>
    %108 = arith.maximumf %106, %107 : vector<1x128xf32>
    %109 = arith.truncf %108 : vector<1x128xf32> to vector<1x128xbf16>
    %c0_91 = arith.constant 0 : index
    %c0_92 = arith.constant 0 : index
    %110 = vector.load %arg18[%c0_91, %c0_92] : memref<128x128xbf16, #tpu.memory_space<vmem>>, vector<128x128xbf16>
    %cst_93 = arith.constant dense<0.000000e+00> : vector<1x128xf32>
    %111 = tpu.matmul %109, %110, %cst_93 {dimension_numbers = #tpu.dot_dimension_numbers<[1], [0], [0], [1], [0, 0, 1, 1], [], []>} : vector<1x128xbf16>, vector<128x128xbf16>, vector<1x128xf32> -> vector<1x128xf32>
    %c0_94 = arith.constant 0 : index
    %c0_95 = arith.constant 0 : index
    %112 = vector.load %arg19[%c0_94, %c0_95] : memref<1x128xf32, #tpu.memory_space<vmem>>, vector<1x128xf32>
    %113 = arith.addf %111, %112 : vector<1x128xf32>
    %c0_96 = arith.constant 0 : index
    %c0_97 = arith.constant 0 : index
    %c0_98 = arith.constant 0 : index
    %114 = vector.load %arg20[%c0_96, %c0_97, %c0_98] : memref<1x1x128xf32, #tpu.memory_space<vmem>>, vector<1x1x128xf32>
    %115 = vector.shape_cast %114 : vector<1x1x128xf32> to vector<1x128xf32>
    %116 = vector.shape_cast %113 : vector<1x128xf32> to vector<1x1x128xf32>
    tpu.vector_store %arg20[%c0_96, %c0_97, %c0_98], %116 {strides = array<i32>} : memref<1x1x128xf32, #tpu.memory_space<vmem>>, vector<1x1x128xf32>,
    return
  }
  func.func @transform_0(%arg0: i32) -> (i32, i32, i32) {
    %c0_i32 = arith.constant 0 : i32
    %c0_i32_0 = arith.constant 0 : i32
    %c0_i32_1 = arith.constant 0 : i32
    return %arg0, %c0_i32, %c0_i32_0 : i32, i32, i32
  }
  func.func @transform_1(%arg0: i32) -> (i32, i32, i32) {
    %c0_i32 = arith.constant 0 : i32
    %c0_i32_0 = arith.constant 0 : i32
    %c0_i32_1 = arith.constant 0 : i32
    %c0_i32_2 = arith.constant 0 : i32
    return %c0_i32, %c0_i32_0, %c0_i32_1 : i32, i32, i32
  }
  func.func @transform_2(%arg0: i32) -> (i32, i32) {
    %c0_i32 = arith.constant 0 : i32
    %c0_i32_0 = arith.constant 0 : i32
    %c0_i32_1 = arith.constant 0 : i32
    return %c0_i32, %c0_i32_0 : i32, i32
  }
  func.func @transform_3(%arg0: i32) -> (i32, i32, i32) {
    %c0_i32 = arith.constant 0 : i32
    %c0_i32_0 = arith.constant 0 : i32
    %c0_i32_1 = arith.constant 0 : i32
    %c0_i32_2 = arith.constant 0 : i32
    return %c0_i32, %c0_i32_0, %c0_i32_1 : i32, i32, i32
  }
  func.func @transform_4(%arg0: i32) -> (i32, i32) {
    %c0_i32 = arith.constant 0 : i32
    %c0_i32_0 = arith.constant 0 : i32
    %c0_i32_1 = arith.constant 0 : i32
    return %c0_i32, %c0_i32_0 : i32, i32
  }
  func.func @transform_5(%arg0: i32) -> (i32, i32) {
    %c0_i32 = arith.constant 0 : i32
    %c0_i32_0 = arith.constant 0 : i32
    %c0_i32_1 = arith.constant 0 : i32
    return %c0_i32, %c0_i32_0 : i32, i32
  }
  func.func @transform_6(%arg0: i32) -> (i32, i32) {
    %c0_i32 = arith.constant 0 : i32
    %c0_i32_0 = arith.constant 0 : i32
    %c0_i32_1 = arith.constant 0 : i32
    return %c0_i32, %c0_i32_0 : i32, i32
  }
  func.func @transform_7(%arg0: i32) -> (i32, i32) {
    %c0_i32 = arith.constant 0 : i32
    %c0_i32_0 = arith.constant 0 : i32
    %c0_i32_1 = arith.constant 0 : i32
    return %c0_i32, %c0_i32_0 : i32, i32
  }
  func.func @transform_8(%arg0: i32) -> (i32, i32) {
    %c0_i32 = arith.constant 0 : i32
    %c0_i32_0 = arith.constant 0 : i32
    %c0_i32_1 = arith.constant 0 : i32
    return %c0_i32, %c0_i32_0 : i32, i32
  }
  func.func @transform_9(%arg0: i32) -> (i32, i32) {
    %c0_i32 = arith.constant 0 : i32
    %c0_i32_0 = arith.constant 0 : i32
    %c0_i32_1 = arith.constant 0 : i32
    return %c0_i32, %c0_i32_0 : i32, i32
  }
  func.func @transform_10(%arg0: i32) -> (i32, i32) {
    %c0_i32 = arith.constant 0 : i32
    %c0_i32_0 = arith.constant 0 : i32
    %c0_i32_1 = arith.constant 0 : i32
    return %c0_i32, %c0_i32_0 : i32, i32
  }
  func.func @transform_11(%arg0: i32) -> (i32, i32) {
    %c0_i32 = arith.constant 0 : i32
    %c0_i32_0 = arith.constant 0 : i32
    %c0_i32_1 = arith.constant 0 : i32
    return %c0_i32, %c0_i32_0 : i32, i32
  }
  func.func @transform_12(%arg0: i32) -> (i32, i32) {
    %c0_i32 = arith.constant 0 : i32
    %c0_i32_0 = arith.constant 0 : i32
    %c0_i32_1 = arith.constant 0 : i32
    return %c0_i32, %c0_i32_0 : i32, i32
  }
  func.func @transform_13(%arg0: i32) -> (i32, i32) {
    %c0_i32 = arith.constant 0 : i32
    %c0_i32_0 = arith.constant 0 : i32
    %c0_i32_1 = arith.constant 0 : i32
    return %c0_i32, %c0_i32_0 : i32, i32
  }
  func.func @transform_14(%arg0: i32) -> (i32, i32) {
    %c0_i32 = arith.constant 0 : i32
    %c0_i32_0 = arith.constant 0 : i32
    %c0_i32_1 = arith.constant 0 : i32
    return %c0_i32, %c0_i32_0 : i32, i32
  }
  func.func @transform_15(%arg0: i32) -> (i32, i32) {
    %c0_i32 = arith.constant 0 : i32
    %c0_i32_0 = arith.constant 0 : i32
    %c0_i32_1 = arith.constant 0 : i32
    return %c0_i32, %c0_i32_0 : i32, i32
  }
  func.func @transform_16(%arg0: i32) -> (i32, i32) {
    %c0_i32 = arith.constant 0 : i32
    %c0_i32_0 = arith.constant 0 : i32
    %c0_i32_1 = arith.constant 0 : i32
    return %c0_i32, %c0_i32_0 : i32, i32
  }
  func.func @transform_17(%arg0: i32) -> (i32, i32) {
    %c0_i32 = arith.constant 0 : i32
    %c0_i32_0 = arith.constant 0 : i32
    %c0_i32_1 = arith.constant 0 : i32
    return %c0_i32, %c0_i32_0 : i32, i32
  }
  func.func @transform_18(%arg0: i32) -> (i32, i32) {
    %c0_i32 = arith.constant 0 : i32
    %c0_i32_0 = arith.constant 0 : i32
    %c0_i32_1 = arith.constant 0 : i32
    return %c0_i32, %c0_i32_0 : i32, i32
  }
  func.func @transform_19(%arg0: i32) -> (i32, i32, i32) {
    %c0_i32 = arith.constant 0 : i32
    %c0_i32_0 = arith.constant 0 : i32
    %c0_i32_1 = arith.constant 0 : i32
    return %arg0, %c0_i32, %c0_i32_0 : i32, i32, i32
  }
}

</mosaic_0001>

<llo_original>
// kernel: cifar10_forward.1
$region0: #{cifar10_forward.1}
  #allocation0 [shape = 'u32[]', space=smem, size = 0x4, offset = 0x4, fixed_abs, tag = 'smem constant byte address 0x4 - core index']
  #allocation1 [shape = 'u32[144,128]{1,0:T(1,128)}', space=vmem, size = 0x12000, scoped, tag = 'internal scratch']
  %s0 = inlined_call_operand.vmem [shape: f32[8,32,96], index: 0, kind: input, shape index: {}]
  %s1 = inlined_call_operand.vmem [shape: bf16[5,96,168], index: 1, kind: input, shape index: {}]
  %s2 = inlined_call_operand.vmem [shape: f32[1,168], index: 2, kind: input, shape index: {}]
  %s3 = inlined_call_operand.vmem [shape: bf16[5,84,160], index: 3, kind: input, shape index: {}]
  %s4 = inlined_call_operand.vmem [shape: f32[1,160], index: 4, kind: input, shape index: {}]
  %s5 = inlined_call_operand.vmem [shape: f32[14,28], index: 5, kind: input, shape index: {}]
  %s6 = inlined_call_operand.vmem [shape: f32[14,28], index: 6, kind: input, shape index: {}]
  %s7 = inlined_call_operand.vmem [shape: f32[168,84], index: 7, kind: input, shape index: {}]
  %s8 = inlined_call_operand.vmem [shape: f32[168,84], index: 8, kind: input, shape index: {}]
  %s9 = inlined_call_operand.vmem [shape: f32[5,10], index: 9, kind: input, shape index: {}]
  %s10 = inlined_call_operand.vmem [shape: f32[5,10], index: 10, kind: input, shape index: {}]
  %s11 = inlined_call_operand.vmem [shape: f32[160,80], index: 11, kind: input, shape index: {}]
  %s12 = inlined_call_operand.vmem [shape: f32[160,80], index: 12, kind: input, shape index: {}]
  %s13 = inlined_call_operand.vmem [shape: bf16[400,128], index: 13, kind: input, shape index: {}]
  %s14 = inlined_call_operand.vmem [shape: f32[1,128], index: 14, kind: input, shape index: {}]
  %s15 = inlined_call_operand.vmem [shape: bf16[128,128], index: 15, kind: input, shape index: {}]
  %s16 = inlined_call_operand.vmem [shape: f32[1,128], index: 16, kind: input, shape index: {}]
  %s17 = inlined_call_operand.vmem [shape: bf16[128,128], index: 17, kind: input, shape index: {}]
  %s18 = inlined_call_operand.vmem [shape: f32[1,128], index: 18, kind: input, shape index: {}]
  %s19 = inlined_call_operand.hbm [shape: f32[8,1,128], index: 19, kind: output, shape index: {}]
  %s20 = sld [smem:[#allocation0]]
  $region109: #{cifar10_forward.1} parent=0
    _
  %s22 = ssub.s32 1, %s20
  %s23 = scalar_select 0, %s22, %s20
  $region1: #{cifar10_forward.1} parent=0
    #allocation2 [shape = 'u8[1024]{0}', space=vmem, size = 0x400, scoped, tag = 'output window, operand 0']
    #allocation3 [shape = 's32[2]{0}', space=sflag, size = 0x8, scoped, tag = 'scoped memory for cifar10_forward.1']
    %24 = vsyncpa [#allocation3], 0
    %s25 = scalar_lea.sflag [#allocation3], 1
    %26 = vsyncpa %s25, 0
    loop: start=0, step=1, limit=10
    $region2: #{cifar10_forward.1} parent=1 // loop_pre_header
      _
    $region3: #{cifar10_forward.1} parent=1 // loop_header
      %s28 = sphi 0, %s32
      %p29 = scmp.ge.s32.totalorder %s28, 10
      %s38 = sphi 0, %s40
      %s41 = sphi 0, %s38
      %s42 = sphi 0, %s41
      %s58 = sphi 0, %s42
      %s62 = sphi 0, %s62
      %s64 = sphi 0, %s62
      %s65 = sphi 0, %s64
      %s79 = sphi 0, %s65
      %s83 = sphi 0, %s83
      %s85 = sphi 0, %s83
      %s86 = sphi 0, %s85
      %s100 = sphi 0, %s86
      %s104 = sphi 0, %s104
      %s106 = sphi 0, %s104
      %s107 = sphi 0, %s106
      %s121 = sphi 0, %s107
      %s125 = sphi 0, %s125
      %s127 = sphi 0, %s125
      %s128 = sphi 0, %s127
      %s142 = sphi 0, %s128
      %s146 = sphi 0, %s146
      %s148 = sphi 0, %s146
      %s149 = sphi 0, %s148
      %s163 = sphi 0, %s149
      %s167 = sphi 0, %s167
      %s169 = sphi 0, %s167
      %s170 = sphi 0, %s169
      %s184 = sphi 0, %s170
      %s188 = sphi 0, %s188
      %s190 = sphi 0, %s188
      %s191 = sphi 0, %s190
      %s205 = sphi 0, %s191
      %s209 = sphi 0, %s209
      %s211 = sphi 0, %s209
      %s212 = sphi 0, %s211
      %s226 = sphi 0, %s212
      %s230 = sphi 0, %s230
      %s232 = sphi 0, %s230
      %s233 = sphi 0, %s232
      %s247 = sphi 0, %s233
      %s251 = sphi 0, %s251
      %s253 = sphi 0, %s251
      %s254 = sphi 0, %s253
      %s268 = sphi 0, %s254
      %s272 = sphi 0, %s272
      %s274 = sphi 0, %s272
      %s275 = sphi 0, %s274
      %s289 = sphi 0, %s275
      %s293 = sphi 0, %s293
      %s295 = sphi 0, %s293
      %s296 = sphi 0, %s295
      %s310 = sphi 0, %s296
      %s314 = sphi 0, %s314
      %s316 = sphi 0, %s314
      %s317 = sphi 0, %s316
      %s331 = sphi 0, %s317
      %s335 = sphi 0, %s335
      %s337 = sphi 0, %s335
      %s338 = sphi 0, %s337
      %s352 = sphi 0, %s338
      %s356 = sphi 0, %s356
      %s358 = sphi 0, %s356
      %s359 = sphi 0, %s358
      %s373 = sphi 0, %s359
      %s377 = sphi 0, %s377
      %s379 = sphi 0, %s377
      %s380 = sphi 0, %s379
      %s394 = sphi 0, %s380
      %s398 = sphi 0, %s398
      %s400 = sphi 0, %s398
      %s401 = sphi 0, %s400
      %s415 = sphi 0, %s401
      %s419 = sphi 0, %s419
      %s421 = sphi 0, %s419
      %s422 = sphi 0, %s421
      %s436 = sphi 0, %s422
      %s442 = sphi 0, %s444
      %s445 = sphi 0, %s442
      %s446 = sphi 0, %s445
      %s462 = sphi 0, %s446
    $region4: #{cifar10_forward.1} parent=1 // loop_header_branch
      %31 = sbr.rel (%p29) target = $region8
    $region5: #{cifar10_forward.1} parent=1 // loop_body
      %s33 = ssub.s32 %s28, 1
      %s34 = ssub.s32 %s28, 2
      %s35 = sadd.s32 %s28, 1
      %s36 = ssub.s32 %s28, %s35
      %p37 = scmp.eq.s32.totalorder %s36, 0
      %s39 = sadd.s32 %s38, 1
      %s40 = scalar_select %p37, %s38, %s39
      %p43 = pneg %p37
      %p44 = scmp.eq.s32.totalorder %s28, 7
      %p45 = por %p43, %p44
      %p46 = scmp.ne.s32.totalorder %s38, %s41
      %p47 = scmp.eq.s32.totalorder %s28, 0
      %p48 = por %p46, %p47
      %p49 = scmp.ne.s32.totalorder %s38, %s41
      %p50 = scmp.eq.s32.totalorder %s33, 7
      %p51 = por %p49, %p50
      %p52 = scmp.ne.s32.totalorder %s41, %s42
      %p53 = scmp.eq.s32.totalorder %s33, 0
      %p54 = por %p52, %p53
      %p55 = scmp.ne.s32.totalorder %s41, %s42
      %p56 = scmp.eq.s32.totalorder %s34, 7
      %p57 = por %p55, %p56
      %p59 = scmp.ne.s32.totalorder %s42, %s58
      %p60 = scmp.eq.s32.totalorder %s34, 0
      %p61 = por %p59, %p60
      %s63 = sadd.s32 %s62, 1
      %p66 = scmp.eq.s32.totalorder %s28, 7
      %p67 = scmp.ne.s32.totalorder %s62, %s64
      %p68 = scmp.eq.s32.totalorder %s28, 0
      %p69 = por %p67, %p68
      %p70 = scmp.ne.s32.totalorder %s62, %s64
      %p71 = scmp.eq.s32.totalorder %s33, 7
      %p72 = por %p70, %p71
      %p73 = scmp.ne.s32.totalorder %s64, %s65
      %p74 = scmp.eq.s32.totalorder %s33, 0
      %p75 = por %p73, %p74
      %p76 = scmp.ne.s32.totalorder %s64, %s65
      %p77 = scmp.eq.s32.totalorder %s34, 7
      %p78 = por %p76, %p77
      %p80 = scmp.ne.s32.totalorder %s65, %s79
      %p81 = scmp.eq.s32.totalorder %s34, 0
      %p82 = por %p80, %p81
      %s84 = sadd.s32 %s83, 1
      %p87 = scmp.eq.s32.totalorder %s28, 7
      %p88 = scmp.ne.s32.totalorder %s83, %s85
      %p89 = scmp.eq.s32.totalorder %s28, 0
      %p90 = por %p88, %p89
      %p91 = scmp.ne.s32.totalorder %s83, %s85
      %p92 = scmp.eq.s32.totalorder %s33, 7
      %p93 = por %p91, %p92
      %p94 = scmp.ne.s32.totalorder %s85, %s86
      %p95 = scmp.eq.s32.totalorder %s33, 0
      %p96 = por %p94, %p95
      %p97 = scmp.ne.s32.totalorder %s85, %s86
      %p98 = scmp.eq.s32.totalorder %s34, 7
      %p99 = por %p97, %p98
      %p101 = scmp.ne.s32.totalorder %s86, %s100
      %p102 = scmp.eq.s32.totalorder %s34, 0
      %p103 = por %p101, %p102
      %s105 = sadd.s32 %s104, 1
      %p108 = scmp.eq.s32.totalorder %s28, 7
      %p109 = scmp.ne.s32.totalorder %s104, %s106
      %p110 = scmp.eq.s32.totalorder %s28, 0
      %p111 = por %p109, %p110
      %p112 = scmp.ne.s32.totalorder %s104, %s106
      %p113 = scmp.eq.s32.totalorder %s33, 7
      %p114 = por %p112, %p113
      %p115 = scmp.ne.s32.totalorder %s106, %s107
      %p116 = scmp.eq.s32.totalorder %s33, 0
      %p117 = por %p115, %p116
      %p118 = scmp.ne.s32.totalorder %s106, %s107
      %p119 = scmp.eq.s32.totalorder %s34, 7
      %p120 = por %p118, %p119
      %p122 = scmp.ne.s32.totalorder %s107, %s121
      %p123 = scmp.eq.s32.totalorder %s34, 0
      %p124 = por %p122, %p123
      %s126 = sadd.s32 %s125, 1
      %p129 = scmp.eq.s32.totalorder %s28, 7
      %p130 = scmp.ne.s32.totalorder %s125, %s127
      %p131 = scmp.eq.s32.totalorder %s28, 0
      %p132 = por %p130, %p131
      %p133 = scmp.ne.s32.totalorder %s125, %s127
      %p134 = scmp.eq.s32.totalorder %s33, 7
      %p135 = por %p133, %p134
      %p136 = scmp.ne.s32.totalorder %s127, %s128
      %p137 = scmp.eq.s32.totalorder %s33, 0
      %p138 = por %p136, %p137
      %p139 = scmp.ne.s32.totalorder %s127, %s128
      %p140 = scmp.eq.s32.totalorder %s34, 7
      %p141 = por %p139, %p140
      %p143 = scmp.ne.s32.totalorder %s128, %s142
      %p144 = scmp.eq.s32.totalorder %s34, 0
      %p145 = por %p143, %p144
      %s147 = sadd.s32 %s146, 1
      %p150 = scmp.eq.s32.totalorder %s28, 7
      %p151 = scmp.ne.s32.totalorder %s146, %s148
      %p152 = scmp.eq.s32.totalorder %s28, 0
      %p153 = por %p151, %p152
      %p154 = scmp.ne.s32.totalorder %s146, %s148
      %p155 = scmp.eq.s32.totalorder %s33, 7
      %p156 = por %p154, %p155
      %p157 = scmp.ne.s32.totalorder %s148, %s149
      %p158 = scmp.eq.s32.totalorder %s33, 0
      %p159 = por %p157, %p158
      %p160 = scmp.ne.s32.totalorder %s148, %s149
      %p161 = scmp.eq.s32.totalorder %s34, 7
      %p162 = por %p160, %p161
      %p164 = scmp.ne.s32.totalorder %s149, %s163
      %p165 = scmp.eq.s32.totalorder %s34, 0
      %p166 = por %p164, %p165
      %s168 = sadd.s32 %s167, 1
      %p171 = scmp.eq.s32.totalorder %s28, 7
      %p172 = scmp.ne.s32.totalorder %s167, %s169
      %p173 = scmp.eq.s32.totalorder %s28, 0
      %p174 = por %p172, %p173
      %p175 = scmp.ne.s32.totalorder %s167, %s169
      %p176 = scmp.eq.s32.totalorder %s33, 7
      %p177 = por %p175, %p176
      %p178 = scmp.ne.s32.totalorder %s169, %s170
      %p179 = scmp.eq.s32.totalorder %s33, 0
      %p180 = por %p178, %p179
      %p181 = scmp.ne.s32.totalorder %s169, %s170
      %p182 = scmp.eq.s32.totalorder %s34, 7
      %p183 = por %p181, %p182
      %p185 = scmp.ne.s32.totalorder %s170, %s184
      %p186 = scmp.eq.s32.totalorder %s34, 0
      %p187 = por %p185, %p186
      %s189 = sadd.s32 %s188, 1
      %p192 = scmp.eq.s32.totalorder %s28, 7
      %p193 = scmp.ne.s32.totalorder %s188, %s190
      %p194 = scmp.eq.s32.totalorder %s28, 0
      %p195 = por %p193, %p194
      %p196 = scmp.ne.s32.totalorder %s188, %s190
      %p197 = scmp.eq.s32.totalorder %s33, 7
      %p198 = por %p196, %p197
      %p199 = scmp.ne.s32.totalorder %s190, %s191
      %p200 = scmp.eq.s32.totalorder %s33, 0
      %p201 = por %p199, %p200
      %p202 = scmp.ne.s32.totalorder %s190, %s191
      %p203 = scmp.eq.s32.totalorder %s34, 7
      %p204 = por %p202, %p203
      %p206 = scmp.ne.s32.totalorder %s191, %s205
      %p207 = scmp.eq.s32.totalorder %s34, 0
      %p208 = por %p206, %p207
      %s210 = sadd.s32 %s209, 1
      %p213 = scmp.eq.s32.totalorder %s28, 7
      %p214 = scmp.ne.s32.totalorder %s209, %s211
      %p215 = scmp.eq.s32.totalorder %s28, 0
      %p216 = por %p214, %p215
      %p217 = scmp.ne.s32.totalorder %s209, %s211
      %p218 = scmp.eq.s32.totalorder %s33, 7
      %p219 = por %p217, %p218
      %p220 = scmp.ne.s32.totalorder %s211, %s212
      %p221 = scmp.eq.s32.totalorder %s33, 0
      %p222 = por %p220, %p221
      %p223 = scmp.ne.s32.totalorder %s211, %s212
      %p224 = scmp.eq.s32.totalorder %s34, 7
      %p225 = por %p223, %p224
      %p227 = scmp.ne.s32.totalorder %s212, %s226
      %p228 = scmp.eq.s32.totalorder %s34, 0
      %p229 = por %p227, %p228
      %s231 = sadd.s32 %s230, 1
      %p234 = scmp.eq.s32.totalorder %s28, 7
      %p235 = scmp.ne.s32.totalorder %s230, %s232
      %p236 = scmp.eq.s32.totalorder %s28, 0
      %p237 = por %p235, %p236
      %p238 = scmp.ne.s32.totalorder %s230, %s232
      %p239 = scmp.eq.s32.totalorder %s33, 7
      %p240 = por %p238, %p239
      %p241 = scmp.ne.s32.totalorder %s232, %s233
      %p242 = scmp.eq.s32.totalorder %s33, 0
      %p243 = por %p241, %p242
      %p244 = scmp.ne.s32.totalorder %s232, %s233
      %p245 = scmp.eq.s32.totalorder %s34, 7
      %p246 = por %p244, %p245
      %p248 = scmp.ne.s32.totalorder %s233, %s247
      %p249 = scmp.eq.s32.totalorder %s34, 0
      %p250 = por %p248, %p249
      %s252 = sadd.s32 %s251, 1
      %p255 = scmp.eq.s32.totalorder %s28, 7
      %p256 = scmp.ne.s32.totalorder %s251, %s253
      %p257 = scmp.eq.s32.totalorder %s28, 0
      %p258 = por %p256, %p257
      %p259 = scmp.ne.s32.totalorder %s251, %s253
      %p260 = scmp.eq.s32.totalorder %s33, 7
      %p261 = por %p259, %p260
      %p262 = scmp.ne.s32.totalorder %s253, %s254
      %p263 = scmp.eq.s32.totalorder %s33, 0
      %p264 = por %p262, %p263
      %p265 = scmp.ne.s32.totalorder %s253, %s254
      %p266 = scmp.eq.s32.totalorder %s34, 7
      %p267 = por %p265, %p266
      %p269 = scmp.ne.s32.totalorder %s254, %s268
      %p270 = scmp.eq.s32.totalorder %s34, 0
      %p271 = por %p269, %p270
      %s273 = sadd.s32 %s272, 1
      %p276 = scmp.eq.s32.totalorder %s28, 7
      %p277 = scmp.ne.s32.totalorder %s272, %s274
      %p278 = scmp.eq.s32.totalorder %s28, 0
      %p279 = por %p277, %p278
      %p280 = scmp.ne.s32.totalorder %s272, %s274
      %p281 = scmp.eq.s32.totalorder %s33, 7
      %p282 = por %p280, %p281
      %p283 = scmp.ne.s32.totalorder %s274, %s275
      %p284 = scmp.eq.s32.totalorder %s33, 0
      %p285 = por %p283, %p284
      %p286 = scmp.ne.s32.totalorder %s274, %s275
      %p287 = scmp.eq.s32.totalorder %s34, 7
      %p288 = por %p286, %p287
      %p290 = scmp.ne.s32.totalorder %s275, %s289
      %p291 = scmp.eq.s32.totalorder %s34, 0
      %p292 = por %p290, %p291
      %s294 = sadd.s32 %s293, 1
      %p297 = scmp.eq.s32.totalorder %s28, 7
      %p298 = scmp.ne.s32.totalorder %s293, %s295
      %p299 = scmp.eq.s32.totalorder %s28, 0
      %p300 = por %p298, %p299
      %p301 = scmp.ne.s32.totalorder %s293, %s295
      %p302 = scmp.eq.s32.totalorder %s33, 7
      %p303 = por %p301, %p302
      %p304 = scmp.ne.s32.totalorder %s295, %s296
      %p305 = scmp.eq.s32.totalorder %s33, 0
      %p306 = por %p304, %p305
      %p307 = scmp.ne.s32.totalorder %s295, %s296
      %p308 = scmp.eq.s32.totalorder %s34, 7
      %p309 = por %p307, %p308
      %p311 = scmp.ne.s32.totalorder %s296, %s310
      %p312 = scmp.eq.s32.totalorder %s34, 0
      %p313 = por %p311, %p312
      %s315 = sadd.s32 %s314, 1
      %p318 = scmp.eq.s32.totalorder %s28, 7
      %p319 = scmp.ne.s32.totalorder %s314, %s316
      %p320 = scmp.eq.s32.totalorder %s28, 0
      %p321 = por %p319, %p320
      %p322 = scmp.ne.s32.totalorder %s314, %s316
      %p323 = scmp.eq.s32.totalorder %s33, 7
      %p324 = por %p322, %p323
      %p325 = scmp.ne.s32.totalorder %s316, %s317
      %p326 = scmp.eq.s32.totalorder %s33, 0
      %p327 = por %p325, %p326
      %p328 = scmp.ne.s32.totalorder %s316, %s317
      %p329 = scmp.eq.s32.totalorder %s34, 7
      %p330 = por %p328, %p329
      %p332 = scmp.ne.s32.totalorder %s317, %s331
      %p333 = scmp.eq.s32.totalorder %s34, 0
      %p334 = por %p332, %p333
      %s336 = sadd.s32 %s335, 1
      %p339 = scmp.eq.s32.totalorder %s28, 7
      %p340 = scmp.ne.s32.totalorder %s335, %s337
      %p341 = scmp.eq.s32.totalorder %s28, 0
      %p342 = por %p340, %p341
      %p343 = scmp.ne.s32.totalorder %s335, %s337
      %p344 = scmp.eq.s32.totalorder %s33, 7
      %p345 = por %p343, %p344
      %p346 = scmp.ne.s32.totalorder %s337, %s338
      %p347 = scmp.eq.s32.totalorder %s33, 0
      %p348 = por %p346, %p347
      %p349 = scmp.ne.s32.totalorder %s337, %s338
      %p350 = scmp.eq.s32.totalorder %s34, 7
      %p351 = por %p349, %p350
      %p353 = scmp.ne.s32.totalorder %s338, %s352
      %p354 = scmp.eq.s32.totalorder %s34, 0
      %p355 = por %p353, %p354
      %s357 = sadd.s32 %s356, 1
      %p360 = scmp.eq.s32.totalorder %s28, 7
      %p361 = scmp.ne.s32.totalorder %s356, %s358
      %p362 = scmp.eq.s32.totalorder %s28, 0
      %p363 = por %p361, %p362
      %p364 = scmp.ne.s32.totalorder %s356, %s358
      %p365 = scmp.eq.s32.totalorder %s33, 7
      %p366 = por %p364, %p365
      %p367 = scmp.ne.s32.totalorder %s358, %s359
      %p368 = scmp.eq.s32.totalorder %s33, 0
      %p369 = por %p367, %p368
      %p370 = scmp.ne.s32.totalorder %s358, %s359
      %p371 = scmp.eq.s32.totalorder %s34, 7
      %p372 = por %p370, %p371
      %p374 = scmp.ne.s32.totalorder %s359, %s373
      %p375 = scmp.eq.s32.totalorder %s34, 0
      %p376 = por %p374, %p375
      %s378 = sadd.s32 %s377, 1
      %p381 = scmp.eq.s32.totalorder %s28, 7
      %p382 = scmp.ne.s32.totalorder %s377, %s379
      %p383 = scmp.eq.s32.totalorder %s28, 0
      %p384 = por %p382, %p383
      %p385 = scmp.ne.s32.totalorder %s377, %s379
      %p386 = scmp.eq.s32.totalorder %s33, 7
      %p387 = por %p385, %p386
      %p388 = scmp.ne.s32.totalorder %s379, %s380
      %p389 = scmp.eq.s32.totalorder %s33, 0
      %p390 = por %p388, %p389
      %p391 = scmp.ne.s32.totalorder %s379, %s380
      %p392 = scmp.eq.s32.totalorder %s34, 7
      %p393 = por %p391, %p392
      %p395 = scmp.ne.s32.totalorder %s380, %s394
      %p396 = scmp.eq.s32.totalorder %s34, 0
      %p397 = por %p395, %p396
      %s399 = sadd.s32 %s398, 1
      %p402 = scmp.eq.s32.totalorder %s28, 7
      %p403 = scmp.ne.s32.totalorder %s398, %s400
      %p404 = scmp.eq.s32.totalorder %s28, 0
      %p405 = por %p403, %p404
      %p406 = scmp.ne.s32.totalorder %s398, %s400
      %p407 = scmp.eq.s32.totalorder %s33, 7
      %p408 = por %p406, %p407
      %p409 = scmp.ne.s32.totalorder %s400, %s401
      %p410 = scmp.eq.s32.totalorder %s33, 0
      %p411 = por %p409, %p410
      %p412 = scmp.ne.s32.totalorder %s400, %s401
      %p413 = scmp.eq.s32.totalorder %s34, 7
      %p414 = por %p412, %p413
      %p416 = scmp.ne.s32.totalorder %s401, %s415
      %p417 = scmp.eq.s32.totalorder %s34, 0
      %p418 = por %p416, %p417
      %s420 = sadd.s32 %s419, 1
      %p423 = scmp.eq.s32.totalorder %s28, 7
      %p424 = scmp.ne.s32.totalorder %s419, %s421
      %p425 = scmp.eq.s32.totalorder %s28, 0
      %p426 = por %p424, %p425
      %p427 = scmp.ne.s32.totalorder %s419, %s421
      %p428 = scmp.eq.s32.totalorder %s33, 7
      %p429 = por %p427, %p428
      %p430 = scmp.ne.s32.totalorder %s421, %s422
      %p431 = scmp.eq.s32.totalorder %s33, 0
      %p432 = por %p430, %p431
      %p433 = scmp.ne.s32.totalorder %s421, %s422
      %p434 = scmp.eq.s32.totalorder %s34, 7
      %p435 = por %p433, %p434
      %p437 = scmp.ne.s32.totalorder %s422, %s436
      %p438 = scmp.eq.s32.totalorder %s34, 0
      %p439 = por %p437, %p438
      %s440 = ssub.s32 %s28, %s35
      %p441 = scmp.eq.s32.totalorder %s440, 0
      %s443 = sadd.s32 %s442, 1
      %s444 = scalar_select %p441, %s442, %s443
      %p447 = pneg %p441
      %p448 = scmp.eq.s32.totalorder %s28, 7
      %p449 = por %p447, %p448
      %p450 = scmp.ne.s32.totalorder %s442, %s445
      %p451 = scmp.eq.s32.totalorder %s28, 0
      %p452 = por %p450, %p451
      %p453 = scmp.ne.s32.totalorder %s442, %s445
      %p454 = scmp.eq.s32.totalorder %s33, 7
      %p455 = por %p453, %p454
      %p456 = scmp.ne.s32.totalorder %s445, %s446
      %p457 = scmp.eq.s32.totalorder %s33, 0
      %p458 = por %p456, %p457
      %p459 = scmp.ne.s32.totalorder %s445, %s446
      %p460 = scmp.eq.s32.totalorder %s34, 7
      %p461 = por %p459, %p460
      %p463 = scmp.ne.s32.totalorder %s446, %s462
      %p464 = scmp.eq.s32.totalorder %s34, 0
      %p465 = por %p463, %p464
      %p466 = scmp.le.s32.totalorder 1, %s28
      %p467 = scmp.lt.s32.totalorder %s28, 9
      %p468 = pnand %p466, %p467
      %p469 = pneg %p468
      // Predicated region
      $region9: #{cifar10_forward.1} parent=5 // pred_check
        _
      $region10: #{cifar10_forward.1} parent=5 // pred_check_branch
        %471 = sbr.rel (%p468) target = $region12
      $region11: #{cifar10_forward.1} parent=5 // pred_region
        %s472 = ssub.s32 %s28, 1
        // Predicated region
        $region13: #{cifar10_forward.1} parent=11 // pred_check
          %p473 = pneg %p75
        $region14: #{cifar10_forward.1} parent=11 // pred_check_branch
          %475 = sbr.rel (%p473) target = $region16
        $region15: #{cifar10_forward.1} parent=11 // pred_region
          _
        $region16: #{cifar10_forward.1} parent=11 // pred_fallthru
          _
        // Predicated region
        $region17: #{cifar10_forward.1} parent=11 // pred_check
          %p476 = pneg %p96
        $region18: #{cifar10_forward.1} parent=11 // pred_check_branch
          %478 = sbr.rel (%p476) target = $region20
        $region19: #{cifar10_forward.1} parent=11 // pred_region
          _
        $region20: #{cifar10_forward.1} parent=11 // pred_fallthru
          _
        // Predicated region
        $region21: #{cifar10_forward.1} parent=11 // pred_check
          %p479 = pneg %p117
        $region22: #{cifar10_forward.1} parent=11 // pred_check_branch
          %481 = sbr.rel (%p479) target = $region24
        $region23: #{cifar10_forward.1} parent=11 // pred_region
          _
        $region24: #{cifar10_forward.1} parent=11 // pred_fallthru
          _
        // Predicated region
        $region25: #{cifar10_forward.1} parent=11 // pred_check
          %p482 = pneg %p138
        $region26: #{cifar10_forward.1} parent=11 // pred_check_branch
          %484 = sbr.rel (%p482) target = $region28
        $region27: #{cifar10_forward.1} parent=11 // pred_region
          _
        $region28: #{cifar10_forward.1} parent=11 // pred_fallthru
          _
        // Predicated region
        $region29: #{cifar10_forward.1} parent=11 // pred_check
          %p485 = pneg %p159
        $region30: #{cifar10_forward.1} parent=11 // pred_check_branch
          %487 = sbr.rel (%p485) target = $region32
        $region31: #{cifar10_forward.1} parent=11 // pred_region
          _
        $region32: #{cifar10_forward.1} parent=11 // pred_fallthru
          _
        // Predicated region
        $region33: #{cifar10_forward.1} parent=11 // pred_check
          %p488 = pneg %p180
        $region34: #{cifar10_forward.1} parent=11 // pred_check_branch
          %490 = sbr.rel (%p488) target = $region36
        $region35: #{cifar10_forward.1} parent=11 // pred_region
          _
        $region36: #{cifar10_forward.1} parent=11 // pred_fallthru
          _
        // Predicated region
        $region37: #{cifar10_forward.1} parent=11 // pred_check
          %p491 = pneg %p201
        $region38: #{cifar10_forward.1} parent=11 // pred_check_branch
          %493 = sbr.rel (%p491) target = $region40
        $region39: #{cifar10_forward.1} parent=11 // pred_region
          _
        $region40: #{cifar10_forward.1} parent=11 // pred_fallthru
          _
        // Predicated region
        $region41: #{cifar10_forward.1} parent=11 // pred_check
          %p494 = pneg %p222
        $region42: #{cifar10_forward.1} parent=11 // pred_check_branch
          %496 = sbr.rel (%p494) target = $region44
        $region43: #{cifar10_forward.1} parent=11 // pred_region
          _
        $region44: #{cifar10_forward.1} parent=11 // pred_fallthru
          _
        // Predicated region
        $region45: #{cifar10_forward.1} parent=11 // pred_check
          %p497 = pneg %p243
        $region46: #{cifar10_forward.1} parent=11 // pred_check_branch
          %499 = sbr.rel (%p497) target = $region48
        $region47: #{cifar10_forward.1} parent=11 // pred_region
          _
        $region48: #{cifar10_forward.1} parent=11 // pred_fallthru
          _
        // Predicated region
        $region49: #{cifar10_forward.1} parent=11 // pred_check
          %p500 = pneg %p264
        $region50: #{cifar10_forward.1} parent=11 // pred_check_branch
          %502 = sbr.rel (%p500) target = $region52
        $region51: #{cifar10_forward.1} parent=11 // pred_region
          _
        $region52: #{cifar10_forward.1} parent=11 // pred_fallthru
          _
        // Predicated region
        $region53: #{cifar10_forward.1} parent=11 // pred_check
          %p503 = pneg %p285
        $region54: #{cifar10_forward.1} parent=11 // pred_check_branch
          %505 = sbr.rel (%p503) target = $region56
        $region55: #{cifar10_forward.1} parent=11 // pred_region
          _
        $region56: #{cifar10_forward.1} parent=11 // pred_fallthru
          _
        // Predicated region
        $region57: #{cifar10_forward.1} parent=11 // pred_check
          %p506 = pneg %p306
        $region58: #{cifar10_forward.1} parent=11 // pred_check_branch
          %508 = sbr.rel (%p506) target = $region60
        $region59: #{cifar10_forward.1} parent=11 // pred_region
          _
        $region60: #{cifar10_forward.1} parent=11 // pred_fallthru
          _
        // Predicated region
        $region61: #{cifar10_forward.1} parent=11 // pred_check
          %p509 = pneg %p327
        $region62: #{cifar10_forward.1} parent=11 // pred_check_branch
          %511 = sbr.rel (%p509) target = $region64
        $region63: #{cifar10_forward.1} parent=11 // pred_region
          _
        $region64: #{cifar10_forward.1} parent=11 // pred_fallthru
          _
        // Predicated region
        $region65: #{cifar10_forward.1} parent=11 // pred_check
          %p512 = pneg %p348
        $region66: #{cifar10_forward.1} parent=11 // pred_check_branch
          %514 = sbr.rel (%p512) target = $region68
        $region67: #{cifar10_forward.1} parent=11 // pred_region
          _
        $region68: #{cifar10_forward.1} parent=11 // pred_fallthru
          _
        // Predicated region
        $region69: #{cifar10_forward.1} parent=11 // pred_check
          %p515 = pneg %p369
        $region70: #{cifar10_forward.1} parent=11 // pred_check_branch
          %517 = sbr.rel (%p515) target = $region72
        $region71: #{cifar10_forward.1} parent=11 // pred_region
          _
        $region72: #{cifar10_forward.1} parent=11 // pred_fallthru
          _
        // Predicated region
        $region73: #{cifar10_forward.1} parent=11 // pred_check
          %p518 = pneg %p390
        $region74: #{cifar10_forward.1} parent=11 // pred_check_branch
          %520 = sbr.rel (%p518) target = $region76
        $region75: #{cifar10_forward.1} parent=11 // pred_region
          _
        $region76: #{cifar10_forward.1} parent=11 // pred_fallthru
          _
        // Predicated region
        $region77: #{cifar10_forward.1} parent=11 // pred_check
          %p521 = pneg %p411
        $region78: #{cifar10_forward.1} parent=11 // pred_check_branch
          %523 = sbr.rel (%p521) target = $region80
        $region79: #{cifar10_forward.1} parent=11 // pred_region
          _
        $region80: #{cifar10_forward.1} parent=11 // pred_fallthru
          _
        // Predicated region
        $region81: #{cifar10_forward.1} parent=11 // pred_check
          %p524 = pneg %p432
        $region82: #{cifar10_forward.1} parent=11 // pred_check_branch
          %526 = sbr.rel (%p524) target = $region84
        $region83: #{cifar10_forward.1} parent=11 // pred_region
          _
        $region84: #{cifar10_forward.1} parent=11 // pred_fallthru
          _
      $region12: #{cifar10_forward.1} parent=5 // pred_fallthru
        _
      %p527 = scmp.lt.s32.totalorder %s28, 8
      // Predicated region
      $region85: #{cifar10_forward.1} parent=5 // pred_check
        %p528 = pneg %p527
      $region86: #{cifar10_forward.1} parent=5 // pred_check_branch
        %530 = sbr.rel (%p528) target = $region88
      $region87: #{cifar10_forward.1} parent=5 // pred_region
        // Predicated region
        $region89: #{cifar10_forward.1} parent=87 // pred_check
          %p531 = pneg %p48
        $region90: #{cifar10_forward.1} parent=87 // pred_check_branch
          %533 = sbr.rel (%p531) target = $region92
        $region91: #{cifar10_forward.1} parent=87 // pred_region
          %p534 = scmp.lt.s32.totalorder %s28, 7
          %s535 = scalar_select %p534, %s28, 7
          %s536 = smul.addr %s535, 4
          %s537 = smul.addr %s536, 8
          %s538 = scalar_lea.vmem %s0, %s537
        $region92: #{cifar10_forward.1} parent=87 // pred_fallthru
          _
      $region88: #{cifar10_forward.1} parent=5 // pred_fallthru
        _
      %p539 = scmp.le.s32.totalorder 1, %s28
      %p540 = scmp.lt.s32.totalorder %s28, 9
      %p541 = pnand %p539, %p540
      %p542 = pneg %p541
      // Predicated region
      $region93: #{cifar10_forward.1} parent=5 // pred_check
        _
      $region94: #{cifar10_forward.1} parent=5 // pred_check_branch
        %544 = sbr.rel (%p541) target = $region96
      $region95: #{cifar10_forward.1} parent=5 // pred_region
        %s545 = ssub.s32 %s28, 1
        %p546 = scmp.lt.s32.totalorder %s33, 7
        %s547 = scalar_select %p546, %s33, 7
        %s548 = smul.addr %s547, 4
        %s549 = smul.addr %s548, 8
        %s550 = scalar_lea.vmem %s0, %s549
        %p551 = pneg %p54
        %p552 = pneg %p51
        %p553 = pneg %p75
        %p554 = pneg %p72
        %p555 = pneg %p96
        %p556 = pneg %p93
        %p557 = pneg %p117
        %p558 = pneg %p114
        %p559 = pneg %p138
        %p560 = pneg %p135
        %p561 = pneg %p159
        %p562 = pneg %p156
        %p563 = pneg %p180
        %p564 = pneg %p177
        %p565 = pneg %p201
        %p566 = pneg %p198
        %p567 = pneg %p222
        %p568 = pneg %p219
        %p569 = pneg %p243
        %p570 = pneg %p240
        %p571 = pneg %p264
        %p572 = pneg %p261
        %p573 = pneg %p285
        %p574 = pneg %p282
        %p575 = pneg %p306
        %p576 = pneg %p303
        %p577 = pneg %p327
        %p578 = pneg %p324
        %p579 = pneg %p348
        %p580 = pneg %p345
        %p581 = pneg %p369
        %p582 = pneg %p366
        %p583 = pneg %p390
        %p584 = pneg %p387
        %p585 = pneg %p411
        %p586 = pneg %p408
        %p587 = pneg %p432
        %p588 = pneg %p429
        %p589 = pneg %p458
        %p590 = pneg %p455
        %s591 = sand.u32 %s445, 1
        %s592 = scalar_lea.sflag [#allocation3], %s591
        %s593 = sand.u32 %s445, 1
        %s594 = scalar_lea.vmem [#allocation2], %s593
        %p595 = scmp.lt.s32.totalorder %s33, 7
        %s596 = scalar_select %p595, %s33, 7
        %s597 = smul.addr %s596, 4
        %s598 = smul.addr %s597, 8
        %s599 = scalar_lea.vmem %s0, %s598
        %v601 = vld [vmem:[%s599] sm:$0xff]
        %v602 = vld [vmem:[%s599 + $0x8] sm:$0xff]
        %v603 = vld [vmem:[%s599 + $0x10] sm:$0xff]
        %v604 = vld [vmem:[%s599 + $0x18] sm:$0xf]
        %v605 = vpack.c.bf16 %v602, %v601
        %v606 = vpack.c.bf16 %v604, %v603
        %v607 = vld [vmem:[%s1] sm:$0xff]
        %v608 = vld [vmem:[%s1 + $0x8] sm:$0xff]
        %v609 = vld [vmem:[%s1 + $0x10] sm:$0xff]
        %v610 = vld [vmem:[%s1 + $0x18] sm:$0xff]
        %v611 = vld [vmem:[%s1 + $0x20] sm:$0xff]
        %v612 = vld [vmem:[%s1 + $0x28] sm:$0xff]
        %v613 = vld [vmem:[%s1 + $0x30] sm:$0xff]
        %v614 = vld [vmem:[%s1 + $0x38] sm:$0xff]
        %v615 = vld [vmem:[%s1 + $0x40] sm:$0xff]
        %v616 = vld [vmem:[%s1 + $0x48] sm:$0xff]
        %v617 = vld [vmem:[%s1 + $0x50] sm:$0xff]
        %v618 = vld [vmem:[%s1 + $0x58] sm:$0xff]
        %v619 = vld [vmem:[%s599 + $0x1] sm:$0xff]
        %v620 = vld [vmem:[%s599 + $0x9] sm:$0xff]
        %v621 = vld [vmem:[%s599 + $0x11] sm:$0xff]
        %v622 = vld [vmem:[%s599 + $0x19] sm:$0xf]
        %v623 = vpack.c.bf16 %v620, %v619
        %v624 = vpack.c.bf16 %v622, %v621
        %s625 = scalar_lea.vmem %s1, 96
        %v626 = vld [vmem:[%s625] sm:$0xff]
        %v627 = vld [vmem:[%s625 + $0x8] sm:$0xff]
        %v628 = vld [vmem:[%s625 + $0x10] sm:$0xff]
        %v629 = vld [vmem:[%s625 + $0x18] sm:$0xff]
        %v630 = vld [vmem:[%s625 + $0x20] sm:$0xff]
        %v631 = vld [vmem:[%s625 + $0x28] sm:$0xff]
        %v632 = vld [vmem:[%s625 + $0x30] sm:$0xff]
        %v633 = vld [vmem:[%s625 + $0x38] sm:$0xff]
        %v634 = vld [vmem:[%s625 + $0x40] sm:$0xff]
        %v635 = vld [vmem:[%s625 + $0x48] sm:$0xff]
        %v636 = vld [vmem:[%s625 + $0x50] sm:$0xff]
        %v637 = vld [vmem:[%s625 + $0x58] sm:$0xff]
        %v650 = vunpack.c.l.b16 %v626
        %v651 = vunpack.c.h.b16 %v626
        %v652 = vunpack.c.l.b16 %v627
        %v653 = vunpack.c.h.b16 %v627
        %v654 = vunpack.c.l.b16 %v628
        %v655 = vunpack.c.h.b16 %v628
        %v656 = vunpack.c.l.b16 %v629
        %v657 = vunpack.c.h.b16 %v629
        %v658 = vunpack.c.l.b16 %v630
        %v659 = vunpack.c.h.b16 %v630
        %v660 = vunpack.c.l.b16 %v631
        %v661 = vunpack.c.h.b16 %v631
        %v662 = vunpack.c.l.b16 %v632
        %v663 = vunpack.c.h.b16 %v632
        %v664 = vunpack.c.l.b16 %v633
        %v665 = vunpack.c.h.b16 %v633
        %v666 = vunpack.c.l.b16 %v634
        %v667 = vunpack.c.h.b16 %v634
        %v668 = vunpack.c.l.b16 %v635
        %v669 = vunpack.c.h.b16 %v635
        %v670 = vunpack.c.l.b16 %v636
        %v671 = vunpack.c.h.b16 %v636
        %v672 = vunpack.c.l.b16 %v637
        %v673 = vunpack.c.h.b16 %v637
        %v674 = vpack.c.b16 %v652, %v650
        %v675 = vpack.c.b16 %v653, %v651
        %v676 = vpack.c.b16 %v656, %v654
        %v677 = vpack.c.b16 %v657, %v655
        %v678 = vpack.c.b16 %v660, %v658
        %v679 = vpack.c.b16 %v661, %v659
        %v680 = vpack.c.b16 %v664, %v662
        %v681 = vpack.c.b16 %v665, %v663
        %v682 = vpack.c.b16 %v668, %v666
        %v683 = vpack.c.b16 %v669, %v667
        %v684 = vpack.c.b16 %v672, %v670
        %v685 = vpack.c.b16 %v673, %v671
        %vm698 = vcmask 785408
        %v700 = vsel %vm698, %v623, 0
        %v703 = vsel %vm698, %v624, 0
        %705 = vmatprep.subr.bf16.mxu0 0
        %706 = vmatpush1.bf16.msra.mxu0 0
        %707 = vmatprep.subr.bf16.mxu0 0
        %708 = vmatpush1.bf16.msra.mxu0 0
        %709 = vmatprep.subr.bf16.mxu0 %v685
        %710 = vmatpush1.bf16.msra.mxu0 %v684
        %711 = vmatprep.subr.bf16.mxu0 %v683
        %712 = vmatpush1.bf16.msra.mxu0 %v682
        %713 = vmatprep.subr.bf16.mxu0 %v681
        %714 = vmatpush1.bf16.msra.mxu0 %v680
        %715 = vmatprep.subr.bf16.mxu0 %v679
        %716 = vmatpush1.bf16.msra.mxu0 %v678
        %717 = vmatprep.subr.bf16.mxu0 %v677
        %718 = vmatpush1.bf16.msra.mxu0 %v676
        %719 = vmatprep.subr.bf16.mxu0 %v675
        %720 = vmatpush1.bf16.msra.mxu0 %v674
        %721 = vmatprep.subr.bf16.mxu0 0
        %722 = vmatpush2.bf16.msra.mxu0 0
        %723 = vmatprep.subr.bf16.mxu0 0
        %724 = vmatpush2.bf16.msra.mxu0 0
        %725 = vmatprep.subr.bf16.mxu0 0
        %726 = vmatpush2.bf16.msra.mxu0 0
        %727 = vmatprep.subr.bf16.mxu0 0
        %728 = vmatpush2.bf16.msra.mxu0 0
        %729 = vmatprep.subr.bf16.mxu0 0
        %730 = vmatpush2.bf16.msra.mxu0 0
        %731 = vmatprep.subr.bf16.mxu0 0
        %732 = vmatpush2.bf16.msra.mxu0 0
        %733 = vmatprep.subr.bf16.mxu0 0
        %734 = vmatpush2.bf16.msra.mxu0 0
        %735 = vmatprep.subr.bf16.mxu0 0
        %736 = vmatpush2.bf16.msra.mxu0 0
        %737 = vmatprep.mubr.bf16.mxu0 0
        %738 = vmatmul.mubr.bf16.gmra.mxu0 %v700
        %v739 = vpop.f32.mrf.mxu0
        %v740 = vadd.f32 0.0, %v739
        %v741 = vpop.f32.mrf.mxu0
        %v742 = vadd.f32 0.0, %v741
        %v743 = vpop.f32.mrf.mxu0
        %v744 = vadd.f32 0.0, %v743
        %v745 = vpop.f32.mrf.mxu0
        %v746 = vadd.f32 0.0, %v745
        %747 = vmatprep.mubr.bf16.mxu0 0
        %748 = vmatmul.mubr.bf16.gmra.mxu0 %v703
        %v749 = vpop.f32.mrf.mxu0
        %v750 = vadd.f32 0.0, %v749
        %v751 = vpop.f32.mrf.mxu0
        %v752 = vadd.f32 0.0, %v751
        %v753 = vpop.f32.mrf.mxu0
        %v754 = vadd.f32 0.0, %v753
        %v755 = vpop.f32.mrf.mxu0
        %v756 = vadd.f32 0.0, %v755
        %757 = vdwg.mxu0
        %v770 = vunpack.c.l.b16 %v607
        %v771 = vunpack.c.h.b16 %v607
        %v772 = vunpack.c.l.b16 %v608
        %v773 = vunpack.c.h.b16 %v608
        %v774 = vunpack.c.l.b16 %v609
        %v775 = vunpack.c.h.b16 %v609
        %v776 = vunpack.c.l.b16 %v610
        %v777 = vunpack.c.h.b16 %v610
        %v778 = vunpack.c.l.b16 %v611
        %v779 = vunpack.c.h.b16 %v611
        %v780 = vunpack.c.l.b16 %v612
        %v781 = vunpack.c.h.b16 %v612
        %v782 = vunpack.c.l.b16 %v613
        %v783 = vunpack.c.h.b16 %v613
        %v784 = vunpack.c.l.b16 %v614
        %v785 = vunpack.c.h.b16 %v614
        %v786 = vunpack.c.l.b16 %v615
        %v787 = vunpack.c.h.b16 %v615
        %v788 = vunpack.c.l.b16 %v616
        %v789 = vunpack.c.h.b16 %v616
        %v790 = vunpack.c.l.b16 %v617
        %v791 = vunpack.c.h.b16 %v617
        %v792 = vunpack.c.l.b16 %v618
        %v793 = vunpack.c.h.b16 %v618
        %v794 = vpack.c.b16 %v772, %v770
        %v795 = vpack.c.b16 %v773, %v771
        %v796 = vpack.c.b16 %v776, %v774
        %v797 = vpack.c.b16 %v777, %v775
        %v798 = vpack.c.b16 %v780, %v778
        %v799 = vpack.c.b16 %v781, %v779
        %v800 = vpack.c.b16 %v784, %v782
        %v801 = vpack.c.b16 %v785, %v783
        %v802 = vpack.c.b16 %v788, %v786
        %v803 = vpack.c.b16 %v789, %v787
        %v804 = vpack.c.b16 %v792, %v790
        %v805 = vpack.c.b16 %v793, %v791
        %v819 = vsel %vm698, %v605, 0
        %v822 = vsel %vm698, %v606, 0
        %824 = vmatprep.subr.bf16.mxu0 0
        %825 = vmatpush1.bf16.msra.mxu0 0
        %826 = vmatprep.subr.bf16.mxu0 0
        %827 = vmatpush1.bf16.msra.mxu0 0
        %828 = vmatprep.subr.bf16.mxu0 %v805
        %829 = vmatpush1.bf16.msra.mxu0 %v804
        %830 = vmatprep.subr.bf16.mxu0 %v803
        %831 = vmatpush1.bf16.msra.mxu0 %v802
        %832 = vmatprep.subr.bf16.mxu0 %v801
        %833 = vmatpush1.bf16.msra.mxu0 %v800
        %834 = vmatprep.subr.bf16.mxu0 %v799
        %835 = vmatpush1.bf16.msra.mxu0 %v798
        %836 = vmatprep.subr.bf16.mxu0 %v797
        %837 = vmatpush1.bf16.msra.mxu0 %v796
        %838 = vmatprep.subr.bf16.mxu0 %v795
        %839 = vmatpush1.bf16.msra.mxu0 %v794
        %840 = vmatprep.subr.bf16.mxu0 0
        %841 = vmatpush2.bf16.msra.mxu0 0
        %842 = vmatprep.subr.bf16.mxu0 0
        %843 = vmatpush2.bf16.msra.mxu0 0
        %844 = vmatprep.subr.bf16.mxu0 0
        %845 = vmatpush2.bf16.msra.mxu0 0
        %846 = vmatprep.subr.bf16.mxu0 0
        %847 = vmatpush2.bf16.msra.mxu0 0
        %848 = vmatprep.subr.bf16.mxu0 0
        %849 = vmatpush2.bf16.msra.mxu0 0
        %850 = vmatprep.subr.bf16.mxu0 0
        %851 = vmatpush2.bf16.msra.mxu0 0
        %852 = vmatprep.subr.bf16.mxu0 0
        %853 = vmatpush2.bf16.msra.mxu0 0
        %854 = vmatprep.subr.bf16.mxu0 0
        %855 = vmatpush2.bf16.msra.mxu0 0
        %856 = vmatprep.mubr.bf16.mxu0 0
        %857 = vmatmul.mubr.bf16.gmra.mxu0 %v819
        %v858 = vpop.f32.mrf.mxu0
        %v859 = vadd.f32 %v740, %v858
        %v860 = vpop.f32.mrf.mxu0
        %v861 = vadd.f32 %v742, %v860
        %v862 = vpop.f32.mrf.mxu0
        %v863 = vadd.f32 %v744, %v862
        %v864 = vpop.f32.mrf.mxu0
        %v865 = vadd.f32 %v746, %v864
        %866 = vmatprep.mubr.bf16.mxu0 0
        %867 = vmatmul.mubr.bf16.gmra.mxu0 %v822
        %v868 = vpop.f32.mrf.mxu0
        %v869 = vadd.f32 %v750, %v868
        %v870 = vpop.f32.mrf.mxu0
        %v871 = vadd.f32 %v752, %v870
        %v872 = vpop.f32.mrf.mxu0
        %v873 = vadd.f32 %v754, %v872
        %v874 = vpop.f32.mrf.mxu0
        %v875 = vadd.f32 %v756, %v874
        %876 = vdwg.mxu0
        %v877 = vld [vmem:[%s599 + $0x2] sm:$0xff]
        %v878 = vld [vmem:[%s599 + $0xa] sm:$0xff]
        %v879 = vld [vmem:[%s599 + $0x12] sm:$0xff]
        %v880 = vld [vmem:[%s599 + $0x1a] sm:$0xf]
        %v881 = vpack.c.bf16 %v878, %v877
        %v882 = vpack.c.bf16 %v880, %v879
        %s883 = scalar_lea.vmem %s1, 192
        %v884 = vld [vmem:[%s883] sm:$0xff]
        %v885 = vld [vmem:[%s883 + $0x8] sm:$0xff]
        %v886 = vld [vmem:[%s883 + $0x10] sm:$0xff]
        %v887 = vld [vmem:[%s883 + $0x18] sm:$0xff]
        %v888 = vld [vmem:[%s883 + $0x20] sm:$0xff]
        %v889 = vld [vmem:[%s883 + $0x28] sm:$0xff]
        %v890 = vld [vmem:[%s883 + $0x30] sm:$0xff]
        %v891 = vld [vmem:[%s883 + $0x38] sm:$0xff]
        %v892 = vld [vmem:[%s883 + $0x40] sm:$0xff]
        %v893 = vld [vmem:[%s883 + $0x48] sm:$0xff]
        %v894 = vld [vmem:[%s883 + $0x50] sm:$0xff]
        %v895 = vld [vmem:[%s883 + $0x58] sm:$0xff]
        %v908 = vunpack.c.l.b16 %v884
        %v909 = vunpack.c.h.b16 %v884
        %v910 = vunpack.c.l.b16 %v885
        %v911 = vunpack.c.h.b16 %v885
        %v912 = vunpack.c.l.b16 %v886
        %v913 = vunpack.c.h.b16 %v886
        %v914 = vunpack.c.l.b16 %v887
        %v915 = vunpack.c.h.b16 %v887
        %v916 = vunpack.c.l.b16 %v888
        %v917 = vunpack.c.h.b16 %v888
        %v918 = vunpack.c.l.b16 %v889
        %v919 = vunpack.c.h.b16 %v889
        %v920 = vunpack.c.l.b16 %v890
        %v921 = vunpack.c.h.b16 %v890
        %v922 = vunpack.c.l.b16 %v891
        %v923 = vunpack.c.h.b16 %v891
        %v924 = vunpack.c.l.b16 %v892
        %v925 = vunpack.c.h.b16 %v892
        %v926 = vunpack.c.l.b16 %v893
        %v927 = vunpack.c.h.b16 %v893
        %v928 = vunpack.c.l.b16 %v894
        %v929 = vunpack.c.h.b16 %v894
        %v930 = vunpack.c.l.b16 %v895
        %v931 = vunpack.c.h.b16 %v895
        %v932 = vpack.c.b16 %v910, %v908
        %v933 = vpack.c.b16 %v911, %v909
        %v934 = vpack.c.b16 %v914, %v912
        %v935 = vpack.c.b16 %v915, %v913
        %v936 = vpack.c.b16 %v918, %v916
        %v937 = vpack.c.b16 %v919, %v917
        %v938 = vpack.c.b16 %v922, %v920
        %v939 = vpack.c.b16 %v923, %v921
        %v940 = vpack.c.b16 %v926, %v924
        %v941 = vpack.c.b16 %v927, %v925
        %v942 = vpack.c.b16 %v930, %v928
        %v943 = vpack.c.b16 %v931, %v929
        %v957 = vsel %vm698, %v881, 0
        %v960 = vsel %vm698, %v882, 0
        %962 = vmatprep.subr.bf16.mxu0 0
        %963 = vmatpush1.bf16.msra.mxu0 0
        %964 = vmatprep.subr.bf16.mxu0 0
        %965 = vmatpush1.bf16.msra.mxu0 0
        %966 = vmatprep.subr.bf16.mxu0 %v943
        %967 = vmatpush1.bf16.msra.mxu0 %v942
        %968 = vmatprep.subr.bf16.mxu0 %v941
        %969 = vmatpush1.bf16.msra.mxu0 %v940
        %970 = vmatprep.subr.bf16.mxu0 %v939
        %971 = vmatpush1.bf16.msra.mxu0 %v938
        %972 = vmatprep.subr.bf16.mxu0 %v937
        %973 = vmatpush1.bf16.msra.mxu0 %v936
        %974 = vmatprep.subr.bf16.mxu0 %v935
        %975 = vmatpush1.bf16.msra.mxu0 %v934
        %976 = vmatprep.subr.bf16.mxu0 %v933
        %977 = vmatpush1.bf16.msra.mxu0 %v932
        %978 = vmatprep.subr.bf16.mxu0 0
        %979 = vmatpush2.bf16.msra.mxu0 0
        %980 = vmatprep.subr.bf16.mxu0 0
        %981 = vmatpush2.bf16.msra.mxu0 0
        %982 = vmatprep.subr.bf16.mxu0 0
        %983 = vmatpush2.bf16.msra.mxu0 0
        %984 = vmatprep.subr.bf16.mxu0 0
        %985 = vmatpush2.bf16.msra.mxu0 0
        %986 = vmatprep.subr.bf16.mxu0 0
        %987 = vmatpush2.bf16.msra.mxu0 0
        %988 = vmatprep.subr.bf16.mxu0 0
        %989 = vmatpush2.bf16.msra.mxu0 0
        %990 = vmatprep.subr.bf16.mxu0 0
        %991 = vmatpush2.bf16.msra.mxu0 0
        %992 = vmatprep.subr.bf16.mxu0 0
        %993 = vmatpush2.bf16.msra.mxu0 0
        %994 = vmatprep.mubr.bf16.mxu0 0
        %995 = vmatmul.mubr.bf16.gmra.mxu0 %v957
        %v996 = vpop.f32.mrf.mxu0
        %v997 = vadd.f32 0.0, %v996
        %v998 = vpop.f32.mrf.mxu0
        %v999 = vadd.f32 0.0, %v998
        %v1000 = vpop.f32.mrf.mxu0
        %v1001 = vadd.f32 0.0, %v1000
        %v1002 = vpop.f32.mrf.mxu0
        %v1003 = vadd.f32 0.0, %v1002
        %1004 = vmatprep.mubr.bf16.mxu0 0
        %1005 = vmatmul.mubr.bf16.gmra.mxu0 %v960
        %v1006 = vpop.f32.mrf.mxu0
        %v1007 = vadd.f32 0.0, %v1006
        %v1008 = vpop.f32.mrf.mxu0
        %v1009 = vadd.f32 0.0, %v1008
        %v1010 = vpop.f32.mrf.mxu0
        %v1011 = vadd.f32 0.0, %v1010
        %v1012 = vpop.f32.mrf.mxu0
        %v1013 = vadd.f32 0.0, %v1012
        %1014 = vdwg.mxu0
        %v1015 = vadd.f32 %v859, %v997
        %v1016 = vadd.f32 %v861, %v999
        %v1017 = vadd.f32 %v863, %v1001
        %v1018 = vadd.f32 %v865, %v1003
        %v1019 = vadd.f32 %v869, %v1007
        %v1020 = vadd.f32 %v871, %v1009
        %v1021 = vadd.f32 %v873, %v1011
        %v1022 = vadd.f32 %v875, %v1013
        %v1023 = vld [vmem:[%s599 + $0x3] sm:$0xff]
        %v1024 = vld [vmem:[%s599 + $0xb] sm:$0xff]
        %v1025 = vld [vmem:[%s599 + $0x13] sm:$0xff]
        %v1026 = vld [vmem:[%s599 + $0x1b] sm:$0xf]
        %v1027 = vpack.c.bf16 %v1024, %v1023
        %v1028 = vpack.c.bf16 %v1026, %v1025
        %s1029 = scalar_lea.vmem %s1, 288
        %v1030 = vld [vmem:[%s1029] sm:$0xff]
        %v1031 = vld [vmem:[%s1029 + $0x8] sm:$0xff]
        %v1032 = vld [vmem:[%s1029 + $0x10] sm:$0xff]
        %v1033 = vld [vmem:[%s1029 + $0x18] sm:$0xff]
        %v1034 = vld [vmem:[%s1029 + $0x20] sm:$0xff]
        %v1035 = vld [vmem:[%s1029 + $0x28] sm:$0xff]
        %v1036 = vld [vmem:[%s1029 + $0x30] sm:$0xff]
        %v1037 = vld [vmem:[%s1029 + $0x38] sm:$0xff]
        %v1038 = vld [vmem:[%s1029 + $0x40] sm:$0xff]
        %v1039 = vld [vmem:[%s1029 + $0x48] sm:$0xff]
        %v1040 = vld [vmem:[%s1029 + $0x50] sm:$0xff]
        %v1041 = vld [vmem:[%s1029 + $0x58] sm:$0xff]
        %v1054 = vunpack.c.l.b16 %v1030
        %v1055 = vunpack.c.h.b16 %v1030
        %v1056 = vunpack.c.l.b16 %v1031
        %v1057 = vunpack.c.h.b16 %v1031
        %v1058 = vunpack.c.l.b16 %v1032
        %v1059 = vunpack.c.h.b16 %v1032
        %v1060 = vunpack.c.l.b16 %v1033
        %v1061 = vunpack.c.h.b16 %v1033
        %v1062 = vunpack.c.l.b16 %v1034
        %v1063 = vunpack.c.h.b16 %v1034
        %v1064 = vunpack.c.l.b16 %v1035
        %v1065 = vunpack.c.h.b16 %v1035
        %v1066 = vunpack.c.l.b16 %v1036
        %v1067 = vunpack.c.h.b16 %v1036
        %v1068 = vunpack.c.l.b16 %v1037
        %v1069 = vunpack.c.h.b16 %v1037
        %v1070 = vunpack.c.l.b16 %v1038
        %v1071 = vunpack.c.h.b16 %v1038
        %v1072 = vunpack.c.l.b16 %v1039
        %v1073 = vunpack.c.h.b16 %v1039
        %v1074 = vunpack.c.l.b16 %v1040
        %v1075 = vunpack.c.h.b16 %v1040
        %v1076 = vunpack.c.l.b16 %v1041
        %v1077 = vunpack.c.h.b16 %v1041
        %v1078 = vpack.c.b16 %v1056, %v1054
        %v1079 = vpack.c.b16 %v1057, %v1055
        %v1080 = vpack.c.b16 %v1060, %v1058
        %v1081 = vpack.c.b16 %v1061, %v1059
        %v1082 = vpack.c.b16 %v1064, %v1062
        %v1083 = vpack.c.b16 %v1065, %v1063
        %v1084 = vpack.c.b16 %v1068, %v1066
        %v1085 = vpack.c.b16 %v1069, %v1067
        %v1086 = vpack.c.b16 %v1072, %v1070
        %v1087 = vpack.c.b16 %v1073, %v1071
        %v1088 = vpack.c.b16 %v1076, %v1074
        %v1089 = vpack.c.b16 %v1077, %v1075
        %v1103 = vsel %vm698, %v1027, 0
        %v1106 = vsel %vm698, %v1028, 0
        %1108 = vmatprep.subr.bf16.mxu0 0
        %1109 = vmatpush1.bf16.msra.mxu0 0
        %1110 = vmatprep.subr.bf16.mxu0 0
        %1111 = vmatpush1.bf16.msra.mxu0 0
        %1112 = vmatprep.subr.bf16.mxu0 %v1089
        %1113 = vmatpush1.bf16.msra.mxu0 %v1088
        %1114 = vmatprep.subr.bf16.mxu0 %v1087
        %1115 = vmatpush1.bf16.msra.mxu0 %v1086
        %1116 = vmatprep.subr.bf16.mxu0 %v1085
        %1117 = vmatpush1.bf16.msra.mxu0 %v1084
        %1118 = vmatprep.subr.bf16.mxu0 %v1083
        %1119 = vmatpush1.bf16.msra.mxu0 %v1082
        %1120 = vmatprep.subr.bf16.mxu0 %v1081
        %1121 = vmatpush1.bf16.msra.mxu0 %v1080
        %1122 = vmatprep.subr.bf16.mxu0 %v1079
        %1123 = vmatpush1.bf16.msra.mxu0 %v1078
        %1124 = vmatprep.subr.bf16.mxu0 0
        %1125 = vmatpush2.bf16.msra.mxu0 0
        %1126 = vmatprep.subr.bf16.mxu0 0
        %1127 = vmatpush2.bf16.msra.mxu0 0
        %1128 = vmatprep.subr.bf16.mxu0 0
        %1129 = vmatpush2.bf16.msra.mxu0 0
        %1130 = vmatprep.subr.bf16.mxu0 0
        %1131 = vmatpush2.bf16.msra.mxu0 0
        %1132 = vmatprep.subr.bf16.mxu0 0
        %1133 = vmatpush2.bf16.msra.mxu0 0
        %1134 = vmatprep.subr.bf16.mxu0 0
        %1135 = vmatpush2.bf16.msra.mxu0 0
        %1136 = vmatprep.subr.bf16.mxu0 0
        %1137 = vmatpush2.bf16.msra.mxu0 0
        %1138 = vmatprep.subr.bf16.mxu0 0
        %1139 = vmatpush2.bf16.msra.mxu0 0
        %1140 = vmatprep.mubr.bf16.mxu0 0
        %1141 = vmatmul.mubr.bf16.gmra.mxu0 %v1103
        %v1142 = vpop.f32.mrf.mxu0
        %v1143 = vadd.f32 0.0, %v1142
        %v1144 = vpop.f32.mrf.mxu0
        %v1145 = vadd.f32 0.0, %v1144
        %v1146 = vpop.f32.mrf.mxu0
        %v1147 = vadd.f32 0.0, %v1146
        %v1148 = vpop.f32.mrf.mxu0
        %v1149 = vadd.f32 0.0, %v1148
        %1150 = vmatprep.mubr.bf16.mxu0 0
        %1151 = vmatmul.mubr.bf16.gmra.mxu0 %v1106
        %v1152 = vpop.f32.mrf.mxu0
        %v1153 = vadd.f32 0.0, %v1152
        %v1154 = vpop.f32.mrf.mxu0
        %v1155 = vadd.f32 0.0, %v1154
        %v1156 = vpop.f32.mrf.mxu0
        %v1157 = vadd.f32 0.0, %v1156
        %v1158 = vpop.f32.mrf.mxu0
        %v1159 = vadd.f32 0.0, %v1158
        %1160 = vdwg.mxu0
        %v1161 = vadd.f32 %v1015, %v1143
        %v1162 = vadd.f32 %v1016, %v1145
        %v1163 = vadd.f32 %v1017, %v1147
        %v1164 = vadd.f32 %v1018, %v1149
        %v1165 = vadd.f32 %v1019, %v1153
        %v1166 = vadd.f32 %v1020, %v1155
        %v1167 = vadd.f32 %v1021, %v1157
        %v1168 = vadd.f32 %v1022, %v1159
        %v1169 = vld [vmem:[%s599 + $0x4] sm:$0xff]
        %v1170 = vld [vmem:[%s599 + $0xc] sm:$0xff]
        %v1171 = vld [vmem:[%s599 + $0x14] sm:$0xff]
        %v1172 = vld [vmem:[%s599 + $0x1c] sm:$0xf]
        %v1173 = vpack.c.bf16 %v1170, %v1169
        %v1174 = vpack.c.bf16 %v1172, %v1171
        %s1175 = scalar_lea.vmem %s1, 384
        %v1176 = vld [vmem:[%s1175] sm:$0xff]
        %v1177 = vld [vmem:[%s1175 + $0x8] sm:$0xff]
        %v1178 = vld [vmem:[%s1175 + $0x10] sm:$0xff]
        %v1179 = vld [vmem:[%s1175 + $0x18] sm:$0xff]
        %v1180 = vld [vmem:[%s1175 + $0x20] sm:$0xff]
        %v1181 = vld [vmem:[%s1175 + $0x28] sm:$0xff]
        %v1182 = vld [vmem:[%s1175 + $0x30] sm:$0xff]
        %v1183 = vld [vmem:[%s1175 + $0x38] sm:$0xff]
        %v1184 = vld [vmem:[%s1175 + $0x40] sm:$0xff]
        %v1185 = vld [vmem:[%s1175 + $0x48] sm:$0xff]
        %v1186 = vld [vmem:[%s1175 + $0x50] sm:$0xff]
        %v1187 = vld [vmem:[%s1175 + $0x58] sm:$0xff]
        %v1200 = vunpack.c.l.b16 %v1176
        %v1201 = vunpack.c.h.b16 %v1176
        %v1202 = vunpack.c.l.b16 %v1177
        %v1203 = vunpack.c.h.b16 %v1177
        %v1204 = vunpack.c.l.b16 %v1178
        %v1205 = vunpack.c.h.b16 %v1178
        %v1206 = vunpack.c.l.b16 %v1179
        %v1207 = vunpack.c.h.b16 %v1179
        %v1208 = vunpack.c.l.b16 %v1180
        %v1209 = vunpack.c.h.b16 %v1180
        %v1210 = vunpack.c.l.b16 %v1181
        %v1211 = vunpack.c.h.b16 %v1181
        %v1212 = vunpack.c.l.b16 %v1182
        %v1213 = vunpack.c.h.b16 %v1182
        %v1214 = vunpack.c.l.b16 %v1183
        %v1215 = vunpack.c.h.b16 %v1183
        %v1216 = vunpack.c.l.b16 %v1184
        %v1217 = vunpack.c.h.b16 %v1184
        %v1218 = vunpack.c.l.b16 %v1185
        %v1219 = vunpack.c.h.b16 %v1185
        %v1220 = vunpack.c.l.b16 %v1186
        %v1221 = vunpack.c.h.b16 %v1186
        %v1222 = vunpack.c.l.b16 %v1187
        %v1223 = vunpack.c.h.b16 %v1187
        %v1224 = vpack.c.b16 %v1202, %v1200
        %v1225 = vpack.c.b16 %v1203, %v1201
        %v1226 = vpack.c.b16 %v1206, %v1204
        %v1227 = vpack.c.b16 %v1207, %v1205
        %v1228 = vpack.c.b16 %v1210, %v1208
        %v1229 = vpack.c.b16 %v1211, %v1209
        %v1230 = vpack.c.b16 %v1214, %v1212
        %v1231 = vpack.c.b16 %v1215, %v1213
        %v1232 = vpack.c.b16 %v1218, %v1216
        %v1233 = vpack.c.b16 %v1219, %v1217
        %v1234 = vpack.c.b16 %v1222, %v1220
        %v1235 = vpack.c.b16 %v1223, %v1221
        %v1249 = vsel %vm698, %v1173, 0
        %v1252 = vsel %vm698, %v1174, 0
        %1254 = vmatprep.subr.bf16.mxu0 0
        %1255 = vmatpush1.bf16.msra.mxu0 0
        %1256 = vmatprep.subr.bf16.mxu0 0
        %1257 = vmatpush1.bf16.msra.mxu0 0
        %1258 = vmatprep.subr.bf16.mxu0 %v1235
        %1259 = vmatpush1.bf16.msra.mxu0 %v1234
        %1260 = vmatprep.subr.bf16.mxu0 %v1233
        %1261 = vmatpush1.bf16.msra.mxu0 %v1232
        %1262 = vmatprep.subr.bf16.mxu0 %v1231
        %1263 = vmatpush1.bf16.msra.mxu0 %v1230
        %1264 = vmatprep.subr.bf16.mxu0 %v1229
        %1265 = vmatpush1.bf16.msra.mxu0 %v1228
        %1266 = vmatprep.subr.bf16.mxu0 %v1227
        %1267 = vmatpush1.bf16.msra.mxu0 %v1226
        %1268 = vmatprep.subr.bf16.mxu0 %v1225
        %1269 = vmatpush1.bf16.msra.mxu0 %v1224
        %1270 = vmatprep.subr.bf16.mxu0 0
        %1271 = vmatpush2.bf16.msra.mxu0 0
        %1272 = vmatprep.subr.bf16.mxu0 0
        %1273 = vmatpush2.bf16.msra.mxu0 0
        %1274 = vmatprep.subr.bf16.mxu0 0
        %1275 = vmatpush2.bf16.msra.mxu0 0
        %1276 = vmatprep.subr.bf16.mxu0 0
        %1277 = vmatpush2.bf16.msra.mxu0 0
        %1278 = vmatprep.subr.bf16.mxu0 0
        %1279 = vmatpush2.bf16.msra.mxu0 0
        %1280 = vmatprep.subr.bf16.mxu0 0
        %1281 = vmatpush2.bf16.msra.mxu0 0
        %1282 = vmatprep.subr.bf16.mxu0 0
        %1283 = vmatpush2.bf16.msra.mxu0 0
        %1284 = vmatprep.subr.bf16.mxu0 0
        %1285 = vmatpush2.bf16.msra.mxu0 0
        %1286 = vmatprep.mubr.bf16.mxu0 0
        %1287 = vmatmul.mubr.bf16.gmra.mxu0 %v1249
        %v1288 = vpop.f32.mrf.mxu0
        %v1289 = vadd.f32 0.0, %v1288
        %v1290 = vpop.f32.mrf.mxu0
        %v1291 = vadd.f32 0.0, %v1290
        %v1292 = vpop.f32.mrf.mxu0
        %v1293 = vadd.f32 0.0, %v1292
        %v1294 = vpop.f32.mrf.mxu0
        %v1295 = vadd.f32 0.0, %v1294
        %1296 = vmatprep.mubr.bf16.mxu0 0
        %1297 = vmatmul.mubr.bf16.gmra.mxu0 %v1252
        %v1298 = vpop.f32.mrf.mxu0
        %v1299 = vadd.f32 0.0, %v1298
        %v1300 = vpop.f32.mrf.mxu0
        %v1301 = vadd.f32 0.0, %v1300
        %v1302 = vpop.f32.mrf.mxu0
        %v1303 = vadd.f32 0.0, %v1302
        %v1304 = vpop.f32.mrf.mxu0
        %v1305 = vadd.f32 0.0, %v1304
        %1306 = vdwg.mxu0
        %v1307 = vadd.f32 %v1161, %v1289
        %v1308 = vadd.f32 %v1162, %v1291
        %v1309 = vadd.f32 %v1163, %v1293
        %v1310 = vadd.f32 %v1164, %v1295
        %v1311 = vadd.f32 %v1165, %v1299
        %v1312 = vadd.f32 %v1166, %v1301
        %v1313 = vadd.f32 %v1167, %v1303
        %v1314 = vadd.f32 %v1168, %v1305
        %v1315 = vld [vmem:[%s2] sm:$0x3]
        %v1317 = vlaneseq
        %v1318 = vshrl.u32 %v1317, 7
        %v1319 = vsub.s32 0, %v1318
        %v1320 = vrot.slane %v1315, %v1319
        %v1321 = vlaneseq
        %v1322 = vshrl.u32 %v1321, 7
        %v1323 = vsub.s32 1, %v1322
        %v1324 = vrot.slane %v1315, %v1323
        %v1327 = vadd.f32 %v1307, %v1320
        %v1328 = vadd.f32 %v1308, %v1324
        %v1329 = vadd.f32 %v1309, %v1320
        %v1330 = vadd.f32 %v1310, %v1324
        %v1331 = vadd.f32 %v1311, %v1320
        %v1332 = vadd.f32 %v1312, %v1324
        %v1333 = vadd.f32 %v1313, %v1320
        %v1334 = vadd.f32 %v1314, %v1324
        %v1335 = vmax.f32 %v1327, 0.0
        %v1336 = vmax.f32 %v1328, 0.0
        %v1337 = vmax.f32 %v1329, 0.0
        %v1338 = vmax.f32 %v1330, 0.0
        %v1339 = vmax.f32 %v1331, 0.0
        %v1340 = vmax.f32 %v1332, 0.0
        %v1341 = vmax.f32 %v1333, 0.0
        %v1342 = vmax.f32 %v1334, 0.0
        %v1343 = vld [vmem:[%s5] sm:$0xff]
        %v1344 = vld [vmem:[%s5 + $0x8] sm:$0x3f]
        %vm1345 = vcmask 228352
        %v1347 = vsel %vm1345, %v1343, 0
        %v1350 = vsel %vm1345, %v1344, 0
        %vm1352 = vcmask 1043456
        %v1354 = vsel %vm1352, %v1341, 0
        %v1357 = vsel %vm1352, %v1342, 0
        %1359 = vmatprep.subr.mxu0 0.0
        %1360 = vmatpush1.msra.mxu0 0.0
        %1361 = vmatprep.subr.mxu0 0.0
        %1362 = vmatpush1.msra.mxu0 0.0
        %1363 = vmatprep.subr.mxu0 0.0
        %1364 = vmatpush1.msra.mxu0 0.0
        %1365 = vmatprep.subr.mxu0 0.0
        %1366 = vmatpush1.msra.mxu0 0.0
        %1367 = vmatprep.subr.mxu0 0.0
        %1368 = vmatpush1.msra.mxu0 0.0
        %1369 = vmatprep.subr.mxu0 0.0
        %1370 = vmatpush1.msra.mxu0 0.0
        %1371 = vmatprep.subr.mxu0 0.0
        %1372 = vmatpush1.msra.mxu0 0.0
        %1373 = vmatprep.subr.mxu0 0.0
        %1374 = vmatpush1.msra.mxu0 0.0
        %1375 = vmatprep.subr.mxu0 0.0
        %1376 = vmatpush1.msra.mxu0 0.0
        %1377 = vmatprep.subr.mxu0 0.0
        %1378 = vmatpush1.msra.mxu0 0.0
        %1379 = vmatprep.subr.mxu0 0.0
        %1380 = vmatpush1.msra.mxu0 0.0
        %1381 = vmatprep.subr.mxu0 0.0
        %1382 = vmatpush1.msra.mxu0 0.0
        %1383 = vmatprep.subr.mxu0 %v1357
        %1384 = vmatpush1.msra.mxu0 %v1354
        %1385 = vmatprep.subr.mxu0 %v1340
        %1386 = vmatpush1.msra.mxu0 %v1339
        %1387 = vmatprep.subr.mxu0 %v1338
        %1388 = vmatpush1.msra.mxu0 %v1337
        %1389 = vmatprep.subr.mxu0 %v1336
        %1390 = vmatpush1.msra.mxu0 %v1335
        %1391 = vmatprep.subr.mxu0 0.0
        %1392 = vmatpush2.msra.mxu0 0.0
        %1393 = vmatprep.subr.mxu0 0.0
        %1394 = vmatpush2.msra.mxu0 0.0
        %1395 = vmatprep.subr.mxu0 0.0
        %1396 = vmatpush2.msra.mxu0 0.0
        %1397 = vmatprep.subr.mxu0 0.0
        %1398 = vmatpush2.msra.mxu0 0.0
        %1399 = vmatprep.subr.mxu0 0.0
        %1400 = vmatpush2.msra.mxu0 0.0
        %1401 = vmatprep.subr.mxu0 0.0
        %1402 = vmatpush2.msra.mxu0 0.0
        %1403 = vmatprep.subr.mxu0 0.0
        %1404 = vmatpush2.msra.mxu0 0.0
        %1405 = vmatprep.subr.mxu0 0.0
        %1406 = vmatpush2.msra.mxu0 0.0
        %1407 = vmatprep.subr.mxu0 0.0
        %1408 = vmatpush2.msra.mxu0 0.0
        %1409 = vmatprep.subr.mxu0 0.0
        %1410 = vmatpush2.msra.mxu0 0.0
        %1411 = vmatprep.subr.mxu0 0.0
        %1412 = vmatpush2.msra.mxu0 0.0
        %1413 = vmatprep.subr.mxu0 0.0
        %1414 = vmatpush2.msra.mxu0 0.0
        %1415 = vmatprep.subr.mxu0 0.0
        %1416 = vmatpush2.msra.mxu0 0.0
        %1417 = vmatprep.subr.mxu0 0.0
        %1418 = vmatpush2.msra.mxu0 0.0
        %1419 = vmatprep.subr.mxu0 0.0
        %1420 = vmatpush2.msra.mxu0 0.0
        %1421 = vmatprep.subr.mxu0 0.0
        %1422 = vmatpush2.msra.mxu0 0.0
        %1423 = vmatprep.mubr.f32.mxu0 0.0
        %1424 = vmatmul.mubr.f32.gmra.mxu0 %v1347
        %v1425 = vpop.f32.mrf.mxu0
        %v1426 = vadd.f32 0.0, %v1425
        %v1427 = vpop.f32.mrf.mxu0
        %v1428 = vadd.f32 0.0, %v1427
        %1429 = vmatprep.mubr.f32.mxu0 0.0
        %1430 = vmatmul.mubr.f32.gmra.mxu0 %v1350
        %v1431 = vpop.f32.mrf.mxu0
        %v1432 = vadd.f32 0.0, %v1431
        %v1433 = vpop.f32.mrf.mxu0
        %v1434 = vadd.f32 0.0, %v1433
        %1435 = vdwg.mxu0
        %v1436 = vld [vmem:[%s6] sm:$0xff]
        %v1437 = vld [vmem:[%s6 + $0x8] sm:$0x3f]
        %v1439 = vsel %vm1345, %v1436, 0
        %v1442 = vsel %vm1345, %v1437, 0
        %1444 = vmatprep.subr.mxu0 0.0
        %1445 = vmatpush1.msra.mxu0 0.0
        %1446 = vmatprep.subr.mxu0 0.0
        %1447 = vmatpush1.msra.mxu0 0.0
        %1448 = vmatprep.subr.mxu0 0.0
        %1449 = vmatpush1.msra.mxu0 0.0
        %1450 = vmatprep.subr.mxu0 0.0
        %1451 = vmatpush1.msra.mxu0 0.0
        %1452 = vmatprep.subr.mxu0 0.0
        %1453 = vmatpush1.msra.mxu0 0.0
        %1454 = vmatprep.subr.mxu0 0.0
        %1455 = vmatpush1.msra.mxu0 0.0
        %1456 = vmatprep.subr.mxu0 0.0
        %1457 = vmatpush1.msra.mxu0 0.0
        %1458 = vmatprep.subr.mxu0 0.0
        %1459 = vmatpush1.msra.mxu0 0.0
        %1460 = vmatprep.subr.mxu0 0.0
        %1461 = vmatpush1.msra.mxu0 0.0
        %1462 = vmatprep.subr.mxu0 0.0
        %1463 = vmatpush1.msra.mxu0 0.0
        %1464 = vmatprep.subr.mxu0 0.0
        %1465 = vmatpush1.msra.mxu0 0.0
        %1466 = vmatprep.subr.mxu0 0.0
        %1467 = vmatpush1.msra.mxu0 0.0
        %1468 = vmatprep.subr.mxu0 %v1357
        %1469 = vmatpush1.msra.mxu0 %v1354
        %1470 = vmatprep.subr.mxu0 %v1340
        %1471 = vmatpush1.msra.mxu0 %v1339
        %1472 = vmatprep.subr.mxu0 %v1338
        %1473 = vmatpush1.msra.mxu0 %v1337
        %1474 = vmatprep.subr.mxu0 %v1336
        %1475 = vmatpush1.msra.mxu0 %v1335
        %1476 = vmatprep.subr.mxu0 0.0
        %1477 = vmatpush2.msra.mxu0 0.0
        %1478 = vmatprep.subr.mxu0 0.0
        %1479 = vmatpush2.msra.mxu0 0.0
        %1480 = vmatprep.subr.mxu0 0.0
        %1481 = vmatpush2.msra.mxu0 0.0
        %1482 = vmatprep.subr.mxu0 0.0
        %1483 = vmatpush2.msra.mxu0 0.0
        %1484 = vmatprep.subr.mxu0 0.0
        %1485 = vmatpush2.msra.mxu0 0.0
        %1486 = vmatprep.subr.mxu0 0.0
        %1487 = vmatpush2.msra.mxu0 0.0
        %1488 = vmatprep.subr.mxu0 0.0
        %1489 = vmatpush2.msra.mxu0 0.0
        %1490 = vmatprep.subr.mxu0 0.0
        %1491 = vmatpush2.msra.mxu0 0.0
        %1492 = vmatprep.subr.mxu0 0.0
        %1493 = vmatpush2.msra.mxu0 0.0
        %1494 = vmatprep.subr.mxu0 0.0
        %1495 = vmatpush2.msra.mxu0 0.0
        %1496 = vmatprep.subr.mxu0 0.0
        %1497 = vmatpush2.msra.mxu0 0.0
        %1498 = vmatprep.subr.mxu0 0.0
        %1499 = vmatpush2.msra.mxu0 0.0
        %1500 = vmatprep.subr.mxu0 0.0
        %1501 = vmatpush2.msra.mxu0 0.0
        %1502 = vmatprep.subr.mxu0 0.0
        %1503 = vmatpush2.msra.mxu0 0.0
        %1504 = vmatprep.subr.mxu0 0.0
        %1505 = vmatpush2.msra.mxu0 0.0
        %1506 = vmatprep.subr.mxu0 0.0
        %1507 = vmatpush2.msra.mxu0 0.0
        %1508 = vmatprep.mubr.f32.mxu0 0.0
        %1509 = vmatmul.mubr.f32.gmra.mxu0 %v1439
        %v1510 = vpop.f32.mrf.mxu0
        %v1511 = vadd.f32 0.0, %v1510
        %v1512 = vpop.f32.mrf.mxu0
        %v1513 = vadd.f32 0.0, %v1512
        %1514 = vmatprep.mubr.f32.mxu0 0.0
        %1515 = vmatmul.mubr.f32.gmra.mxu0 %v1442
        %v1516 = vpop.f32.mrf.mxu0
        %v1517 = vadd.f32 0.0, %v1516
        %v1518 = vpop.f32.mrf.mxu0
        %v1519 = vadd.f32 0.0, %v1518
        %1520 = vdwg.mxu0
        %v1521 = vmax.f32 %v1426, %v1511
        %v1522 = vmax.f32 %v1428, %v1513
        %v1523 = vmax.f32 %v1432, %v1517
        %v1524 = vmax.f32 %v1434, %v1519
        %v1525 = vld [vmem:[%s7] sm:$0xff]
        %v1526 = vld [vmem:[%s7 + $0x8] sm:$0xff]
        %v1527 = vld [vmem:[%s7 + $0x10] sm:$0xff]
        %v1528 = vld [vmem:[%s7 + $0x18] sm:$0xff]
        %v1529 = vld [vmem:[%s7 + $0x20] sm:$0xff]
        %v1530 = vld [vmem:[%s7 + $0x28] sm:$0xff]
        %v1531 = vld [vmem:[%s7 + $0x30] sm:$0xff]
        %v1532 = vld [vmem:[%s7 + $0x38] sm:$0xff]
        %v1533 = vld [vmem:[%s7 + $0x40] sm:$0xff]
        %v1534 = vld [vmem:[%s7 + $0x48] sm:$0xff]
        %v1535 = vld [vmem:[%s7 + $0x50] sm:$0xff]
        %v1536 = vld [vmem:[%s7 + $0x58] sm:$0xff]
        %v1537 = vld [vmem:[%s7 + $0x60] sm:$0xff]
        %v1538 = vld [vmem:[%s7 + $0x68] sm:$0xff]
        %v1539 = vld [vmem:[%s7 + $0x70] sm:$0xff]
        %v1540 = vld [vmem:[%s7 + $0x78] sm:$0xff]
        %v1541 = vld [vmem:[%s7 + $0x80] sm:$0xff]
        %v1542 = vld [vmem:[%s7 + $0x88] sm:$0xff]
        %v1543 = vld [vmem:[%s7 + $0x90] sm:$0xff]
        %v1544 = vld [vmem:[%s7 + $0x98] sm:$0xff]
        %v1545 = vld [vmem:[%s7 + $0xa0] sm:$0xff]
        %vm1546 = vcmask 326656
        %v1548 = vsel %vm1546, %v1522, 0
        %v1551 = vsel %vm1546, %v1524, 0
        %1553 = vmatprep.subr.mxu0 0.0
        %1554 = vmatpush1.msra.mxu0 %v1540
        %1555 = vmatprep.subr.mxu0 0.0
        %1556 = vmatpush1.msra.mxu0 %v1539
        %1557 = vmatprep.subr.mxu0 0.0
        %1558 = vmatpush1.msra.mxu0 %v1538
        %1559 = vmatprep.subr.mxu0 0.0
        %1560 = vmatpush1.msra.mxu0 %v1537
        %1561 = vmatprep.subr.mxu0 0.0
        %1562 = vmatpush1.msra.mxu0 %v1536
        %1563 = vmatprep.subr.mxu0 0.0
        %1564 = vmatpush1.msra.mxu0 %v1535
        %1565 = vmatprep.subr.mxu0 0.0
        %1566 = vmatpush1.msra.mxu0 %v1534
        %1567 = vmatprep.subr.mxu0 0.0
        %1568 = vmatpush1.msra.mxu0 %v1533
        %1569 = vmatprep.subr.mxu0 0.0
        %1570 = vmatpush1.msra.mxu0 %v1532
        %1571 = vmatprep.subr.mxu0 0.0
        %1572 = vmatpush1.msra.mxu0 %v1531
        %1573 = vmatprep.subr.mxu0 0.0
        %1574 = vmatpush1.msra.mxu0 %v1530
        %1575 = vmatprep.subr.mxu0 0.0
        %1576 = vmatpush1.msra.mxu0 %v1529
        %1577 = vmatprep.subr.mxu0 0.0
        %1578 = vmatpush1.msra.mxu0 %v1528
        %1579 = vmatprep.subr.mxu0 0.0
        %1580 = vmatpush1.msra.mxu0 %v1527
        %1581 = vmatprep.subr.mxu0 0.0
        %1582 = vmatpush1.msra.mxu0 %v1526
        %1583 = vmatprep.subr.mxu0 0.0
        %1584 = vmatpush1.msra.mxu0 %v1525
        %1585 = vmatprep.subr.mxu0 0.0
        %1586 = vmatpush2.msra.mxu0 0.0
        %1587 = vmatprep.subr.mxu0 0.0
        %1588 = vmatpush2.msra.mxu0 0.0
        %1589 = vmatprep.subr.mxu0 0.0
        %1590 = vmatpush2.msra.mxu0 0.0
        %1591 = vmatprep.subr.mxu0 0.0
        %1592 = vmatpush2.msra.mxu0 0.0
        %1593 = vmatprep.subr.mxu0 0.0
        %1594 = vmatpush2.msra.mxu0 0.0
        %1595 = vmatprep.subr.mxu0 0.0
        %1596 = vmatpush2.msra.mxu0 0.0
        %1597 = vmatprep.subr.mxu0 0.0
        %1598 = vmatpush2.msra.mxu0 0.0
        %1599 = vmatprep.subr.mxu0 0.0
        %1600 = vmatpush2.msra.mxu0 0.0
        %1601 = vmatprep.subr.mxu0 0.0
        %1602 = vmatpush2.msra.mxu0 0.0
        %1603 = vmatprep.subr.mxu0 0.0
        %1604 = vmatpush2.msra.mxu0 0.0
        %1605 = vmatprep.subr.mxu0 0.0
        %1606 = vmatpush2.msra.mxu0 0.0
        %1607 = vmatprep.subr.mxu0 0.0
        %1608 = vmatpush2.msra.mxu0 %v1545
        %1609 = vmatprep.subr.mxu0 0.0
        %1610 = vmatpush2.msra.mxu0 %v1544
        %1611 = vmatprep.subr.mxu0 0.0
        %1612 = vmatpush2.msra.mxu0 %v1543
        %1613 = vmatprep.subr.mxu0 0.0
        %1614 = vmatpush2.msra.mxu0 %v1542
        %1615 = vmatprep.subr.mxu0 0.0
        %1616 = vmatpush2.msra.mxu0 %v1541
        %1617 = vmatprep.mubr.f32.mxu0 %v1548
        %1618 = vmatmul.mubr.f32.gmra.mxu0 %v1521
        %v1619 = vpop.f32.mrf.mxu0
        %v1620 = vadd.f32 0.0, %v1619
        %v1621 = vpop.f32.mrf.mxu0
        %1622 = vmatprep.mubr.f32.mxu0 %v1551
        %1623 = vmatmul.mubr.f32.gmra.mxu0 %v1523
        %v1624 = vpop.f32.mrf.mxu0
        %v1625 = vadd.f32 0.0, %v1624
        %v1626 = vpop.f32.mrf.mxu0
        %1627 = vdwg.mxu0
        %v1628 = vld [vmem:[%s8] sm:$0xff]
        %v1629 = vld [vmem:[%s8 + $0x8] sm:$0xff]
        %v1630 = vld [vmem:[%s8 + $0x10] sm:$0xff]
        %v1631 = vld [vmem:[%s8 + $0x18] sm:$0xff]
        %v1632 = vld [vmem:[%s8 + $0x20] sm:$0xff]
        %v1633 = vld [vmem:[%s8 + $0x28] sm:$0xff]
        %v1634 = vld [vmem:[%s8 + $0x30] sm:$0xff]
        %v1635 = vld [vmem:[%s8 + $0x38] sm:$0xff]
        %v1636 = vld [vmem:[%s8 + $0x40] sm:$0xff]
        %v1637 = vld [vmem:[%s8 + $0x48] sm:$0xff]
        %v1638 = vld [vmem:[%s8 + $0x50] sm:$0xff]
        %v1639 = vld [vmem:[%s8 + $0x58] sm:$0xff]
        %v1640 = vld [vmem:[%s8 + $0x60] sm:$0xff]
        %v1641 = vld [vmem:[%s8 + $0x68] sm:$0xff]
        %v1642 = vld [vmem:[%s8 + $0x70] sm:$0xff]
        %v1643 = vld [vmem:[%s8 + $0x78] sm:$0xff]
        %v1644 = vld [vmem:[%s8 + $0x80] sm:$0xff]
        %v1645 = vld [vmem:[%s8 + $0x88] sm:$0xff]
        %v1646 = vld [vmem:[%s8 + $0x90] sm:$0xff]
        %v1647 = vld [vmem:[%s8 + $0x98] sm:$0xff]
        %v1648 = vld [vmem:[%s8 + $0xa0] sm:$0xff]
        %1649 = vmatprep.subr.mxu0 0.0
        %1650 = vmatpush1.msra.mxu0 %v1643
        %1651 = vmatprep.subr.mxu0 0.0
        %1652 = vmatpush1.msra.mxu0 %v1642
        %1653 = vmatprep.subr.mxu0 0.0
        %1654 = vmatpush1.msra.mxu0 %v1641
        %1655 = vmatprep.subr.mxu0 0.0
        %1656 = vmatpush1.msra.mxu0 %v1640
        %1657 = vmatprep.subr.mxu0 0.0
        %1658 = vmatpush1.msra.mxu0 %v1639
        %1659 = vmatprep.subr.mxu0 0.0
        %1660 = vmatpush1.msra.mxu0 %v1638
        %1661 = vmatprep.subr.mxu0 0.0
        %1662 = vmatpush1.msra.mxu0 %v1637
        %1663 = vmatprep.subr.mxu0 0.0
        %1664 = vmatpush1.msra.mxu0 %v1636
        %1665 = vmatprep.subr.mxu0 0.0
        %1666 = vmatpush1.msra.mxu0 %v1635
        %1667 = vmatprep.subr.mxu0 0.0
        %1668 = vmatpush1.msra.mxu0 %v1634
        %1669 = vmatprep.subr.mxu0 0.0
        %1670 = vmatpush1.msra.mxu0 %v1633
        %1671 = vmatprep.subr.mxu0 0.0
        %1672 = vmatpush1.msra.mxu0 %v1632
        %1673 = vmatprep.subr.mxu0 0.0
        %1674 = vmatpush1.msra.mxu0 %v1631
        %1675 = vmatprep.subr.mxu0 0.0
        %1676 = vmatpush1.msra.mxu0 %v1630
        %1677 = vmatprep.subr.mxu0 0.0
        %1678 = vmatpush1.msra.mxu0 %v1629
        %1679 = vmatprep.subr.mxu0 0.0
        %1680 = vmatpush1.msra.mxu0 %v1628
        %1681 = vmatprep.subr.mxu0 0.0
        %1682 = vmatpush2.msra.mxu0 0.0
        %1683 = vmatprep.subr.mxu0 0.0
        %1684 = vmatpush2.msra.mxu0 0.0
        %1685 = vmatprep.subr.mxu0 0.0
        %1686 = vmatpush2.msra.mxu0 0.0
        %1687 = vmatprep.subr.mxu0 0.0
        %1688 = vmatpush2.msra.mxu0 0.0
        %1689 = vmatprep.subr.mxu0 0.0
        %1690 = vmatpush2.msra.mxu0 0.0
        %1691 = vmatprep.subr.mxu0 0.0
        %1692 = vmatpush2.msra.mxu0 0.0
        %1693 = vmatprep.subr.mxu0 0.0
        %1694 = vmatpush2.msra.mxu0 0.0
        %1695 = vmatprep.subr.mxu0 0.0
        %1696 = vmatpush2.msra.mxu0 0.0
        %1697 = vmatprep.subr.mxu0 0.0
        %1698 = vmatpush2.msra.mxu0 0.0
        %1699 = vmatprep.subr.mxu0 0.0
        %1700 = vmatpush2.msra.mxu0 0.0
        %1701 = vmatprep.subr.mxu0 0.0
        %1702 = vmatpush2.msra.mxu0 0.0
        %1703 = vmatprep.subr.mxu0 0.0
        %1704 = vmatpush2.msra.mxu0 %v1648
        %1705 = vmatprep.subr.mxu0 0.0
        %1706 = vmatpush2.msra.mxu0 %v1647
        %1707 = vmatprep.subr.mxu0 0.0
        %1708 = vmatpush2.msra.mxu0 %v1646
        %1709 = vmatprep.subr.mxu0 0.0
        %1710 = vmatpush2.msra.mxu0 %v1645
        %1711 = vmatprep.subr.mxu0 0.0
        %1712 = vmatpush2.msra.mxu0 %v1644
        %1713 = vmatprep.mubr.f32.mxu0 %v1548
        %1714 = vmatmul.mubr.f32.gmra.mxu0 %v1521
        %v1715 = vpop.f32.mrf.mxu0
        %v1716 = vadd.f32 0.0, %v1715
        %v1717 = vpop.f32.mrf.mxu0
        %1718 = vmatprep.mubr.f32.mxu0 %v1551
        %1719 = vmatmul.mubr.f32.gmra.mxu0 %v1523
        %v1720 = vpop.f32.mrf.mxu0
        %v1721 = vadd.f32 0.0, %v1720
        %v1722 = vpop.f32.mrf.mxu0
        %1723 = vdwg.mxu0
        %v1724 = vmax.f32 %v1620, %v1716
        %v1725 = vmax.f32 %v1625, %v1721
        %v1726 = vpack.c.bf16 %v1725, %v1724
        %v1727 = vld [vmem:[%s3] sm:$0xff]
        %v1728 = vld [vmem:[%s3 + $0x8] sm:$0xff]
        %v1729 = vld [vmem:[%s3 + $0x10] sm:$0xff]
        %v1730 = vld [vmem:[%s3 + $0x18] sm:$0xff]
        %v1731 = vld [vmem:[%s3 + $0x20] sm:$0xff]
        %v1732 = vld [vmem:[%s3 + $0x28] sm:$0xff]
        %v1733 = vld [vmem:[%s3 + $0x30] sm:$0xff]
        %v1734 = vld [vmem:[%s3 + $0x38] sm:$0xff]
        %v1735 = vld [vmem:[%s3 + $0x40] sm:$0xff]
        %v1736 = vld [vmem:[%s3 + $0x48] sm:$0xff]
        %v1737 = vld [vmem:[%s3 + $0x50] sm:$0x33]
        %s1738 = scalar_lea.vmem %s3, 88
        %v1739 = vld [vmem:[%s1738] sm:$0xff]
        %v1740 = vld [vmem:[%s1738 + $0x8] sm:$0xff]
        %v1741 = vld [vmem:[%s1738 + $0x10] sm:$0xff]
        %v1742 = vld [vmem:[%s1738 + $0x18] sm:$0xff]
        %v1743 = vld [vmem:[%s1738 + $0x20] sm:$0xff]
        %v1744 = vld [vmem:[%s1738 + $0x28] sm:$0xff]
        %v1745 = vld [vmem:[%s1738 + $0x30] sm:$0xff]
        %v1746 = vld [vmem:[%s1738 + $0x38] sm:$0xff]
        %v1747 = vld [vmem:[%s1738 + $0x40] sm:$0xff]
        %v1748 = vld [vmem:[%s1738 + $0x48] sm:$0xff]
        %v1749 = vld [vmem:[%s1738 + $0x50] sm:$0x33]
        %v1751 = vshrl.u32 %v1726, 16
        %v1753 = vshll.u32 %v1726, 16
        %v1755 = vrot.slane %v1753, 1
        %v1756 = vor.u32 %v1751, %v1755
        %v1768 = vunpack.c.l.b16 %v1739
        %v1769 = vunpack.c.h.b16 %v1739
        %v1770 = vunpack.c.l.b16 %v1740
        %v1771 = vunpack.c.h.b16 %v1740
        %v1772 = vunpack.c.l.b16 %v1741
        %v1773 = vunpack.c.h.b16 %v1741
        %v1774 = vunpack.c.l.b16 %v1742
        %v1775 = vunpack.c.h.b16 %v1742
        %v1776 = vunpack.c.l.b16 %v1743
        %v1777 = vunpack.c.h.b16 %v1743
        %v1778 = vunpack.c.l.b16 %v1744
        %v1779 = vunpack.c.h.b16 %v1744
        %v1780 = vunpack.c.l.b16 %v1745
        %v1781 = vunpack.c.h.b16 %v1745
        %v1782 = vunpack.c.l.b16 %v1746
        %v1783 = vunpack.c.h.b16 %v1746
        %v1784 = vunpack.c.l.b16 %v1747
        %v1785 = vunpack.c.h.b16 %v1747
        %v1786 = vunpack.c.l.b16 %v1748
        %v1787 = vunpack.c.h.b16 %v1748
        %v1788 = vunpack.c.l.b16 %v1749
        %v1789 = vunpack.c.h.b16 %v1749
        %v1790 = vpack.c.b16 %v1770, %v1768
        %v1791 = vpack.c.b16 %v1771, %v1769
        %v1792 = vpack.c.b16 %v1774, %v1772
        %v1793 = vpack.c.b16 %v1775, %v1773
        %v1794 = vpack.c.b16 %v1778, %v1776
        %v1795 = vpack.c.b16 %v1779, %v1777
        %v1796 = vpack.c.b16 %v1782, %v1780
        %v1797 = vpack.c.b16 %v1783, %v1781
        %v1798 = vpack.c.b16 %v1786, %v1784
        %v1799 = vpack.c.b16 %v1787, %v1785
        %v1800 = vpack.c.b16 %v1788, %v1788
        %v1801 = vpack.c.b16 %v1789, %v1789
        %vm1812 = vcmask 687104
        %v1814 = vsel %vm1812, %v1756, 0
        %vm1816 = vcmask 1041408
        %v1818 = vsel %vm1816, %v1800, 0
        %v1821 = vsel %vm1816, %v1801, 0
        %1823 = vmatprep.subr.bf16.mxu0 0
        %1824 = vmatpush1.bf16.msra.mxu0 0
        %1825 = vmatprep.subr.bf16.mxu0 0
        %1826 = vmatpush1.bf16.msra.mxu0 0
        %1827 = vmatprep.subr.bf16.mxu0 %v1821
        %1828 = vmatpush1.bf16.msra.mxu0 %v1818
        %1829 = vmatprep.subr.bf16.mxu0 %v1799
        %1830 = vmatpush1.bf16.msra.mxu0 %v1798
        %1831 = vmatprep.subr.bf16.mxu0 %v1797
        %1832 = vmatpush1.bf16.msra.mxu0 %v1796
        %1833 = vmatprep.subr.bf16.mxu0 %v1795
        %1834 = vmatpush1.bf16.msra.mxu0 %v1794
        %1835 = vmatprep.subr.bf16.mxu0 %v1793
        %1836 = vmatpush1.bf16.msra.mxu0 %v1792
        %1837 = vmatprep.subr.bf16.mxu0 %v1791
        %1838 = vmatpush1.bf16.msra.mxu0 %v1790
        %1839 = vmatprep.subr.bf16.mxu0 0
        %1840 = vmatpush2.bf16.msra.mxu0 0
        %1841 = vmatprep.subr.bf16.mxu0 0
        %1842 = vmatpush2.bf16.msra.mxu0 0
        %1843 = vmatprep.subr.bf16.mxu0 0
        %1844 = vmatpush2.bf16.msra.mxu0 0
        %1845 = vmatprep.subr.bf16.mxu0 0
        %1846 = vmatpush2.bf16.msra.mxu0 0
        %1847 = vmatprep.subr.bf16.mxu0 0
        %1848 = vmatpush2.bf16.msra.mxu0 0
        %1849 = vmatprep.subr.bf16.mxu0 0
        %1850 = vmatpush2.bf16.msra.mxu0 0
        %1851 = vmatprep.subr.bf16.mxu0 0
        %1852 = vmatpush2.bf16.msra.mxu0 0
        %1853 = vmatprep.subr.bf16.mxu0 0
        %1854 = vmatpush2.bf16.msra.mxu0 0
        %1855 = vmatprep.mubr.bf16.mxu0 0
        %1856 = vmatmul.mubr.bf16.gmra.mxu0 %v1814
        %v1857 = vpop.f32.mrf.mxu0
        %v1858 = vadd.f32 0.0, %v1857
        %v1859 = vpop.f32.mrf.mxu0
        %v1860 = vadd.f32 0.0, %v1859
        %v1861 = vpop.f32.mrf.mxu0
        %v1862 = vadd.f32 0.0, %v1861
        %v1863 = vpop.f32.mrf.mxu0
        %v1864 = vadd.f32 0.0, %v1863
        %1865 = vdwg.mxu0
        %v1877 = vunpack.c.l.b16 %v1727
        %v1878 = vunpack.c.h.b16 %v1727
        %v1879 = vunpack.c.l.b16 %v1728
        %v1880 = vunpack.c.h.b16 %v1728
        %v1881 = vunpack.c.l.b16 %v1729
        %v1882 = vunpack.c.h.b16 %v1729
        %v1883 = vunpack.c.l.b16 %v1730
        %v1884 = vunpack.c.h.b16 %v1730
        %v1885 = vunpack.c.l.b16 %v1731
        %v1886 = vunpack.c.h.b16 %v1731
        %v1887 = vunpack.c.l.b16 %v1732
        %v1888 = vunpack.c.h.b16 %v1732
        %v1889 = vunpack.c.l.b16 %v1733
        %v1890 = vunpack.c.h.b16 %v1733
        %v1891 = vunpack.c.l.b16 %v1734
        %v1892 = vunpack.c.h.b16 %v1734
        %v1893 = vunpack.c.l.b16 %v1735
        %v1894 = vunpack.c.h.b16 %v1735
        %v1895 = vunpack.c.l.b16 %v1736
        %v1896 = vunpack.c.h.b16 %v1736
        %v1897 = vunpack.c.l.b16 %v1737
        %v1898 = vunpack.c.h.b16 %v1737
        %v1899 = vpack.c.b16 %v1879, %v1877
        %v1900 = vpack.c.b16 %v1880, %v1878
        %v1901 = vpack.c.b16 %v1883, %v1881
        %v1902 = vpack.c.b16 %v1884, %v1882
        %v1903 = vpack.c.b16 %v1887, %v1885
        %v1904 = vpack.c.b16 %v1888, %v1886
        %v1905 = vpack.c.b16 %v1891, %v1889
        %v1906 = vpack.c.b16 %v1892, %v1890
        %v1907 = vpack.c.b16 %v1895, %v1893
        %v1908 = vpack.c.b16 %v1896, %v1894
        %v1909 = vpack.c.b16 %v1897, %v1897
        %v1910 = vpack.c.b16 %v1898, %v1898
        %v1921 = vsel %vm1812, %v1726, 0
        %v1924 = vsel %vm1816, %v1909, 0
        %v1927 = vsel %vm1816, %v1910, 0
        %1929 = vmatprep.subr.bf16.mxu0 0
        %1930 = vmatpush1.bf16.msra.mxu0 0
        %1931 = vmatprep.subr.bf16.mxu0 0
        %1932 = vmatpush1.bf16.msra.mxu0 0
        %1933 = vmatprep.subr.bf16.mxu0 %v1927
        %1934 = vmatpush1.bf16.msra.mxu0 %v1924
        %1935 = vmatprep.subr.bf16.mxu0 %v1908
        %1936 = vmatpush1.bf16.msra.mxu0 %v1907
        %1937 = vmatprep.subr.bf16.mxu0 %v1906
        %1938 = vmatpush1.bf16.msra.mxu0 %v1905
        %1939 = vmatprep.subr.bf16.mxu0 %v1904
        %1940 = vmatpush1.bf16.msra.mxu0 %v1903
        %1941 = vmatprep.subr.bf16.mxu0 %v1902
        %1942 = vmatpush1.bf16.msra.mxu0 %v1901
        %1943 = vmatprep.subr.bf16.mxu0 %v1900
        %1944 = vmatpush1.bf16.msra.mxu0 %v1899
        %1945 = vmatprep.subr.bf16.mxu0 0
        %1946 = vmatpush2.bf16.msra.mxu0 0
        %1947 = vmatprep.subr.bf16.mxu0 0
        %1948 = vmatpush2.bf16.msra.mxu0 0
        %1949 = vmatprep.subr.bf16.mxu0 0
        %1950 = vmatpush2.bf16.msra.mxu0 0
        %1951 = vmatprep.subr.bf16.mxu0 0
        %1952 = vmatpush2.bf16.msra.mxu0 0
        %1953 = vmatprep.subr.bf16.mxu0 0
        %1954 = vmatpush2.bf16.msra.mxu0 0
        %1955 = vmatprep.subr.bf16.mxu0 0
        %1956 = vmatpush2.bf16.msra.mxu0 0
        %1957 = vmatprep.subr.bf16.mxu0 0
        %1958 = vmatpush2.bf16.msra.mxu0 0
        %1959 = vmatprep.subr.bf16.mxu0 0
        %1960 = vmatpush2.bf16.msra.mxu0 0
        %1961 = vmatprep.mubr.bf16.mxu0 0
        %1962 = vmatmul.mubr.bf16.gmra.mxu0 %v1921
        %v1963 = vpop.f32.mrf.mxu0
        %v1964 = vadd.f32 %v1858, %v1963
        %v1965 = vpop.f32.mrf.mxu0
        %v1966 = vadd.f32 %v1860, %v1965
        %v1967 = vpop.f32.mrf.mxu0
        %v1968 = vadd.f32 %v1862, %v1967
        %v1969 = vpop.f32.mrf.mxu0
        %v1970 = vadd.f32 %v1864, %v1969
        %1971 = vdwg.mxu0
        %s1972 = scalar_lea.vmem %s3, 176
        %v1973 = vld [vmem:[%s1972] sm:$0xff]
        %v1974 = vld [vmem:[%s1972 + $0x8] sm:$0xff]
        %v1975 = vld [vmem:[%s1972 + $0x10] sm:$0xff]
        %v1976 = vld [vmem:[%s1972 + $0x18] sm:$0xff]
        %v1977 = vld [vmem:[%s1972 + $0x20] sm:$0xff]
        %v1978 = vld [vmem:[%s1972 + $0x28] sm:$0xff]
        %v1979 = vld [vmem:[%s1972 + $0x30] sm:$0xff]
        %v1980 = vld [vmem:[%s1972 + $0x38] sm:$0xff]
        %v1981 = vld [vmem:[%s1972 + $0x40] sm:$0xff]
        %v1982 = vld [vmem:[%s1972 + $0x48] sm:$0xff]
        %v1983 = vld [vmem:[%s1972 + $0x50] sm:$0x33]
        %v1985 = vrot.slane %v1726, 1
        %v1997 = vunpack.c.l.b16 %v1973
        %v1998 = vunpack.c.h.b16 %v1973
        %v1999 = vunpack.c.l.b16 %v1974
        %v2000 = vunpack.c.h.b16 %v1974
        %v2001 = vunpack.c.l.b16 %v1975
        %v2002 = vunpack.c.h.b16 %v1975
        %v2003 = vunpack.c.l.b16 %v1976
        %v2004 = vunpack.c.h.b16 %v1976
        %v2005 = vunpack.c.l.b16 %v1977
        %v2006 = vunpack.c.h.b16 %v1977
        %v2007 = vunpack.c.l.b16 %v1978
        %v2008 = vunpack.c.h.b16 %v1978
        %v2009 = vunpack.c.l.b16 %v1979
        %v2010 = vunpack.c.h.b16 %v1979
        %v2011 = vunpack.c.l.b16 %v1980
        %v2012 = vunpack.c.h.b16 %v1980
        %v2013 = vunpack.c.l.b16 %v1981
        %v2014 = vunpack.c.h.b16 %v1981
        %v2015 = vunpack.c.l.b16 %v1982
        %v2016 = vunpack.c.h.b16 %v1982
        %v2017 = vunpack.c.l.b16 %v1983
        %v2018 = vunpack.c.h.b16 %v1983
        %v2019 = vpack.c.b16 %v1999, %v1997
        %v2020 = vpack.c.b16 %v2000, %v1998
        %v2021 = vpack.c.b16 %v2003, %v2001
        %v2022 = vpack.c.b16 %v2004, %v2002
        %v2023 = vpack.c.b16 %v2007, %v2005
        %v2024 = vpack.c.b16 %v2008, %v2006
        %v2025 = vpack.c.b16 %v2011, %v2009
        %v2026 = vpack.c.b16 %v2012, %v2010
        %v2027 = vpack.c.b16 %v2015, %v2013
        %v2028 = vpack.c.b16 %v2016, %v2014
        %v2029 = vpack.c.b16 %v2017, %v2017
        %v2030 = vpack.c.b16 %v2018, %v2018
        %v2042 = vsel %vm1812, %v1985, 0
        %v2045 = vsel %vm1816, %v2029, 0
        %v2048 = vsel %vm1816, %v2030, 0
        %2050 = vmatprep.subr.bf16.mxu0 0
        %2051 = vmatpush1.bf16.msra.mxu0 0
        %2052 = vmatprep.subr.bf16.mxu0 0
        %2053 = vmatpush1.bf16.msra.mxu0 0
        %2054 = vmatprep.subr.bf16.mxu0 %v2048
        %2055 = vmatpush1.bf16.msra.mxu0 %v2045
        %2056 = vmatprep.subr.bf16.mxu0 %v2028
        %2057 = vmatpush1.bf16.msra.mxu0 %v2027
        %2058 = vmatprep.subr.bf16.mxu0 %v2026
        %2059 = vmatpush1.bf16.msra.mxu0 %v2025
        %2060 = vmatprep.subr.bf16.mxu0 %v2024
        %2061 = vmatpush1.bf16.msra.mxu0 %v2023
        %2062 = vmatprep.subr.bf16.mxu0 %v2022
        %2063 = vmatpush1.bf16.msra.mxu0 %v2021
        %2064 = vmatprep.subr.bf16.mxu0 %v2020
        %2065 = vmatpush1.bf16.msra.mxu0 %v2019
        %2066 = vmatprep.subr.bf16.mxu0 0
        %2067 = vmatpush2.bf16.msra.mxu0 0
        %2068 = vmatprep.subr.bf16.mxu0 0
        %2069 = vmatpush2.bf16.msra.mxu0 0
        %2070 = vmatprep.subr.bf16.mxu0 0
        %2071 = vmatpush2.bf16.msra.mxu0 0
        %2072 = vmatprep.subr.bf16.mxu0 0
        %2073 = vmatpush2.bf16.msra.mxu0 0
        %2074 = vmatprep.subr.bf16.mxu0 0
        %2075 = vmatpush2.bf16.msra.mxu0 0
        %2076 = vmatprep.subr.bf16.mxu0 0
        %2077 = vmatpush2.bf16.msra.mxu0 0
        %2078 = vmatprep.subr.bf16.mxu0 0
        %2079 = vmatpush2.bf16.msra.mxu0 0
        %2080 = vmatprep.subr.bf16.mxu0 0
        %2081 = vmatpush2.bf16.msra.mxu0 0
        %2082 = vmatprep.mubr.bf16.mxu0 0
        %2083 = vmatmul.mubr.bf16.gmra.mxu0 %v2042
        %v2084 = vpop.f32.mrf.mxu0
        %v2085 = vadd.f32 0.0, %v2084
        %v2086 = vpop.f32.mrf.mxu0
        %v2087 = vadd.f32 0.0, %v2086
        %v2088 = vpop.f32.mrf.mxu0
        %v2089 = vadd.f32 0.0, %v2088
        %v2090 = vpop.f32.mrf.mxu0
        %v2091 = vadd.f32 0.0, %v2090
        %2092 = vdwg.mxu0
        %v2093 = vadd.f32 %v1964, %v2085
        %v2094 = vadd.f32 %v1966, %v2087
        %v2095 = vadd.f32 %v1968, %v2089
        %v2096 = vadd.f32 %v1970, %v2091
        %s2097 = scalar_lea.vmem %s3, 264
        %v2098 = vld [vmem:[%s2097] sm:$0xff]
        %v2099 = vld [vmem:[%s2097 + $0x8] sm:$0xff]
        %v2100 = vld [vmem:[%s2097 + $0x10] sm:$0xff]
        %v2101 = vld [vmem:[%s2097 + $0x18] sm:$0xff]
        %v2102 = vld [vmem:[%s2097 + $0x20] sm:$0xff]
        %v2103 = vld [vmem:[%s2097 + $0x28] sm:$0xff]
        %v2104 = vld [vmem:[%s2097 + $0x30] sm:$0xff]
        %v2105 = vld [vmem:[%s2097 + $0x38] sm:$0xff]
        %v2106 = vld [vmem:[%s2097 + $0x40] sm:$0xff]
        %v2107 = vld [vmem:[%s2097 + $0x48] sm:$0xff]
        %v2108 = vld [vmem:[%s2097 + $0x50] sm:$0x33]
        %v2109 = vrot.slane %v1751, 1
        %v2110 = vrot.slane %v1753, 2
        %v2111 = vor.u32 %v2109, %v2110
        %v2123 = vunpack.c.l.b16 %v2098
        %v2124 = vunpack.c.h.b16 %v2098
        %v2125 = vunpack.c.l.b16 %v2099
        %v2126 = vunpack.c.h.b16 %v2099
        %v2127 = vunpack.c.l.b16 %v2100
        %v2128 = vunpack.c.h.b16 %v2100
        %v2129 = vunpack.c.l.b16 %v2101
        %v2130 = vunpack.c.h.b16 %v2101
        %v2131 = vunpack.c.l.b16 %v2102
        %v2132 = vunpack.c.h.b16 %v2102
        %v2133 = vunpack.c.l.b16 %v2103
        %v2134 = vunpack.c.h.b16 %v2103
        %v2135 = vunpack.c.l.b16 %v2104
        %v2136 = vunpack.c.h.b16 %v2104
        %v2137 = vunpack.c.l.b16 %v2105
        %v2138 = vunpack.c.h.b16 %v2105
        %v2139 = vunpack.c.l.b16 %v2106
        %v2140 = vunpack.c.h.b16 %v2106
        %v2141 = vunpack.c.l.b16 %v2107
        %v2142 = vunpack.c.h.b16 %v2107
        %v2143 = vunpack.c.l.b16 %v2108
        %v2144 = vunpack.c.h.b16 %v2108
        %v2145 = vpack.c.b16 %v2125, %v2123
        %v2146 = vpack.c.b16 %v2126, %v2124
        %v2147 = vpack.c.b16 %v2129, %v2127
        %v2148 = vpack.c.b16 %v2130, %v2128
        %v2149 = vpack.c.b16 %v2133, %v2131
        %v2150 = vpack.c.b16 %v2134, %v2132
        %v2151 = vpack.c.b16 %v2137, %v2135
        %v2152 = vpack.c.b16 %v2138, %v2136
        %v2153 = vpack.c.b16 %v2141, %v2139
        %v2154 = vpack.c.b16 %v2142, %v2140
        %v2155 = vpack.c.b16 %v2143, %v2143
        %v2156 = vpack.c.b16 %v2144, %v2144
        %v2168 = vsel %vm1812, %v2111, 0
        %v2171 = vsel %vm1816, %v2155, 0
        %v2174 = vsel %vm1816, %v2156, 0
        %2176 = vmatprep.subr.bf16.mxu0 0
        %2177 = vmatpush1.bf16.msra.mxu0 0
        %2178 = vmatprep.subr.bf16.mxu0 0
        %2179 = vmatpush1.bf16.msra.mxu0 0
        %2180 = vmatprep.subr.bf16.mxu0 %v2174
        %2181 = vmatpush1.bf16.msra.mxu0 %v2171
        %2182 = vmatprep.subr.bf16.mxu0 %v2154
        %2183 = vmatpush1.bf16.msra.mxu0 %v2153
        %2184 = vmatprep.subr.bf16.mxu0 %v2152
        %2185 = vmatpush1.bf16.msra.mxu0 %v2151
        %2186 = vmatprep.subr.bf16.mxu0 %v2150
        %2187 = vmatpush1.bf16.msra.mxu0 %v2149
        %2188 = vmatprep.subr.bf16.mxu0 %v2148
        %2189 = vmatpush1.bf16.msra.mxu0 %v2147
        %2190 = vmatprep.subr.bf16.mxu0 %v2146
        %2191 = vmatpush1.bf16.msra.mxu0 %v2145
        %2192 = vmatprep.subr.bf16.mxu0 0
        %2193 = vmatpush2.bf16.msra.mxu0 0
        %2194 = vmatprep.subr.bf16.mxu0 0
        %2195 = vmatpush2.bf16.msra.mxu0 0
        %2196 = vmatprep.subr.bf16.mxu0 0
        %2197 = vmatpush2.bf16.msra.mxu0 0
        %2198 = vmatprep.subr.bf16.mxu0 0
        %2199 = vmatpush2.bf16.msra.mxu0 0
        %2200 = vmatprep.subr.bf16.mxu0 0
        %2201 = vmatpush2.bf16.msra.mxu0 0
        %2202 = vmatprep.subr.bf16.mxu0 0
        %2203 = vmatpush2.bf16.msra.mxu0 0
        %2204 = vmatprep.subr.bf16.mxu0 0
        %2205 = vmatpush2.bf16.msra.mxu0 0
        %2206 = vmatprep.subr.bf16.mxu0 0
        %2207 = vmatpush2.bf16.msra.mxu0 0
        %2208 = vmatprep.mubr.bf16.mxu0 0
        %2209 = vmatmul.mubr.bf16.gmra.mxu0 %v2168
        %v2210 = vpop.f32.mrf.mxu0
        %v2211 = vadd.f32 0.0, %v2210
        %v2212 = vpop.f32.mrf.mxu0
        %v2213 = vadd.f32 0.0, %v2212
        %v2214 = vpop.f32.mrf.mxu0
        %v2215 = vadd.f32 0.0, %v2214
        %v2216 = vpop.f32.mrf.mxu0
        %v2217 = vadd.f32 0.0, %v2216
        %2218 = vdwg.mxu0
        %v2219 = vadd.f32 %v2093, %v2211
        %v2220 = vadd.f32 %v2094, %v2213
        %v2221 = vadd.f32 %v2095, %v2215
        %v2222 = vadd.f32 %v2096, %v2217
        %s2223 = scalar_lea.vmem %s3, 352
        %v2224 = vld [vmem:[%s2223] sm:$0xff]
        %v2225 = vld [vmem:[%s2223 + $0x8] sm:$0xff]
        %v2226 = vld [vmem:[%s2223 + $0x10] sm:$0xff]
        %v2227 = vld [vmem:[%s2223 + $0x18] sm:$0xff]
        %v2228 = vld [vmem:[%s2223 + $0x20] sm:$0xff]
        %v2229 = vld [vmem:[%s2223 + $0x28] sm:$0xff]
        %v2230 = vld [vmem:[%s2223 + $0x30] sm:$0xff]
        %v2231 = vld [vmem:[%s2223 + $0x38] sm:$0xff]
        %v2232 = vld [vmem:[%s2223 + $0x40] sm:$0xff]
        %v2233 = vld [vmem:[%s2223 + $0x48] sm:$0xff]
        %v2234 = vld [vmem:[%s2223 + $0x50] sm:$0x33]
        %v2235 = vrot.slane %v1726, 2
        %v2247 = vunpack.c.l.b16 %v2224
        %v2248 = vunpack.c.h.b16 %v2224
        %v2249 = vunpack.c.l.b16 %v2225
        %v2250 = vunpack.c.h.b16 %v2225
        %v2251 = vunpack.c.l.b16 %v2226
        %v2252 = vunpack.c.h.b16 %v2226
        %v2253 = vunpack.c.l.b16 %v2227
        %v2254 = vunpack.c.h.b16 %v2227
        %v2255 = vunpack.c.l.b16 %v2228
        %v2256 = vunpack.c.h.b16 %v2228
        %v2257 = vunpack.c.l.b16 %v2229
        %v2258 = vunpack.c.h.b16 %v2229
        %v2259 = vunpack.c.l.b16 %v2230
        %v2260 = vunpack.c.h.b16 %v2230
        %v2261 = vunpack.c.l.b16 %v2231
        %v2262 = vunpack.c.h.b16 %v2231
        %v2263 = vunpack.c.l.b16 %v2232
        %v2264 = vunpack.c.h.b16 %v2232
        %v2265 = vunpack.c.l.b16 %v2233
        %v2266 = vunpack.c.h.b16 %v2233
        %v2267 = vunpack.c.l.b16 %v2234
        %v2268 = vunpack.c.h.b16 %v2234
        %v2269 = vpack.c.b16 %v2249, %v2247
        %v2270 = vpack.c.b16 %v2250, %v2248
        %v2271 = vpack.c.b16 %v2253, %v2251
        %v2272 = vpack.c.b16 %v2254, %v2252
        %v2273 = vpack.c.b16 %v2257, %v2255
        %v2274 = vpack.c.b16 %v2258, %v2256
        %v2275 = vpack.c.b16 %v2261, %v2259
        %v2276 = vpack.c.b16 %v2262, %v2260
        %v2277 = vpack.c.b16 %v2265, %v2263
        %v2278 = vpack.c.b16 %v2266, %v2264
        %v2279 = vpack.c.b16 %v2267, %v2267
        %v2280 = vpack.c.b16 %v2268, %v2268
        %v2292 = vsel %vm1812, %v2235, 0
        %v2295 = vsel %vm1816, %v2279, 0
        %v2298 = vsel %vm1816, %v2280, 0
        %2300 = vmatprep.subr.bf16.mxu0 0
        %2301 = vmatpush1.bf16.msra.mxu0 0
        %2302 = vmatprep.subr.bf16.mxu0 0
        %2303 = vmatpush1.bf16.msra.mxu0 0
        %2304 = vmatprep.subr.bf16.mxu0 %v2298
        %2305 = vmatpush1.bf16.msra.mxu0 %v2295
        %2306 = vmatprep.subr.bf16.mxu0 %v2278
        %2307 = vmatpush1.bf16.msra.mxu0 %v2277
        %2308 = vmatprep.subr.bf16.mxu0 %v2276
        %2309 = vmatpush1.bf16.msra.mxu0 %v2275
        %2310 = vmatprep.subr.bf16.mxu0 %v2274
        %2311 = vmatpush1.bf16.msra.mxu0 %v2273
        %2312 = vmatprep.subr.bf16.mxu0 %v2272
        %2313 = vmatpush1.bf16.msra.mxu0 %v2271
        %2314 = vmatprep.subr.bf16.mxu0 %v2270
        %2315 = vmatpush1.bf16.msra.mxu0 %v2269
        %2316 = vmatprep.subr.bf16.mxu0 0
        %2317 = vmatpush2.bf16.msra.mxu0 0
        %2318 = vmatprep.subr.bf16.mxu0 0
        %2319 = vmatpush2.bf16.msra.mxu0 0
        %2320 = vmatprep.subr.bf16.mxu0 0
        %2321 = vmatpush2.bf16.msra.mxu0 0
        %2322 = vmatprep.subr.bf16.mxu0 0
        %2323 = vmatpush2.bf16.msra.mxu0 0
        %2324 = vmatprep.subr.bf16.mxu0 0
        %2325 = vmatpush2.bf16.msra.mxu0 0
        %2326 = vmatprep.subr.bf16.mxu0 0
        %2327 = vmatpush2.bf16.msra.mxu0 0
        %2328 = vmatprep.subr.bf16.mxu0 0
        %2329 = vmatpush2.bf16.msra.mxu0 0
        %2330 = vmatprep.subr.bf16.mxu0 0
        %2331 = vmatpush2.bf16.msra.mxu0 0
        %2332 = vmatprep.mubr.bf16.mxu0 0
        %2333 = vmatmul.mubr.bf16.gmra.mxu0 %v2292
        %v2334 = vpop.f32.mrf.mxu0
        %v2335 = vadd.f32 0.0, %v2334
        %v2336 = vpop.f32.mrf.mxu0
        %v2337 = vadd.f32 0.0, %v2336
        %v2338 = vpop.f32.mrf.mxu0
        %v2339 = vadd.f32 0.0, %v2338
        %v2340 = vpop.f32.mrf.mxu0
        %v2341 = vadd.f32 0.0, %v2340
        %2342 = vdwg.mxu0
        %v2343 = vadd.f32 %v2219, %v2335
        %v2344 = vadd.f32 %v2220, %v2337
        %v2345 = vadd.f32 %v2221, %v2339
        %v2346 = vadd.f32 %v2222, %v2341
        %v2347 = vld [vmem:[%s4] sm:$0x3]
        %v2349 = vlaneseq
        %v2350 = vshrl.u32 %v2349, 7
        %v2351 = vsub.s32 0, %v2350
        %v2352 = vrot.slane %v2347, %v2351
        %v2353 = vlaneseq
        %v2354 = vshrl.u32 %v2353, 7
        %v2355 = vsub.s32 1, %v2354
        %v2356 = vrot.slane %v2347, %v2355
        %v2359 = vadd.f32 %v2343, %v2352
        %v2360 = vadd.f32 %v2344, %v2356
        %v2361 = vadd.f32 %v2345, %v2352
        %v2362 = vadd.f32 %v2346, %v2356
        %v2363 = vmax.f32 %v2359, 0.0
        %v2364 = vmax.f32 %v2360, 0.0
        %v2365 = vmax.f32 %v2361, 0.0
        %v2366 = vmax.f32 %v2362, 0.0
        %v2367 = vld [vmem:[%s9] sm:$0x1f]
        %vm2368 = vcmask 80896
        %v2370 = vsel %vm2368, %v2367, 0
        %v2373 = vsel %vm1816, %v2365, 0
        %v2376 = vsel %vm1816, %v2366, 0
        %2378 = vmatprep.subr.mxu0 0.0
        %2379 = vmatpush1.msra.mxu0 0.0
        %2380 = vmatprep.subr.mxu0 0.0
        %2381 = vmatpush1.msra.mxu0 0.0
        %2382 = vmatprep.subr.mxu0 0.0
        %2383 = vmatpush1.msra.mxu0 0.0
        %2384 = vmatprep.subr.mxu0 0.0
        %2385 = vmatpush1.msra.mxu0 0.0
        %2386 = vmatprep.subr.mxu0 0.0
        %2387 = vmatpush1.msra.mxu0 0.0
        %2388 = vmatprep.subr.mxu0 0.0
        %2389 = vmatpush1.msra.mxu0 0.0
        %2390 = vmatprep.subr.mxu0 0.0
        %2391 = vmatpush1.msra.mxu0 0.0
        %2392 = vmatprep.subr.mxu0 0.0
        %2393 = vmatpush1.msra.mxu0 0.0
        %2394 = vmatprep.subr.mxu0 0.0
        %2395 = vmatpush1.msra.mxu0 0.0
        %2396 = vmatprep.subr.mxu0 0.0
        %2397 = vmatpush1.msra.mxu0 0.0
        %2398 = vmatprep.subr.mxu0 0.0
        %2399 = vmatpush1.msra.mxu0 0.0
        %2400 = vmatprep.subr.mxu0 0.0
        %2401 = vmatpush1.msra.mxu0 0.0
        %2402 = vmatprep.subr.mxu0 0.0
        %2403 = vmatpush1.msra.mxu0 0.0
        %2404 = vmatprep.subr.mxu0 0.0
        %2405 = vmatpush1.msra.mxu0 0.0
        %2406 = vmatprep.subr.mxu0 %v2376
        %2407 = vmatpush1.msra.mxu0 %v2373
        %2408 = vmatprep.subr.mxu0 %v2364
        %2409 = vmatpush1.msra.mxu0 %v2363
        %2410 = vmatprep.subr.mxu0 0.0
        %2411 = vmatpush2.msra.mxu0 0.0
        %2412 = vmatprep.subr.mxu0 0.0
        %2413 = vmatpush2.msra.mxu0 0.0
        %2414 = vmatprep.subr.mxu0 0.0
        %2415 = vmatpush2.msra.mxu0 0.0
        %2416 = vmatprep.subr.mxu0 0.0
        %2417 = vmatpush2.msra.mxu0 0.0
        %2418 = vmatprep.subr.mxu0 0.0
        %2419 = vmatpush2.msra.mxu0 0.0
        %2420 = vmatprep.subr.mxu0 0.0
        %2421 = vmatpush2.msra.mxu0 0.0
        %2422 = vmatprep.subr.mxu0 0.0
        %2423 = vmatpush2.msra.mxu0 0.0
        %2424 = vmatprep.subr.mxu0 0.0
        %2425 = vmatpush2.msra.mxu0 0.0
        %2426 = vmatprep.subr.mxu0 0.0
        %2427 = vmatpush2.msra.mxu0 0.0
        %2428 = vmatprep.subr.mxu0 0.0
        %2429 = vmatpush2.msra.mxu0 0.0
        %2430 = vmatprep.subr.mxu0 0.0
        %2431 = vmatpush2.msra.mxu0 0.0
        %2432 = vmatprep.subr.mxu0 0.0
        %2433 = vmatpush2.msra.mxu0 0.0
        %2434 = vmatprep.subr.mxu0 0.0
        %2435 = vmatpush2.msra.mxu0 0.0
        %2436 = vmatprep.subr.mxu0 0.0
        %2437 = vmatpush2.msra.mxu0 0.0
        %2438 = vmatprep.subr.mxu0 0.0
        %2439 = vmatpush2.msra.mxu0 0.0
        %2440 = vmatprep.subr.mxu0 0.0
        %2441 = vmatpush2.msra.mxu0 0.0
        %2442 = vmatprep.mubr.f32.mxu0 0.0
        %2443 = vmatmul.mubr.f32.gmra.mxu0 %v2370
        %v2444 = vpop.f32.mrf.mxu0
        %v2445 = vadd.f32 0.0, %v2444
        %v2446 = vpop.f32.mrf.mxu0
        %v2447 = vadd.f32 0.0, %v2446
        %2448 = vdwg.mxu0
        %v2449 = vld [vmem:[%s10] sm:$0x1f]
        %v2451 = vsel %vm2368, %v2449, 0
        %2453 = vmatprep.subr.mxu0 0.0
        %2454 = vmatpush1.msra.mxu0 0.0
        %2455 = vmatprep.subr.mxu0 0.0
        %2456 = vmatpush1.msra.mxu0 0.0
        %2457 = vmatprep.subr.mxu0 0.0
        %2458 = vmatpush1.msra.mxu0 0.0
        %2459 = vmatprep.subr.mxu0 0.0
        %2460 = vmatpush1.msra.mxu0 0.0
        %2461 = vmatprep.subr.mxu0 0.0
        %2462 = vmatpush1.msra.mxu0 0.0
        %2463 = vmatprep.subr.mxu0 0.0
        %2464 = vmatpush1.msra.mxu0 0.0
        %2465 = vmatprep.subr.mxu0 0.0
        %2466 = vmatpush1.msra.mxu0 0.0
        %2467 = vmatprep.subr.mxu0 0.0
        %2468 = vmatpush1.msra.mxu0 0.0
        %2469 = vmatprep.subr.mxu0 0.0
        %2470 = vmatpush1.msra.mxu0 0.0
        %2471 = vmatprep.subr.mxu0 0.0
        %2472 = vmatpush1.msra.mxu0 0.0
        %2473 = vmatprep.subr.mxu0 0.0
        %2474 = vmatpush1.msra.mxu0 0.0
        %2475 = vmatprep.subr.mxu0 0.0
        %2476 = vmatpush1.msra.mxu0 0.0
        %2477 = vmatprep.subr.mxu0 0.0
        %2478 = vmatpush1.msra.mxu0 0.0
        %2479 = vmatprep.subr.mxu0 0.0
        %2480 = vmatpush1.msra.mxu0 0.0
        %2481 = vmatprep.subr.mxu0 %v2376
        %2482 = vmatpush1.msra.mxu0 %v2373
        %2483 = vmatprep.subr.mxu0 %v2364
        %2484 = vmatpush1.msra.mxu0 %v2363
        %2485 = vmatprep.subr.mxu0 0.0
        %2486 = vmatpush2.msra.mxu0 0.0
        %2487 = vmatprep.subr.mxu0 0.0
        %2488 = vmatpush2.msra.mxu0 0.0
        %2489 = vmatprep.subr.mxu0 0.0
        %2490 = vmatpush2.msra.mxu0 0.0
        %2491 = vmatprep.subr.mxu0 0.0
        %2492 = vmatpush2.msra.mxu0 0.0
        %2493 = vmatprep.subr.mxu0 0.0
        %2494 = vmatpush2.msra.mxu0 0.0
        %2495 = vmatprep.subr.mxu0 0.0
        %2496 = vmatpush2.msra.mxu0 0.0
        %2497 = vmatprep.subr.mxu0 0.0
        %2498 = vmatpush2.msra.mxu0 0.0
        %2499 = vmatprep.subr.mxu0 0.0
        %2500 = vmatpush2.msra.mxu0 0.0
        %2501 = vmatprep.subr.mxu0 0.0
        %2502 = vmatpush2.msra.mxu0 0.0
        %2503 = vmatprep.subr.mxu0 0.0
        %2504 = vmatpush2.msra.mxu0 0.0
        %2505 = vmatprep.subr.mxu0 0.0
        %2506 = vmatpush2.msra.mxu0 0.0
        %2507 = vmatprep.subr.mxu0 0.0
        %2508 = vmatpush2.msra.mxu0 0.0
        %2509 = vmatprep.subr.mxu0 0.0
        %2510 = vmatpush2.msra.mxu0 0.0
        %2511 = vmatprep.subr.mxu0 0.0
        %2512 = vmatpush2.msra.mxu0 0.0
        %2513 = vmatprep.subr.mxu0 0.0
        %2514 = vmatpush2.msra.mxu0 0.0
        %2515 = vmatprep.subr.mxu0 0.0
        %2516 = vmatpush2.msra.mxu0 0.0
        %2517 = vmatprep.mubr.f32.mxu0 0.0
        %2518 = vmatmul.mubr.f32.gmra.mxu0 %v2451
        %v2519 = vpop.f32.mrf.mxu0
        %v2520 = vadd.f32 0.0, %v2519
        %v2521 = vpop.f32.mrf.mxu0
        %v2522 = vadd.f32 0.0, %v2521
        %2523 = vdwg.mxu0
        %v2524 = vmax.f32 %v2445, %v2520
        %v2525 = vmax.f32 %v2447, %v2522
        %v2526 = vld [vmem:[%s11] sm:$0xff]
        %v2527 = vld [vmem:[%s11 + $0x8] sm:$0xff]
        %v2528 = vld [vmem:[%s11 + $0x10] sm:$0xff]
        %v2529 = vld [vmem:[%s11 + $0x18] sm:$0xff]
        %v2530 = vld [vmem:[%s11 + $0x20] sm:$0xff]
        %v2531 = vld [vmem:[%s11 + $0x28] sm:$0xff]
        %v2532 = vld [vmem:[%s11 + $0x30] sm:$0xff]
        %v2533 = vld [vmem:[%s11 + $0x38] sm:$0xff]
        %v2534 = vld [vmem:[%s11 + $0x40] sm:$0xff]
        %v2535 = vld [vmem:[%s11 + $0x48] sm:$0xff]
        %v2536 = vld [vmem:[%s11 + $0x50] sm:$0xff]
        %v2537 = vld [vmem:[%s11 + $0x58] sm:$0xff]
        %v2538 = vld [vmem:[%s11 + $0x60] sm:$0xff]
        %v2539 = vld [vmem:[%s11 + $0x68] sm:$0xff]
        %v2540 = vld [vmem:[%s11 + $0x70] sm:$0xff]
        %v2541 = vld [vmem:[%s11 + $0x78] sm:$0xff]
        %v2542 = vld [vmem:[%s11 + $0x80] sm:$0xff]
        %v2543 = vld [vmem:[%s11 + $0x88] sm:$0xff]
        %v2544 = vld [vmem:[%s11 + $0x90] sm:$0xff]
        %v2545 = vld [vmem:[%s11 + $0x98] sm:$0xff]
        %vm2546 = vcmask 261120
        %v2548 = vsel %vm2546, %v2525, 0
        %2550 = vmatprep.subr.mxu0 0.0
        %2551 = vmatpush1.msra.mxu0 %v2541
        %2552 = vmatprep.subr.mxu0 0.0
        %2553 = vmatpush1.msra.mxu0 %v2540
        %2554 = vmatprep.subr.mxu0 0.0
        %2555 = vmatpush1.msra.mxu0 %v2539
        %2556 = vmatprep.subr.mxu0 0.0
        %2557 = vmatpush1.msra.mxu0 %v2538
        %2558 = vmatprep.subr.mxu0 0.0
        %2559 = vmatpush1.msra.mxu0 %v2537
        %2560 = vmatprep.subr.mxu0 0.0
        %2561 = vmatpush1.msra.mxu0 %v2536
        %2562 = vmatprep.subr.mxu0 0.0
        %2563 = vmatpush1.msra.mxu0 %v2535
        %2564 = vmatprep.subr.mxu0 0.0
        %2565 = vmatpush1.msra.mxu0 %v2534
        %2566 = vmatprep.subr.mxu0 0.0
        %2567 = vmatpush1.msra.mxu0 %v2533
        %2568 = vmatprep.subr.mxu0 0.0
        %2569 = vmatpush1.msra.mxu0 %v2532
        %2570 = vmatprep.subr.mxu0 0.0
        %2571 = vmatpush1.msra.mxu0 %v2531
        %2572 = vmatprep.subr.mxu0 0.0
        %2573 = vmatpush1.msra.mxu0 %v2530
        %2574 = vmatprep.subr.mxu0 0.0
        %2575 = vmatpush1.msra.mxu0 %v2529
        %2576 = vmatprep.subr.mxu0 0.0
        %2577 = vmatpush1.msra.mxu0 %v2528
        %2578 = vmatprep.subr.mxu0 0.0
        %2579 = vmatpush1.msra.mxu0 %v2527
        %2580 = vmatprep.subr.mxu0 0.0
        %2581 = vmatpush1.msra.mxu0 %v2526
        %2582 = vmatprep.subr.mxu0 0.0
        %2583 = vmatpush2.msra.mxu0 0.0
        %2584 = vmatprep.subr.mxu0 0.0
        %2585 = vmatpush2.msra.mxu0 0.0
        %2586 = vmatprep.subr.mxu0 0.0
        %2587 = vmatpush2.msra.mxu0 0.0
        %2588 = vmatprep.subr.mxu0 0.0
        %2589 = vmatpush2.msra.mxu0 0.0
        %2590 = vmatprep.subr.mxu0 0.0
        %2591 = vmatpush2.msra.mxu0 0.0
        %2592 = vmatprep.subr.mxu0 0.0
        %2593 = vmatpush2.msra.mxu0 0.0
        %2594 = vmatprep.subr.mxu0 0.0
        %2595 = vmatpush2.msra.mxu0 0.0
        %2596 = vmatprep.subr.mxu0 0.0
        %2597 = vmatpush2.msra.mxu0 0.0
        %2598 = vmatprep.subr.mxu0 0.0
        %2599 = vmatpush2.msra.mxu0 0.0
        %2600 = vmatprep.subr.mxu0 0.0
        %2601 = vmatpush2.msra.mxu0 0.0
        %2602 = vmatprep.subr.mxu0 0.0
        %2603 = vmatpush2.msra.mxu0 0.0
        %2604 = vmatprep.subr.mxu0 0.0
        %2605 = vmatpush2.msra.mxu0 0.0
        %2606 = vmatprep.subr.mxu0 0.0
        %2607 = vmatpush2.msra.mxu0 %v2545
        %2608 = vmatprep.subr.mxu0 0.0
        %2609 = vmatpush2.msra.mxu0 %v2544
        %2610 = vmatprep.subr.mxu0 0.0
        %2611 = vmatpush2.msra.mxu0 %v2543
        %2612 = vmatprep.subr.mxu0 0.0
        %2613 = vmatpush2.msra.mxu0 %v2542
        %2614 = vmatprep.mubr.f32.mxu0 %v2548
        %2615 = vmatmul.mubr.f32.gmra.mxu0 %v2524
        %v2616 = vpop.f32.mrf.mxu0
        %v2617 = vadd.f32 0.0, %v2616
        %v2618 = vpop.f32.mrf.mxu0
        %2619 = vdwg.mxu0
        %v2620 = vld [vmem:[%s12] sm:$0xff]
        %v2621 = vld [vmem:[%s12 + $0x8] sm:$0xff]
        %v2622 = vld [vmem:[%s12 + $0x10] sm:$0xff]
        %v2623 = vld [vmem:[%s12 + $0x18] sm:$0xff]
        %v2624 = vld [vmem:[%s12 + $0x20] sm:$0xff]
        %v2625 = vld [vmem:[%s12 + $0x28] sm:$0xff]
        %v2626 = vld [vmem:[%s12 + $0x30] sm:$0xff]
        %v2627 = vld [vmem:[%s12 + $0x38] sm:$0xff]
        %v2628 = vld [vmem:[%s12 + $0x40] sm:$0xff]
        %v2629 = vld [vmem:[%s12 + $0x48] sm:$0xff]
        %v2630 = vld [vmem:[%s12 + $0x50] sm:$0xff]
        %v2631 = vld [vmem:[%s12 + $0x58] sm:$0xff]
        %v2632 = vld [vmem:[%s12 + $0x60] sm:$0xff]
        %v2633 = vld [vmem:[%s12 + $0x68] sm:$0xff]
        %v2634 = vld [vmem:[%s12 + $0x70] sm:$0xff]
        %v2635 = vld [vmem:[%s12 + $0x78] sm:$0xff]
        %v2636 = vld [vmem:[%s12 + $0x80] sm:$0xff]
        %v2637 = vld [vmem:[%s12 + $0x88] sm:$0xff]
        %v2638 = vld [vmem:[%s12 + $0x90] sm:$0xff]
        %v2639 = vld [vmem:[%s12 + $0x98] sm:$0xff]
        %2640 = vmatprep.subr.mxu0 0.0
        %2641 = vmatpush1.msra.mxu0 %v2635
        %2642 = vmatprep.subr.mxu0 0.0
        %2643 = vmatpush1.msra.mxu0 %v2634
        %2644 = vmatprep.subr.mxu0 0.0
        %2645 = vmatpush1.msra.mxu0 %v2633
        %2646 = vmatprep.subr.mxu0 0.0
        %2647 = vmatpush1.msra.mxu0 %v2632
        %2648 = vmatprep.subr.mxu0 0.0
        %2649 = vmatpush1.msra.mxu0 %v2631
        %2650 = vmatprep.subr.mxu0 0.0
        %2651 = vmatpush1.msra.mxu0 %v2630
        %2652 = vmatprep.subr.mxu0 0.0
        %2653 = vmatpush1.msra.mxu0 %v2629
        %2654 = vmatprep.subr.mxu0 0.0
        %2655 = vmatpush1.msra.mxu0 %v2628
        %2656 = vmatprep.subr.mxu0 0.0
        %2657 = vmatpush1.msra.mxu0 %v2627
        %2658 = vmatprep.subr.mxu0 0.0
        %2659 = vmatpush1.msra.mxu0 %v2626
        %2660 = vmatprep.subr.mxu0 0.0
        %2661 = vmatpush1.msra.mxu0 %v2625
        %2662 = vmatprep.subr.mxu0 0.0
        %2663 = vmatpush1.msra.mxu0 %v2624
        %2664 = vmatprep.subr.mxu0 0.0
        %2665 = vmatpush1.msra.mxu0 %v2623
        %2666 = vmatprep.subr.mxu0 0.0
        %2667 = vmatpush1.msra.mxu0 %v2622
        %2668 = vmatprep.subr.mxu0 0.0
        %2669 = vmatpush1.msra.mxu0 %v2621
        %2670 = vmatprep.subr.mxu0 0.0
        %2671 = vmatpush1.msra.mxu0 %v2620
        %2672 = vmatprep.subr.mxu0 0.0
        %2673 = vmatpush2.msra.mxu0 0.0
        %2674 = vmatprep.subr.mxu0 0.0
        %2675 = vmatpush2.msra.mxu0 0.0
        %2676 = vmatprep.subr.mxu0 0.0
        %2677 = vmatpush2.msra.mxu0 0.0
        %2678 = vmatprep.subr.mxu0 0.0
        %2679 = vmatpush2.msra.mxu0 0.0
        %2680 = vmatprep.subr.mxu0 0.0
        %2681 = vmatpush2.msra.mxu0 0.0
        %2682 = vmatprep.subr.mxu0 0.0
        %2683 = vmatpush2.msra.mxu0 0.0
        %2684 = vmatprep.subr.mxu0 0.0
        %2685 = vmatpush2.msra.mxu0 0.0
        %2686 = vmatprep.subr.mxu0 0.0
        %2687 = vmatpush2.msra.mxu0 0.0
        %2688 = vmatprep.subr.mxu0 0.0
        %2689 = vmatpush2.msra.mxu0 0.0
        %2690 = vmatprep.subr.mxu0 0.0
        %2691 = vmatpush2.msra.mxu0 0.0
        %2692 = vmatprep.subr.mxu0 0.0
        %2693 = vmatpush2.msra.mxu0 0.0
        %2694 = vmatprep.subr.mxu0 0.0
        %2695 = vmatpush2.msra.mxu0 0.0
        %2696 = vmatprep.subr.mxu0 0.0
        %2697 = vmatpush2.msra.mxu0 %v2639
        %2698 = vmatprep.subr.mxu0 0.0
        %2699 = vmatpush2.msra.mxu0 %v2638
        %2700 = vmatprep.subr.mxu0 0.0
        %2701 = vmatpush2.msra.mxu0 %v2637
        %2702 = vmatprep.subr.mxu0 0.0
        %2703 = vmatpush2.msra.mxu0 %v2636
        %2704 = vmatprep.mubr.f32.mxu0 %v2548
        %2705 = vmatmul.mubr.f32.gmra.mxu0 %v2524
        %v2706 = vpop.f32.mrf.mxu0
        %v2707 = vadd.f32 0.0, %v2706
        %v2708 = vpop.f32.mrf.mxu0
        %2709 = vdwg.mxu0
        %v2710 = vmax.f32 %v2617, %v2707
        %v2712 = vrot.slane %v2710, 1
        %2713 = vrot.lane.b32.xlu0 %v2712, 80
        %v2714 = vpop.permute.xlu0 %2713
        %v2716 = vrot.slane %v2710, 2
        %2717 = vrot.lane.b32.xlu0 %v2716, 32
        %v2718 = vpop.permute.xlu0 %2717
        %v2720 = vrot.slane %v2710, 3
        %2721 = vrot.lane.b32.xlu0 %v2720, 112
        %v2722 = vpop.permute.xlu0 %2721
        %v2724 = vrot.slane %v2710, 4
        %2725 = vrot.lane.b32.xlu0 %v2724, 64
        %v2726 = vpop.permute.xlu0 %2725
        %vm2728 = vcmask 654336
        %v2729 = vsel %vm2728, %v2710, %v2714
        %v2730 = vsel %vm2546, %v2714, %v2718
        %vm2731 = vcmask 916480
        %v2732 = vsel %vm2731, %v2730, %v2722
        %vm2733 = vcmask 523264
        %v2734 = vsel %vm2733, %v2722, %v2726
        %v2735 = vpack.c.bf16 %v2729, %v2729
        %v2736 = vpack.c.bf16 %v2732, %v2732
        %v2737 = vpack.c.bf16 %v2734, %v2734
        %v2738 = vpack.c.bf16 %v2726, %v2726
        %v2739 = vld [vmem:[%s13] sm:$0xf]
        %v2740 = vld [vmem:[%s13 + $0x4] sm:$0xf]
        %v2741 = vld [vmem:[%s13 + $0x8] sm:$0xf]
        %v2742 = vld [vmem:[%s13 + $0xc] sm:$0xf]
        %v2743 = vld [vmem:[%s13 + $0x10] sm:$0xf]
        %v2744 = vld [vmem:[%s13 + $0x14] sm:$0xf]
        %v2745 = vld [vmem:[%s13 + $0x18] sm:$0xf]
        %v2746 = vld [vmem:[%s13 + $0x1c] sm:$0xf]
        %v2747 = vld [vmem:[%s13 + $0x20] sm:$0xf]
        %v2748 = vld [vmem:[%s13 + $0x24] sm:$0xf]
        %v2749 = vld [vmem:[%s13 + $0x28] sm:$0xf]
        %v2750 = vld [vmem:[%s13 + $0x2c] sm:$0xf]
        %v2751 = vld [vmem:[%s13 + $0x30] sm:$0xf]
        %v2752 = vld [vmem:[%s13 + $0x34] sm:$0xf]
        %v2753 = vld [vmem:[%s13 + $0x38] sm:$0xf]
        %v2754 = vld [vmem:[%s13 + $0x3c] sm:$0xf]
        %v2755 = vld [vmem:[%s13 + $0x40] sm:$0xf]
        %v2756 = vld [vmem:[%s13 + $0x44] sm:$0xf]
        %v2757 = vld [vmem:[%s13 + $0x48] sm:$0xf]
        %v2758 = vld [vmem:[%s13 + $0x4c] sm:$0xf]
        %v2759 = vld [vmem:[%s13 + $0x50] sm:$0xf]
        %v2760 = vld [vmem:[%s13 + $0x54] sm:$0xf]
        %v2761 = vld [vmem:[%s13 + $0x58] sm:$0xf]
        %v2762 = vld [vmem:[%s13 + $0x5c] sm:$0xf]
        %v2763 = vld [vmem:[%s13 + $0x60] sm:$0xf]
        %v2764 = vld [vmem:[%s13 + $0x64] sm:$0xf]
        %v2765 = vld [vmem:[%s13 + $0x68] sm:$0xf]
        %v2766 = vld [vmem:[%s13 + $0x6c] sm:$0xf]
        %v2767 = vld [vmem:[%s13 + $0x70] sm:$0xf]
        %v2768 = vld [vmem:[%s13 + $0x74] sm:$0xf]
        %v2769 = vld [vmem:[%s13 + $0x78] sm:$0xf]
        %v2770 = vld [vmem:[%s13 + $0x7c] sm:$0xf]
        %v2771 = vld [vmem:[%s13 + $0x80] sm:$0xf]
        %v2772 = vld [vmem:[%s13 + $0x84] sm:$0xf]
        %v2773 = vld [vmem:[%s13 + $0x88] sm:$0xf]
        %v2774 = vld [vmem:[%s13 + $0x8c] sm:$0xf]
        %v2775 = vld [vmem:[%s13 + $0x90] sm:$0xf]
        %v2776 = vld [vmem:[%s13 + $0x94] sm:$0xf]
        %v2777 = vld [vmem:[%s13 + $0x98] sm:$0xf]
        %v2778 = vld [vmem:[%s13 + $0x9c] sm:$0xf]
        %v2779 = vld [vmem:[%s13 + $0xa0] sm:$0xf]
        %v2780 = vld [vmem:[%s13 + $0xa4] sm:$0xf]
        %v2781 = vld [vmem:[%s13 + $0xa8] sm:$0xf]
        %v2782 = vld [vmem:[%s13 + $0xac] sm:$0xf]
        %v2783 = vld [vmem:[%s13 + $0xb0] sm:$0xf]
        %v2784 = vld [vmem:[%s13 + $0xb4] sm:$0xf]
        %v2785 = vld [vmem:[%s13 + $0xb8] sm:$0xf]
        %v2786 = vld [vmem:[%s13 + $0xbc] sm:$0xf]
        %v2787 = vld [vmem:[%s13 + $0xc0] sm:$0xf]
        %v2788 = vld [vmem:[%s13 + $0xc4] sm:$0xf]
        %v2789 = vld [vmem:[%s14] sm:$0x1]
        %v2840 = vunpack.c.l.b16 %v2739
        %v2841 = vunpack.c.l.b16 %v2740
        %v2842 = vunpack.c.l.b16 %v2741
        %v2843 = vunpack.c.l.b16 %v2742
        %v2844 = vunpack.c.l.b16 %v2743
        %v2845 = vunpack.c.l.b16 %v2744
        %v2846 = vunpack.c.l.b16 %v2745
        %v2847 = vunpack.c.l.b16 %v2746
        %v2848 = vunpack.c.l.b16 %v2747
        %v2849 = vunpack.c.l.b16 %v2748
        %v2850 = vunpack.c.l.b16 %v2749
        %v2851 = vunpack.c.l.b16 %v2750
        %v2852 = vunpack.c.l.b16 %v2751
        %v2853 = vunpack.c.l.b16 %v2752
        %v2854 = vunpack.c.l.b16 %v2753
        %v2855 = vunpack.c.l.b16 %v2754
        %v2856 = vunpack.c.l.b16 %v2755
        %v2857 = vunpack.c.l.b16 %v2756
        %v2858 = vunpack.c.l.b16 %v2757
        %v2859 = vunpack.c.l.b16 %v2758
        %v2860 = vunpack.c.l.b16 %v2759
        %v2861 = vunpack.c.l.b16 %v2760
        %v2862 = vunpack.c.l.b16 %v2761
        %v2863 = vunpack.c.l.b16 %v2762
        %v2864 = vunpack.c.l.b16 %v2763
        %v2865 = vunpack.c.l.b16 %v2764
        %v2866 = vunpack.c.l.b16 %v2765
        %v2867 = vunpack.c.l.b16 %v2766
        %v2868 = vunpack.c.l.b16 %v2767
        %v2869 = vunpack.c.l.b16 %v2768
        %v2870 = vunpack.c.l.b16 %v2769
        %v2871 = vunpack.c.l.b16 %v2770
        %v2872 = vunpack.c.l.b16 %v2771
        %v2873 = vunpack.c.l.b16 %v2772
        %v2874 = vunpack.c.l.b16 %v2773
        %v2875 = vunpack.c.l.b16 %v2774
        %v2876 = vunpack.c.l.b16 %v2775
        %v2877 = vunpack.c.l.b16 %v2776
        %v2878 = vunpack.c.l.b16 %v2777
        %v2879 = vunpack.c.l.b16 %v2778
        %v2880 = vunpack.c.l.b16 %v2779
        %v2881 = vunpack.c.l.b16 %v2780
        %v2882 = vunpack.c.l.b16 %v2781
        %v2883 = vunpack.c.l.b16 %v2782
        %v2884 = vunpack.c.l.b16 %v2783
        %v2885 = vunpack.c.l.b16 %v2784
        %v2886 = vunpack.c.l.b16 %v2785
        %v2887 = vunpack.c.l.b16 %v2786
        %v2888 = vunpack.c.l.b16 %v2787
        %v2889 = vunpack.c.l.b16 %v2788
        %v2890 = vpack.c.b16 %v2841, %v2840
        %v2891 = vpack.c.b16 %v2843, %v2842
        %v2892 = vpack.c.b16 %v2845, %v2844
        %v2893 = vpack.c.b16 %v2847, %v2846
        %v2894 = vpack.c.b16 %v2849, %v2848
        %v2895 = vpack.c.b16 %v2851, %v2850
        %v2896 = vpack.c.b16 %v2853, %v2852
        %v2897 = vpack.c.b16 %v2855, %v2854
        %v2898 = vpack.c.b16 %v2857, %v2856
        %v2899 = vpack.c.b16 %v2859, %v2858
        %v2900 = vpack.c.b16 %v2861, %v2860
        %v2901 = vpack.c.b16 %v2863, %v2862
        %v2902 = vpack.c.b16 %v2865, %v2864
        %v2903 = vpack.c.b16 %v2867, %v2866
        %v2904 = vpack.c.b16 %v2869, %v2868
        %v2905 = vpack.c.b16 %v2871, %v2870
        %v2906 = vpack.c.b16 %v2873, %v2872
        %v2907 = vpack.c.b16 %v2875, %v2874
        %v2908 = vpack.c.b16 %v2877, %v2876
        %v2909 = vpack.c.b16 %v2879, %v2878
        %v2910 = vpack.c.b16 %v2881, %v2880
        %v2911 = vpack.c.b16 %v2883, %v2882
        %v2912 = vpack.c.b16 %v2885, %v2884
        %v2913 = vpack.c.b16 %v2887, %v2886
        %v2914 = vpack.c.b16 %v2889, %v2888
        %vm2940 = vcmask 130048
        %v2942 = vsel %vm2940, %v2738, 0
        %2944 = vmatprep.subr.bf16.mxu0 0
        %2945 = vmatpush1.bf16.msra.mxu0 %v2897
        %2946 = vmatprep.subr.bf16.mxu0 0
        %2947 = vmatpush1.bf16.msra.mxu0 %v2896
        %2948 = vmatprep.subr.bf16.mxu0 0
        %2949 = vmatpush1.bf16.msra.mxu0 %v2895
        %2950 = vmatprep.subr.bf16.mxu0 0
        %2951 = vmatpush1.bf16.msra.mxu0 %v2894
        %2952 = vmatprep.subr.bf16.mxu0 0
        %2953 = vmatpush1.bf16.msra.mxu0 %v2893
        %2954 = vmatprep.subr.bf16.mxu0 0
        %2955 = vmatpush1.bf16.msra.mxu0 %v2892
        %2956 = vmatprep.subr.bf16.mxu0 0
        %2957 = vmatpush1.bf16.msra.mxu0 %v2891
        %2958 = vmatprep.subr.bf16.mxu0 0
        %2959 = vmatpush1.bf16.msra.mxu0 %v2890
        %2960 = vmatprep.subr.bf16.mxu0 0
        %2961 = vmatpush2.bf16.msra.mxu0 %v2905
        %2962 = vmatprep.subr.bf16.mxu0 0
        %2963 = vmatpush2.bf16.msra.mxu0 %v2904
        %2964 = vmatprep.subr.bf16.mxu0 0
        %2965 = vmatpush2.bf16.msra.mxu0 %v2903
        %2966 = vmatprep.subr.bf16.mxu0 0
        %2967 = vmatpush2.bf16.msra.mxu0 %v2902
        %2968 = vmatprep.subr.bf16.mxu0 0
        %2969 = vmatpush2.bf16.msra.mxu0 %v2901
        %2970 = vmatprep.subr.bf16.mxu0 0
        %2971 = vmatpush2.bf16.msra.mxu0 %v2900
        %2972 = vmatprep.subr.bf16.mxu0 0
        %2973 = vmatpush2.bf16.msra.mxu0 %v2899
        %2974 = vmatprep.subr.bf16.mxu0 0
        %2975 = vmatpush2.bf16.msra.mxu0 %v2898
        %2976 = vmatprep.mubr.bf16.mxu0 %v2736
        %2977 = vmatmul.mubr.bf16.gmra.mxu0 %v2735
        %v2978 = vpop.f32.mrf.mxu0
        %v2979 = vadd.f32 %v2789, %v2978
        %v2980 = vpop.f32.mrf.mxu0
        %v2981 = vpop.f32.mrf.mxu0
        %v2982 = vpop.f32.mrf.mxu0
        %2983 = vdwg.mxu0
        %2984 = vmatprep.subr.bf16.mxu0 0
        %2985 = vmatpush1.bf16.msra.mxu0 %v2913
        %2986 = vmatprep.subr.bf16.mxu0 0
        %2987 = vmatpush1.bf16.msra.mxu0 %v2912
        %2988 = vmatprep.subr.bf16.mxu0 0
        %2989 = vmatpush1.bf16.msra.mxu0 %v2911
        %2990 = vmatprep.subr.bf16.mxu0 0
        %2991 = vmatpush1.bf16.msra.mxu0 %v2910
        %2992 = vmatprep.subr.bf16.mxu0 0
        %2993 = vmatpush1.bf16.msra.mxu0 %v2909
        %2994 = vmatprep.subr.bf16.mxu0 0
        %2995 = vmatpush1.bf16.msra.mxu0 %v2908
        %2996 = vmatprep.subr.bf16.mxu0 0
        %2997 = vmatpush1.bf16.msra.mxu0 %v2907
        %2998 = vmatprep.subr.bf16.mxu0 0
        %2999 = vmatpush1.bf16.msra.mxu0 %v2906
        %3000 = vmatprep.subr.bf16.mxu0 0
        %3001 = vmatpush2.bf16.msra.mxu0 0
        %3002 = vmatprep.subr.bf16.mxu0 0
        %3003 = vmatpush2.bf16.msra.mxu0 0
        %3004 = vmatprep.subr.bf16.mxu0 0
        %3005 = vmatpush2.bf16.msra.mxu0 0
        %3006 = vmatprep.subr.bf16.mxu0 0
        %3007 = vmatpush2.bf16.msra.mxu0 0
        %3008 = vmatprep.subr.bf16.mxu0 0
        %3009 = vmatpush2.bf16.msra.mxu0 0
        %3010 = vmatprep.subr.bf16.mxu0 0
        %3011 = vmatpush2.bf16.msra.mxu0 0
        %3012 = vmatprep.subr.bf16.mxu0 0
        %3013 = vmatpush2.bf16.msra.mxu0 0
        %3014 = vmatprep.subr.bf16.mxu0 0
        %3015 = vmatpush2.bf16.msra.mxu0 %v2914
        %3016 = vmatprep.mubr.bf16.mxu0 %v2942
        %3017 = vmatmul.mubr.bf16.gmra.mxu0 %v2737
        %v3018 = vpop.f32.mrf.mxu0
        %v3019 = vadd.f32 %v2979, %v3018
        %v3020 = vpop.f32.mrf.mxu0
        %v3021 = vpop.f32.mrf.mxu0
        %v3022 = vpop.f32.mrf.mxu0
        %3023 = vdwg.mxu0
        %v3024 = vmax.f32 %v3019, 0.0
        %v3025 = vpack.c.bf16 %v3024, %v3024
        %v3026 = vld [vmem:[%s15] sm:$0xf]
        %v3027 = vld [vmem:[%s15 + $0x4] sm:$0xf]
        %v3028 = vld [vmem:[%s15 + $0x8] sm:$0xf]
        %v3029 = vld [vmem:[%s15 + $0xc] sm:$0xf]
        %v3030 = vld [vmem:[%s15 + $0x10] sm:$0xf]
        %v3031 = vld [vmem:[%s15 + $0x14] sm:$0xf]
        %v3032 = vld [vmem:[%s15 + $0x18] sm:$0xf]
        %v3033 = vld [vmem:[%s15 + $0x1c] sm:$0xf]
        %v3034 = vld [vmem:[%s15 + $0x20] sm:$0xf]
        %v3035 = vld [vmem:[%s15 + $0x24] sm:$0xf]
        %v3036 = vld [vmem:[%s15 + $0x28] sm:$0xf]
        %v3037 = vld [vmem:[%s15 + $0x2c] sm:$0xf]
        %v3038 = vld [vmem:[%s15 + $0x30] sm:$0xf]
        %v3039 = vld [vmem:[%s15 + $0x34] sm:$0xf]
        %v3040 = vld [vmem:[%s15 + $0x38] sm:$0xf]
        %v3041 = vld [vmem:[%s15 + $0x3c] sm:$0xf]
        %v3042 = vld [vmem:[%s16] sm:$0x1]
        %v3059 = vunpack.c.l.b16 %v3026
        %v3060 = vunpack.c.l.b16 %v3027
        %v3061 = vunpack.c.l.b16 %v3028
        %v3062 = vunpack.c.l.b16 %v3029
        %v3063 = vunpack.c.l.b16 %v3030
        %v3064 = vunpack.c.l.b16 %v3031
        %v3065 = vunpack.c.l.b16 %v3032
        %v3066 = vunpack.c.l.b16 %v3033
        %v3067 = vunpack.c.l.b16 %v3034
        %v3068 = vunpack.c.l.b16 %v3035
        %v3069 = vunpack.c.l.b16 %v3036
        %v3070 = vunpack.c.l.b16 %v3037
        %v3071 = vunpack.c.l.b16 %v3038
        %v3072 = vunpack.c.l.b16 %v3039
        %v3073 = vunpack.c.l.b16 %v3040
        %v3074 = vunpack.c.l.b16 %v3041
        %v3075 = vpack.c.b16 %v3060, %v3059
        %v3076 = vpack.c.b16 %v3062, %v3061
        %v3077 = vpack.c.b16 %v3064, %v3063
        %v3078 = vpack.c.b16 %v3066, %v3065
        %v3079 = vpack.c.b16 %v3068, %v3067
        %v3080 = vpack.c.b16 %v3070, %v3069
        %v3081 = vpack.c.b16 %v3072, %v3071
        %v3082 = vpack.c.b16 %v3074, %v3073
        %3091 = vmatprep.subr.bf16.mxu0 0
        %3092 = vmatpush1.bf16.msra.mxu0 %v3082
        %3093 = vmatprep.subr.bf16.mxu0 0
        %3094 = vmatpush1.bf16.msra.mxu0 %v3081
        %3095 = vmatprep.subr.bf16.mxu0 0
        %3096 = vmatpush1.bf16.msra.mxu0 %v3080
        %3097 = vmatprep.subr.bf16.mxu0 0
        %3098 = vmatpush1.bf16.msra.mxu0 %v3079
        %3099 = vmatprep.subr.bf16.mxu0 0
        %3100 = vmatpush1.bf16.msra.mxu0 %v3078
        %3101 = vmatprep.subr.bf16.mxu0 0
        %3102 = vmatpush1.bf16.msra.mxu0 %v3077
        %3103 = vmatprep.subr.bf16.mxu0 0
        %3104 = vmatpush1.bf16.msra.mxu0 %v3076
        %3105 = vmatprep.subr.bf16.mxu0 0
        %3106 = vmatpush1.bf16.msra.mxu0 %v3075
        %3107 = vmatprep.subr.bf16.mxu0 0
        %3108 = vmatpush2.bf16.msra.mxu0 0
        %3109 = vmatprep.subr.bf16.mxu0 0
        %3110 = vmatpush2.bf16.msra.mxu0 0
        %3111 = vmatprep.subr.bf16.mxu0 0
        %3112 = vmatpush2.bf16.msra.mxu0 0
        %3113 = vmatprep.subr.bf16.mxu0 0
        %3114 = vmatpush2.bf16.msra.mxu0 0
        %3115 = vmatprep.subr.bf16.mxu0 0
        %3116 = vmatpush2.bf16.msra.mxu0 0
        %3117 = vmatprep.subr.bf16.mxu0 0
        %3118 = vmatpush2.bf16.msra.mxu0 0
        %3119 = vmatprep.subr.bf16.mxu0 0
        %3120 = vmatpush2.bf16.msra.mxu0 0
        %3121 = vmatprep.subr.bf16.mxu0 0
        %3122 = vmatpush2.bf16.msra.mxu0 0
        %3123 = vmatprep.mubr.bf16.mxu0 0
        %3124 = vmatmul.mubr.bf16.gmra.mxu0 %v3025
        %v3125 = vpop.f32.mrf.mxu0
        %v3126 = vadd.f32 %v3042, %v3125
        %v3127 = vpop.f32.mrf.mxu0
        %v3128 = vpop.f32.mrf.mxu0
        %v3129 = vpop.f32.mrf.mxu0
        %3130 = vdwg.mxu0
        %v3131 = vmax.f32 %v3126, 0.0
        %v3132 = vpack.c.bf16 %v3131, %v3131
        %v3133 = vld [vmem:[%s17] sm:$0xf]
        %v3134 = vld [vmem:[%s17 + $0x4] sm:$0xf]
        %v3135 = vld [vmem:[%s17 + $0x8] sm:$0xf]
        %v3136 = vld [vmem:[%s17 + $0xc] sm:$0xf]
        %v3137 = vld [vmem:[%s17 + $0x10] sm:$0xf]
        %v3138 = vld [vmem:[%s17 + $0x14] sm:$0xf]
        %v3139 = vld [vmem:[%s17 + $0x18] sm:$0xf]
        %v3140 = vld [vmem:[%s17 + $0x1c] sm:$0xf]
        %v3141 = vld [vmem:[%s17 + $0x20] sm:$0xf]
        %v3142 = vld [vmem:[%s17 + $0x24] sm:$0xf]
        %v3143 = vld [vmem:[%s17 + $0x28] sm:$0xf]
        %v3144 = vld [vmem:[%s17 + $0x2c] sm:$0xf]
        %v3145 = vld [vmem:[%s17 + $0x30] sm:$0xf]
        %v3146 = vld [vmem:[%s17 + $0x34] sm:$0xf]
        %v3147 = vld [vmem:[%s17 + $0x38] sm:$0xf]
        %v3148 = vld [vmem:[%s17 + $0x3c] sm:$0xf]
        %v3149 = vld [vmem:[%s18] sm:$0x1]
        %v3166 = vunpack.c.l.b16 %v3133
        %v3167 = vunpack.c.l.b16 %v3134
        %v3168 = vunpack.c.l.b16 %v3135
        %v3169 = vunpack.c.l.b16 %v3136
        %v3170 = vunpack.c.l.b16 %v3137
        %v3171 = vunpack.c.l.b16 %v3138
        %v3172 = vunpack.c.l.b16 %v3139
        %v3173 = vunpack.c.l.b16 %v3140
        %v3174 = vunpack.c.l.b16 %v3141
        %v3175 = vunpack.c.l.b16 %v3142
        %v3176 = vunpack.c.l.b16 %v3143
        %v3177 = vunpack.c.l.b16 %v3144
        %v3178 = vunpack.c.l.b16 %v3145
        %v3179 = vunpack.c.l.b16 %v3146
        %v3180 = vunpack.c.l.b16 %v3147
        %v3181 = vunpack.c.l.b16 %v3148
        %v3182 = vpack.c.b16 %v3167, %v3166
        %v3183 = vpack.c.b16 %v3169, %v3168
        %v3184 = vpack.c.b16 %v3171, %v3170
        %v3185 = vpack.c.b16 %v3173, %v3172
        %v3186 = vpack.c.b16 %v3175, %v3174
        %v3187 = vpack.c.b16 %v3177, %v3176
        %v3188 = vpack.c.b16 %v3179, %v3178
        %v3189 = vpack.c.b16 %v3181, %v3180
        %3198 = vmatprep.subr.bf16.mxu0 0
        %3199 = vmatpush1.bf16.msra.mxu0 %v3189
        %3200 = vmatprep.subr.bf16.mxu0 0
        %3201 = vmatpush1.bf16.msra.mxu0 %v3188
        %3202 = vmatprep.subr.bf16.mxu0 0
        %3203 = vmatpush1.bf16.msra.mxu0 %v3187
        %3204 = vmatprep.subr.bf16.mxu0 0
        %3205 = vmatpush1.bf16.msra.mxu0 %v3186
        %3206 = vmatprep.subr.bf16.mxu0 0
        %3207 = vmatpush1.bf16.msra.mxu0 %v3185
        %3208 = vmatprep.subr.bf16.mxu0 0
        %3209 = vmatpush1.bf16.msra.mxu0 %v3184
        %3210 = vmatprep.subr.bf16.mxu0 0
        %3211 = vmatpush1.bf16.msra.mxu0 %v3183
        %3212 = vmatprep.subr.bf16.mxu0 0
        %3213 = vmatpush1.bf16.msra.mxu0 %v3182
        %3214 = vmatprep.subr.bf16.mxu0 0
        %3215 = vmatpush2.bf16.msra.mxu0 0
        %3216 = vmatprep.subr.bf16.mxu0 0
        %3217 = vmatpush2.bf16.msra.mxu0 0
        %3218 = vmatprep.subr.bf16.mxu0 0
        %3219 = vmatpush2.bf16.msra.mxu0 0
        %3220 = vmatprep.subr.bf16.mxu0 0
        %3221 = vmatpush2.bf16.msra.mxu0 0
        %3222 = vmatprep.subr.bf16.mxu0 0
        %3223 = vmatpush2.bf16.msra.mxu0 0
        %3224 = vmatprep.subr.bf16.mxu0 0
        %3225 = vmatpush2.bf16.msra.mxu0 0
        %3226 = vmatprep.subr.bf16.mxu0 0
        %3227 = vmatpush2.bf16.msra.mxu0 0
        %3228 = vmatprep.subr.bf16.mxu0 0
        %3229 = vmatpush2.bf16.msra.mxu0 0
        %3230 = vmatprep.mubr.bf16.mxu0 0
        %3231 = vmatmul.mubr.bf16.gmra.mxu0 %v3132
        %v3232 = vpop.f32.mrf.mxu0
        %v3233 = vadd.f32 %v3149, %v3232
        %v3234 = vpop.f32.mrf.mxu0
        %v3235 = vpop.f32.mrf.mxu0
        %v3236 = vpop.f32.mrf.mxu0
        %3237 = vdwg.mxu0
        %3238 = vst [vmem:[%s594] sm:$0x1] %v3233
        %s3239 = sand.u32 %s445, 1
        %s3240 = scalar_lea.sflag [#allocation3], %s3239
        %s3241 = sand.u32 %s445, 1
        %s3242 = scalar_lea.vmem [#allocation2], %s3241
        // Predicated region
        $region97: #{cifar10_forward.1} parent=95 // pred_check
          %p3243 = pneg %p455
        $region98: #{cifar10_forward.1} parent=95 // pred_check_branch
          %3245 = sbr.rel (%p3243) target = $region100
        $region99: #{cifar10_forward.1} parent=95 // pred_region
          %s3247 = ssub.s32 16, 16
          %3248 = vsyncadd %s3240, %s3247
          %s3249 = smul.addr %s33, 16
          %s3250 = scalar_lea.hbm %s19, %s3249
          %s3252 = sshll.u32 %s3242, 4
          %s3253 = int_to_ptr.vmem [resolvable:$true] %s3252
          %3255 = dma.vmem_to_hbm [thread:$0]  %s3253, 16, %s3250, %s3240
        $region100: #{cifar10_forward.1} parent=95 // pred_fallthru
          _
      $region96: #{cifar10_forward.1} parent=5 // pred_fallthru
        _
      %p3256 = scmp.le.s32.totalorder 2, %s28
      // Predicated region
      $region101: #{cifar10_forward.1} parent=5 // pred_check
        %p3257 = pneg %p3256
      $region102: #{cifar10_forward.1} parent=5 // pred_check_branch
        %3259 = sbr.rel (%p3257) target = $region104
      $region103: #{cifar10_forward.1} parent=5 // pred_region
        %s3260 = ssub.s32 %s28, 2
        // Predicated region
        $region105: #{cifar10_forward.1} parent=103 // pred_check
          %p3261 = pneg %p461
        $region106: #{cifar10_forward.1} parent=103 // pred_check_branch
          %3263 = sbr.rel (%p3261) target = $region108
        $region107: #{cifar10_forward.1} parent=103 // pred_region
          %s3264 = sand.u32 %s446, 1
          %s3265 = scalar_lea.sflag [#allocation3], %s3264
          %s3266 = sand.u32 %s446, 1
          %s3267 = scalar_lea.vmem [#allocation2], %s3266
          %3268 = dma.done %s3265, 16
        $region108: #{cifar10_forward.1} parent=103 // pred_fallthru
          _
      $region104: #{cifar10_forward.1} parent=5 // pred_fallthru
        _
    $region6: #{cifar10_forward.1} parent=1 // loop_footer
      %s32 = sadd.s32 1, %s28
    $region7: #{cifar10_forward.1} parent=1 // loop_footer_branch
      %27 = sbr.rel target = $region3
    $region8: #{cifar10_forward.1} parent=1 // loop_exit
      _
    %3269 = vsyncpa [#allocation3], 1
    %s3270 = scalar_lea.sflag [#allocation3], 1
    %3271 = vsyncpa %s3270, 1

</llo_original>
